<compile_context>
chip_gen: v6e
topology: v6e:2x2x1
jax: 0.10.0
libtpu: 0.0.40
codegen_flags: <defaults>
</compile_context>

<pallas_src>
import jax
import jax.numpy as jnp
from jax import lax
from jax.experimental import pallas as pl
from jax.experimental.pallas import tpu as pltpu

BRANCH_DIMS = (12, 4, 2, 4, 11)       # feature chunks of the 33-wide input
D_TOTAL = 33
NUM_BRANCH = 5
D_PAD = 16                            # padded per-branch head dim (aligned slices)
HIDDEN_FF = 32                        # dim_feedforward of each encoder layer
OUT_DIM = 64                          # final per-branch Linear output width
EPS = 1e-5                            # torch LayerNorm default eps

PACKED_ORDER = ("w_q", "w_k", "w_v", "b_qkv", "w_o", "m_avg", "p33",
                "w1", "b1", "w2", "wl", "bl")
# b_qkv rows: 0 = bq (pre-scaled), 1 = bk, 2 = bv            (3, 80)
# p33  rows: 0 = b_o, 1 = gamma1, 2 = beta1, 3 = b2, 4 = gamma2, 5 = beta2


def _fused_kernel(x_ref, wq_ref, wk_ref, wv_ref, bqkv_ref, wo_ref, m_ref,
                  p33_ref, w1_ref, b1_ref, w2_ref, wl_ref, bl_ref, out_ref):
    B, S, D = x_ref.shape
    x3 = x_ref[...]                                      # (B, S, 33)
    x = x3.reshape(B * S, D)                             # (BS, 33)

    m = m_ref[...]                                       # block-diag averaging
    b_o = p33_ref[0:1, :]
    g1 = p33_ref[1:2, :]
    be1 = p33_ref[2:3, :]
    b2 = p33_ref[3:4, :]
    g2 = p33_ref[4:5, :]
    be2 = p33_ref[5:6, :]

    # ---- padded fused QKV projections: branch i lives in lanes [16i : 16i+d_i] ----
    # q weights/biases are pre-scaled by d_i**-0.5 at pack time.
    q3 = jnp.dot(x3, wq_ref[...], preferred_element_type=jnp.float32) + bqkv_ref[0:1, :]
    k3 = jnp.dot(x3, wk_ref[...], preferred_element_type=jnp.float32) + bqkv_ref[1:2, :]
    v3 = jnp.dot(x3, wv_ref[...], preferred_element_type=jnp.float32) + bqkv_ref[2:3, :]

    def split_heads(t3):
        # (B, S, 5*16) -> (5*B, S, 16): aligned 16-wide lane slices stacked
        # along a merged (branch, batch) leading axis (t = branch*B + batch).
        return jnp.concatenate(
            [t3[:, :, i * D_PAD:(i + 1) * D_PAD] for i in range(NUM_BRANCH)],
            axis=0)

    q = split_heads(q3)                                  # (5B, S, 16)
    k = split_heads(k3)
    v = split_heads(v3)

    # ---- ONE batched single-head attention over all (branch, batch) pairs ----
    s = jnp.einsum("tqd,tkd->tqk", q, k, preferred_element_type=jnp.float32)
    s = s - jnp.max(s, axis=-1, keepdims=True)
    p = jnp.exp(s)
    a = p * pl.reciprocal(jnp.sum(p, axis=-1, keepdims=True), approx=True)
    ctx = jnp.einsum("tqk,tkd->tqd", a, v, preferred_element_type=jnp.float32)

    # ---- re-pack heads into a lane-dense (BS, 80) slab; padded out-projection ----
    ctx_cat = jnp.concatenate(
        [ctx[i * B:(i + 1) * B] for i in range(NUM_BRANCH)], axis=-1)   # (B, S, 80)
    sa = jnp.dot(ctx_cat.reshape(B * S, NUM_BRANCH * D_PAD), wo_ref[...],
                 preferred_element_type=jnp.float32) + b_o
    h = x + sa                                           # dropout = identity (eval)

    # ---- per-branch LayerNorm 1 via block-diagonal averaging matmuls ----
    mu = jnp.dot(h, m, preferred_element_type=jnp.float32)
    c = h - mu
    var = jnp.dot(c * c, m, preferred_element_type=jnp.float32)
    h1 = c * lax.rsqrt(var + EPS) * g1 + be1

    # ---- feed-forward: block-diag Linear(33->160) -> relu -> (160->33) ----
    f = jnp.dot(h1, w1_ref[...], preferred_element_type=jnp.float32) + b1_ref[...]
    f = jnp.maximum(f, 0.0)
    f = jnp.dot(f, w2_ref[...], preferred_element_type=jnp.float32) + b2

    # ---- per-branch LayerNorm 2 ----
    h2 = h1 + f
    mu2 = jnp.dot(h2, m, preferred_element_type=jnp.float32)
    c2 = h2 - mu2
    var2 = jnp.dot(c2 * c2, m, preferred_element_type=jnp.float32)
    h2n = c2 * lax.rsqrt(var2 + EPS) * g2 + be2

    # ---- final per-branch Linear(d -> 64): one lane-dense (BS, 320) store ----
    out_ref[...] = (jnp.dot(h2n, wl_ref[...], preferred_element_type=jnp.float32)
                    + bl_ref[...])


def transformer_encoders1(x_eye, packed):
    """x_eye: (B, S, 33) f32 -> (B, S, 5, 64) f32 (matches the torch forward)."""
    B, S, D = x_eye.shape
    assert D == D_TOTAL
    vmem = pl.BlockSpec(memory_space=pltpu.MemorySpace.VMEM)
    out = pl.pallas_call(
        _fused_kernel,
        out_shape=jax.ShapeDtypeStruct((B * S, NUM_BRANCH * OUT_DIM), jnp.float32),
        in_specs=[vmem] * (1 + len(PACKED_ORDER)),
        out_specs=vmem,
    )(x_eye, *[packed[name] for name in PACKED_ORDER])
    # free XLA reshape -> (B, S, 5, 64), same layout as torch.stack([...], dim=2)
    return out.reshape(B, S, NUM_BRANCH, OUT_DIM)


def make_branch_params(key, d):
    """Synthetic parameters for one encoder branch (d_model = d), stored transposed."""
    ks = jax.random.split(key, 14)
    n = lambda k, shape, s=0.1: jax.random.normal(k, shape, jnp.float32) * s

    in_proj_w = n(ks[0], (3 * d, d))           # torch MHA in_proj layout (3d, d)
    in_proj_b = n(ks[1], (3 * d,), 0.02)
    out_proj_w = n(ks[2], (d, d))
    out_proj_b = n(ks[3], (d,), 0.02)
    lin1_w = n(ks[4], (HIDDEN_FF, d))
    lin1_b = n(ks[5], (HIDDEN_FF,), 0.02)
    lin2_w = n(ks[6], (d, HIDDEN_FF))
    lin2_b = n(ks[7], (d,), 0.02)
    liner_w = n(ks[8], (OUT_DIM, d))
    liner_b = n(ks[9], (OUT_DIM,), 0.02)
    g1 = 1.0 + n(ks[10], (d,), 0.05)
    be1 = n(ks[11], (d,), 0.05)
    g2 = 1.0 + n(ks[12], (d,), 0.05)
    be2 = n(ks[13], (d,), 0.05)

    return {
        "wq": in_proj_w[0:d].T, "wk": in_proj_w[d:2 * d].T, "wv": in_proj_w[2 * d:3 * d].T,
        "bq": in_proj_b[0:d], "bk": in_proj_b[d:2 * d], "bv": in_proj_b[2 * d:3 * d],
        "wo": out_proj_w.T, "bo": out_proj_b,
        "g1": g1, "be1": be1,
        "w1": lin1_w.T, "b1": lin1_b,
        "w2": lin2_w.T, "b2": lin2_b,
        "g2": g2, "be2": be2,
        "wl": liner_w.T, "bl": liner_b,
    }


def pack_params(branch_params):
    """Pack the 5 branches into the padded / block-diagonal slabs used by the kernel."""
    f32 = jnp.float32
    D = D_TOTAL
    QKV = NUM_BRANCH * D_PAD                       # 80
    w_q = jnp.zeros((D, QKV), f32)
    w_k = jnp.zeros((D, QKV), f32)
    w_v = jnp.zeros((D, QKV), f32)
    b_qkv = jnp.zeros((3, QKV), f32)
    w_o = jnp.zeros((QKV, D), f32)
    m_avg = jnp.zeros((D, D), f32)
    w1 = jnp.zeros((D, NUM_BRANCH * HIDDEN_FF), f32)
    b1 = jnp.zeros((1, NUM_BRANCH * HIDDEN_FF), f32)
    w2 = jnp.zeros((NUM_BRANCH * HIDDEN_FF, D), f32)
    wl = jnp.zeros((D, NUM_BRANCH * OUT_DIM), f32)
    bl = jnp.zeros((1, NUM_BRANCH * OUT_DIM), f32)
    p33 = jnp.zeros((6, D), f32)

    off = 0
    for i, (d, p) in enumerate(zip(BRANCH_DIMS, branch_params)):
        scale = 1.0 / float(d) ** 0.5              # folded attention scaling
        c0 = i * D_PAD
        w_q = w_q.at[off:off + d, c0:c0 + d].set(p["wq"] * scale)
        w_k = w_k.at[off:off + d, c0:c0 + d].set(p["wk"])
        w_v = w_v.at[off:off + d, c0:c0 + d].set(p["wv"])
        b_qkv = b_qkv.at[0, c0:c0 + d].set(p["bq"] * scale)
        b_qkv = b_qkv.at[1, c0:c0 + d].set(p["bk"])
        b_qkv = b_qkv.at[2, c0:c0 + d].set(p["bv"])

        w_o = w_o.at[c0:c0 + d, off:off + d].set(p["wo"])
        m_avg = m_avg.at[off:off + d, off:off + d].set(1.0 / d)

        p33 = p33.at[0, off:off + d].set(p["bo"])
        p33 = p33.at[1, off:off + d].set(p["g1"])
        p33 = p33.at[2, off:off + d].set(p["be1"])
        p33 = p33.at[3, off:off + d].set(p["b2"])
        p33 = p33.at[4, off:off + d].set(p["g2"])
        p33 = p33.at[5, off:off + d].set(p["be2"])

        h0, h1s = i * HIDDEN_FF, (i + 1) * HIDDEN_FF
        w1 = w1.at[off:off + d, h0:h1s].set(p["w1"])
        b1 = b1.at[0, h0:h1s].set(p["b1"])
        w2 = w2.at[h0:h1s, off:off + d].set(p["w2"])

        o0, o1 = i * OUT_DIM, (i + 1) * OUT_DIM
        wl = wl.at[off:off + d, o0:o1].set(p["wl"])
        bl = bl.at[0, o0:o1].set(p["bl"])
        off += d

    return {"w_q": w_q, "w_k": w_k, "w_v": w_v, "b_qkv": b_qkv, "w_o": w_o,
            "m_avg": m_avg, "p33": p33, "w1": w1, "b1": b1, "w2": w2,
            "wl": wl, "bl": bl}


# ---------------- pure-JAX reference (per-branch, mirrors the torch module) ----------------
def _reference_branch(x, p, d):
    q = x @ p["wq"] + p["bq"]
    k = x @ p["wk"] + p["bk"]
    v = x @ p["wv"] + p["bv"]
    s = jnp.einsum("bqd,bkd->bqk", q, k) / jnp.sqrt(jnp.float32(d))
    a = jax.nn.softmax(s, axis=-1)
    ctx = jnp.einsum("bqk,bkd->bqd", a, v)
    h = x + ctx @ p["wo"] + p["bo"]
    mu = h.mean(-1, keepdims=True)
    var = ((h - mu) ** 2).mean(-1, keepdims=True)
    h1 = (h - mu) / jnp.sqrt(var + EPS) * p["g1"] + p["be1"]
    f = jnp.maximum(h1 @ p["w1"] + p["b1"], 0.0)
    f = f @ p["w2"] + p["b2"]
    h2 = h1 + f
    mu2 = h2.mean(-1, keepdims=True)
    var2 = ((h2 - mu2) ** 2).mean(-1, keepdims=True)
    h2 = (h2 - mu2) / jnp.sqrt(var2 + EPS) * p["g2"] + p["be2"]
    return h2 @ p["wl"] + p["bl"]


def reference_forward(x_eye, branch_params):
    outs, off = [], 0
    for d, p in zip(BRANCH_DIMS, branch_params):
        outs.append(_reference_branch(x_eye[:, :, off:off + d], p, d))
        off += d
    return jnp.stack(outs, axis=2)


if __name__ == "__main__":
    key = jax.random.PRNGKey(0)
    k_x, k_p = jax.random.split(key)

    batch, sequence, feat = 2, 8, 33
    x_eye = jax.random.normal(k_x, (batch, sequence, feat), jnp.float32)

    branch_keys = jax.random.split(k_p, NUM_BRANCH)
    branch_params = [make_branch_params(bk, d)
                     for bk, d in zip(branch_keys, BRANCH_DIMS)]
    packed = pack_params(branch_params)

    out = transformer_encoders1(x_eye, packed)
    out = jax.block_until_ready(out)

    assert out.shape == (batch, sequence, NUM_BRANCH, OUT_DIM), out.shape
    assert out.dtype == jnp.float32
    assert bool(jnp.all(jnp.isfinite(out)))

    ref = reference_forward(x_eye, branch_params)
    assert bool(jnp.allclose(out, ref, atol=1e-2, rtol=1e-2)), "mismatch vs pure-JAX reference"

    print("KERNEL_OK")
</pallas_src>

<mosaic_0001>
module attributes {stable_mosaic.version = 11 : i64} {
  func.func @_fused_kernel(%arg0: memref<2x8x33xf32, #tpu.memory_space<vmem>>, %arg1: memref<33x80xf32, #tpu.memory_space<vmem>>, %arg2: memref<33x80xf32, #tpu.memory_space<vmem>>, %arg3: memref<33x80xf32, #tpu.memory_space<vmem>>, %arg4: memref<3x80xf32, #tpu.memory_space<vmem>>, %arg5: memref<80x33xf32, #tpu.memory_space<vmem>>, %arg6: memref<33x33xf32, #tpu.memory_space<vmem>>, %arg7: memref<6x33xf32, #tpu.memory_space<vmem>>, %arg8: memref<33x160xf32, #tpu.memory_space<vmem>>, %arg9: memref<1x160xf32, #tpu.memory_space<vmem>>, %arg10: memref<160x33xf32, #tpu.memory_space<vmem>>, %arg11: memref<33x320xf32, #tpu.memory_space<vmem>>, %arg12: memref<1x320xf32, #tpu.memory_space<vmem>>, %arg13: memref<16x320xf32, #tpu.memory_space<vmem>>) attributes {dimension_semantics = [], scalar_prefetch = 0 : i64, scratch_operands = 0 : i64, tpu.core_type = #tpu.core_type<tc>} {
    %c0 = arith.constant 0 : index
    %c0_0 = arith.constant 0 : index
    %c0_1 = arith.constant 0 : index
    %0 = vector.load %arg0[%c0, %c0_0, %c0_1] : memref<2x8x33xf32, #tpu.memory_space<vmem>>, vector<2x8x33xf32>
    %1 = vector.shape_cast %0 : vector<2x8x33xf32> to vector<16x33xf32>
    %c0_2 = arith.constant 0 : index
    %c0_3 = arith.constant 0 : index
    %2 = vector.load %arg6[%c0_2, %c0_3] : memref<33x33xf32, #tpu.memory_space<vmem>>, vector<33x33xf32>
    %c0_4 = arith.constant 0 : index
    %c0_5 = arith.constant 0 : index
    %3 = vector.load %arg7[%c0_4, %c0_5] : memref<6x33xf32, #tpu.memory_space<vmem>>, vector<1x33xf32>
    %c1 = arith.constant 1 : index
    %c0_6 = arith.constant 0 : index
    %4 = vector.load %arg7[%c1, %c0_6] : memref<6x33xf32, #tpu.memory_space<vmem>>, vector<1x33xf32>
    %c2 = arith.constant 2 : index
    %c0_7 = arith.constant 0 : index
    %5 = vector.load %arg7[%c2, %c0_7] : memref<6x33xf32, #tpu.memory_space<vmem>>, vector<1x33xf32>
    %c3 = arith.constant 3 : index
    %c0_8 = arith.constant 0 : index
    %6 = vector.load %arg7[%c3, %c0_8] : memref<6x33xf32, #tpu.memory_space<vmem>>, vector<1x33xf32>
    %c4 = arith.constant 4 : index
    %c0_9 = arith.constant 0 : index
    %7 = vector.load %arg7[%c4, %c0_9] : memref<6x33xf32, #tpu.memory_space<vmem>>, vector<1x33xf32>
    %c5 = arith.constant 5 : index
    %c0_10 = arith.constant 0 : index
    %8 = vector.load %arg7[%c5, %c0_10] : memref<6x33xf32, #tpu.memory_space<vmem>>, vector<1x33xf32>
    %c0_11 = arith.constant 0 : index
    %c0_12 = arith.constant 0 : index
    %9 = vector.load %arg1[%c0_11, %c0_12] : memref<33x80xf32, #tpu.memory_space<vmem>>, vector<33x80xf32>
    %cst = arith.constant dense<0.000000e+00> : vector<2x8x80xf32>
    %10 = tpu.matmul %0, %9, %cst {dimension_numbers = #tpu.dot_dimension_numbers<[2], [0], [0, 1], [1], [0, 0, 0, 1, 1, 1], [], []>} : vector<2x8x33xf32>, vector<33x80xf32>, vector<2x8x80xf32> -> vector<2x8x80xf32>
    %c0_13 = arith.constant 0 : index
    %c0_14 = arith.constant 0 : index
    %11 = vector.load %arg4[%c0_13, %c0_14] : memref<3x80xf32, #tpu.memory_space<vmem>>, vector<1x80xf32>
    %12 = vector.shape_cast %11 : vector<1x80xf32> to vector<1x1x80xf32>
    %13 = vector.broadcast %12 : vector<1x1x80xf32> to vector<2x8x80xf32>
    %14 = arith.addf %10, %13 : vector<2x8x80xf32>
    %c0_15 = arith.constant 0 : index
    %c0_16 = arith.constant 0 : index
    %15 = vector.load %arg2[%c0_15, %c0_16] : memref<33x80xf32, #tpu.memory_space<vmem>>, vector<33x80xf32>
    %cst_17 = arith.constant dense<0.000000e+00> : vector<2x8x80xf32>
    %16 = tpu.matmul %0, %15, %cst_17 {dimension_numbers = #tpu.dot_dimension_numbers<[2], [0], [0, 1], [1], [0, 0, 0, 1, 1, 1], [], []>} : vector<2x8x33xf32>, vector<33x80xf32>, vector<2x8x80xf32> -> vector<2x8x80xf32>
    %c1_18 = arith.constant 1 : index
    %c0_19 = arith.constant 0 : index
    %17 = vector.load %arg4[%c1_18, %c0_19] : memref<3x80xf32, #tpu.memory_space<vmem>>, vector<1x80xf32>
    %18 = vector.shape_cast %17 : vector<1x80xf32> to vector<1x1x80xf32>
    %19 = vector.broadcast %18 : vector<1x1x80xf32> to vector<2x8x80xf32>
    %20 = arith.addf %16, %19 : vector<2x8x80xf32>
    %c0_20 = arith.constant 0 : index
    %c0_21 = arith.constant 0 : index
    %21 = vector.load %arg3[%c0_20, %c0_21] : memref<33x80xf32, #tpu.memory_space<vmem>>, vector<33x80xf32>
    %cst_22 = arith.constant dense<0.000000e+00> : vector<2x8x80xf32>
    %22 = tpu.matmul %0, %21, %cst_22 {dimension_numbers = #tpu.dot_dimension_numbers<[2], [0], [0, 1], [1], [0, 0, 0, 1, 1, 1], [], []>} : vector<2x8x33xf32>, vector<33x80xf32>, vector<2x8x80xf32> -> vector<2x8x80xf32>
    %c2_23 = arith.constant 2 : index
    %c0_24 = arith.constant 0 : index
    %23 = vector.load %arg4[%c2_23, %c0_24] : memref<3x80xf32, #tpu.memory_space<vmem>>, vector<1x80xf32>
    %24 = vector.shape_cast %23 : vector<1x80xf32> to vector<1x1x80xf32>
    %25 = vector.broadcast %24 : vector<1x1x80xf32> to vector<2x8x80xf32>
    %26 = arith.addf %22, %25 : vector<2x8x80xf32>
    %27 = vector.extract_strided_slice %14 {offsets = [0, 0, 0], sizes = [2, 8, 16], strides = [1, 1, 1]} : vector<2x8x80xf32> to vector<2x8x16xf32>
    %28 = vector.extract_strided_slice %14 {offsets = [0, 0, 16], sizes = [2, 8, 16], strides = [1, 1, 1]} : vector<2x8x80xf32> to vector<2x8x16xf32>
    %29 = vector.extract_strided_slice %14 {offsets = [0, 0, 32], sizes = [2, 8, 16], strides = [1, 1, 1]} : vector<2x8x80xf32> to vector<2x8x16xf32>
    %30 = vector.extract_strided_slice %14 {offsets = [0, 0, 48], sizes = [2, 8, 16], strides = [1, 1, 1]} : vector<2x8x80xf32> to vector<2x8x16xf32>
    %31 = vector.extract_strided_slice %14 {offsets = [0, 0, 64], sizes = [2, 8, 16], strides = [1, 1, 1]} : vector<2x8x80xf32> to vector<2x8x16xf32>
    %32 = tpu.concatenate %27, %28, %29, %30, %31 in 0 : vector<2x8x16xf32>, vector<2x8x16xf32>, vector<2x8x16xf32>, vector<2x8x16xf32>, vector<2x8x16xf32> -> vector<10x8x16xf32>
    %33 = vector.extract_strided_slice %20 {offsets = [0, 0, 0], sizes = [2, 8, 16], strides = [1, 1, 1]} : vector<2x8x80xf32> to vector<2x8x16xf32>
    %34 = vector.extract_strided_slice %20 {offsets = [0, 0, 16], sizes = [2, 8, 16], strides = [1, 1, 1]} : vector<2x8x80xf32> to vector<2x8x16xf32>
    %35 = vector.extract_strided_slice %20 {offsets = [0, 0, 32], sizes = [2, 8, 16], strides = [1, 1, 1]} : vector<2x8x80xf32> to vector<2x8x16xf32>
    %36 = vector.extract_strided_slice %20 {offsets = [0, 0, 48], sizes = [2, 8, 16], strides = [1, 1, 1]} : vector<2x8x80xf32> to vector<2x8x16xf32>
    %37 = vector.extract_strided_slice %20 {offsets = [0, 0, 64], sizes = [2, 8, 16], strides = [1, 1, 1]} : vector<2x8x80xf32> to vector<2x8x16xf32>
    %38 = tpu.concatenate %33, %34, %35, %36, %37 in 0 : vector<2x8x16xf32>, vector<2x8x16xf32>, vector<2x8x16xf32>, vector<2x8x16xf32>, vector<2x8x16xf32> -> vector<10x8x16xf32>
    %39 = vector.extract_strided_slice %26 {offsets = [0, 0, 0], sizes = [2, 8, 16], strides = [1, 1, 1]} : vector<2x8x80xf32> to vector<2x8x16xf32>
    %40 = vector.extract_strided_slice %26 {offsets = [0, 0, 16], sizes = [2, 8, 16], strides = [1, 1, 1]} : vector<2x8x80xf32> to vector<2x8x16xf32>
    %41 = vector.extract_strided_slice %26 {offsets = [0, 0, 32], sizes = [2, 8, 16], strides = [1, 1, 1]} : vector<2x8x80xf32> to vector<2x8x16xf32>
    %42 = vector.extract_strided_slice %26 {offsets = [0, 0, 48], sizes = [2, 8, 16], strides = [1, 1, 1]} : vector<2x8x80xf32> to vector<2x8x16xf32>
    %43 = vector.extract_strided_slice %26 {offsets = [0, 0, 64], sizes = [2, 8, 16], strides = [1, 1, 1]} : vector<2x8x80xf32> to vector<2x8x16xf32>
    %44 = tpu.concatenate %39, %40, %41, %42, %43 in 0 : vector<2x8x16xf32>, vector<2x8x16xf32>, vector<2x8x16xf32>, vector<2x8x16xf32>, vector<2x8x16xf32> -> vector<10x8x16xf32>
    "tpu.trace_start"() <{level = 10 : i32, message = "tqd,tkd->tqk"}> : () -> ()
    %cst_25 = arith.constant dense<0.000000e+00> : vector<10x8x8xf32>
    %45 = tpu.matmul %32, %38, %cst_25 {dimension_numbers = #tpu.dot_dimension_numbers<[2], [2], [1], [1], [0, 0, 0, 1, 1, 1], [0], [0]>} : vector<10x8x16xf32>, vector<10x8x16xf32>, vector<10x8x8xf32> -> vector<10x8x8xf32>
    "tpu.trace_stop"() : () -> ()
    %cst_26 = arith.constant dense<0xFF800000> : vector<10x8xf32>
    %46 = vector.multi_reduction <maximumf>, %45, %cst_26 [2] : vector<10x8x8xf32> to vector<10x8xf32>
    %47 = vector.shape_cast %46 : vector<10x8xf32> to vector<10x8x1xf32>
    %48 = vector.broadcast %47 : vector<10x8x1xf32> to vector<10x8x8xf32>
    %49 = arith.subf %45, %48 : vector<10x8x8xf32>
    %50 = math.exp %49 : vector<10x8x8xf32>
    %cst_27 = arith.constant dense<0.000000e+00> : vector<10x8xf32>
    %51 = vector.multi_reduction <add>, %50, %cst_27 [2] : vector<10x8x8xf32> to vector<10x8xf32>
    %52 = vector.shape_cast %51 : vector<10x8xf32> to vector<10x8x1xf32>
    %53 = tpu.reciprocal %52 {approx = true} : vector<10x8x1xf32> -> vector<10x8x1xf32>
    %54 = vector.broadcast %53 : vector<10x8x1xf32> to vector<10x8x8xf32>
    %55 = arith.mulf %50, %54 : vector<10x8x8xf32>
    "tpu.trace_start"() <{level = 10 : i32, message = "tqk,tkd->tqd"}> : () -> ()
    %cst_28 = arith.constant dense<0.000000e+00> : vector<10x8x16xf32>
    %56 = tpu.matmul %55, %44, %cst_28 {dimension_numbers = #tpu.dot_dimension_numbers<[2], [1], [1], [2], [0, 0, 0, 1, 1, 2], [0], [0]>} : vector<10x8x8xf32>, vector<10x8x16xf32>, vector<10x8x16xf32> -> vector<10x8x16xf32>
    "tpu.trace_stop"() : () -> ()
    %57 = vector.extract_strided_slice %56 {offsets = [0, 0, 0], sizes = [2, 8, 16], strides = [1, 1, 1]} : vector<10x8x16xf32> to vector<2x8x16xf32>
    %58 = vector.extract_strided_slice %56 {offsets = [2, 0, 0], sizes = [2, 8, 16], strides = [1, 1, 1]} : vector<10x8x16xf32> to vector<2x8x16xf32>
    %59 = vector.extract_strided_slice %56 {offsets = [4, 0, 0], sizes = [2, 8, 16], strides = [1, 1, 1]} : vector<10x8x16xf32> to vector<2x8x16xf32>
    %60 = vector.extract_strided_slice %56 {offsets = [6, 0, 0], sizes = [2, 8, 16], strides = [1, 1, 1]} : vector<10x8x16xf32> to vector<2x8x16xf32>
    %61 = vector.extract_strided_slice %56 {offsets = [8, 0, 0], sizes = [2, 8, 16], strides = [1, 1, 1]} : vector<10x8x16xf32> to vector<2x8x16xf32>
    %62 = tpu.concatenate %57, %58, %59, %60, %61 in 2 : vector<2x8x16xf32>, vector<2x8x16xf32>, vector<2x8x16xf32>, vector<2x8x16xf32>, vector<2x8x16xf32> -> vector<2x8x80xf32>
    %63 = vector.shape_cast %62 : vector<2x8x80xf32> to vector<16x80xf32>
    %c0_29 = arith.constant 0 : index
    %c0_30 = arith.constant 0 : index
    %64 = vector.load %arg5[%c0_29, %c0_30] : memref<80x33xf32, #tpu.memory_space<vmem>>, vector<80x33xf32>
    %cst_31 = arith.constant dense<0.000000e+00> : vector<16x33xf32>
    %65 = tpu.matmul %63, %64, %cst_31 {dimension_numbers = #tpu.dot_dimension_numbers<[1], [0], [0], [1], [0, 0, 1, 1], [], []>} : vector<16x80xf32>, vector<80x33xf32>, vector<16x33xf32> -> vector<16x33xf32>
    %66 = vector.broadcast %3 : vector<1x33xf32> to vector<16x33xf32>
    %67 = arith.addf %65, %66 : vector<16x33xf32>
    %68 = arith.addf %1, %67 : vector<16x33xf32>
    %cst_32 = arith.constant dense<0.000000e+00> : vector<16x33xf32>
    %69 = tpu.matmul %68, %2, %cst_32 {dimension_numbers = #tpu.dot_dimension_numbers<[1], [0], [0], [1], [0, 0, 1, 1], [], []>} : vector<16x33xf32>, vector<33x33xf32>, vector<16x33xf32> -> vector<16x33xf32>
    %70 = arith.subf %68, %69 : vector<16x33xf32>
    %71 = arith.mulf %70, %70 : vector<16x33xf32>
    %cst_33 = arith.constant dense<0.000000e+00> : vector<16x33xf32>
    %72 = tpu.matmul %71, %2, %cst_33 {dimension_numbers = #tpu.dot_dimension_numbers<[1], [0], [0], [1], [0, 0, 1, 1], [], []>} : vector<16x33xf32>, vector<33x33xf32>, vector<16x33xf32> -> vector<16x33xf32>
    %cst_34 = arith.constant 9.99999974E-6 : f32
    %73 = vector.broadcast %cst_34 : f32 to vector<16x33xf32>
    %74 = arith.addf %72, %73 : vector<16x33xf32>
    %75 = math.rsqrt %74 : vector<16x33xf32>
    %76 = arith.mulf %70, %75 : vector<16x33xf32>
    %77 = vector.broadcast %4 : vector<1x33xf32> to vector<16x33xf32>
    %78 = arith.mulf %76, %77 : vector<16x33xf32>
    %79 = vector.broadcast %5 : vector<1x33xf32> to vector<16x33xf32>
    %80 = arith.addf %78, %79 : vector<16x33xf32>
    %c0_35 = arith.constant 0 : index
    %c0_36 = arith.constant 0 : index
    %81 = vector.load %arg8[%c0_35, %c0_36] : memref<33x160xf32, #tpu.memory_space<vmem>>, vector<33x160xf32>
    %cst_37 = arith.constant dense<0.000000e+00> : vector<16x160xf32>
    %82 = tpu.matmul %80, %81, %cst_37 {dimension_numbers = #tpu.dot_dimension_numbers<[1], [0], [0], [1], [0, 0, 1, 1], [], []>} : vector<16x33xf32>, vector<33x160xf32>, vector<16x160xf32> -> vector<16x160xf32>
    %c0_38 = arith.constant 0 : index
    %c0_39 = arith.constant 0 : index
    %83 = vector.load %arg9[%c0_38, %c0_39] : memref<1x160xf32, #tpu.memory_space<vmem>>, vector<1x160xf32>
    %84 = vector.broadcast %83 : vector<1x160xf32> to vector<16x160xf32>
    %85 = arith.addf %82, %84 : vector<16x160xf32>
    %cst_40 = arith.constant 0.000000e+00 : f32
    %86 = vector.broadcast %cst_40 : f32 to vector<16x160xf32>
    %87 = arith.maximumf %85, %86 : vector<16x160xf32>
    %c0_41 = arith.constant 0 : index
    %c0_42 = arith.constant 0 : index
    %88 = vector.load %arg10[%c0_41, %c0_42] : memref<160x33xf32, #tpu.memory_space<vmem>>, vector<160x33xf32>
    %cst_43 = arith.constant dense<0.000000e+00> : vector<16x33xf32>
    %89 = tpu.matmul %87, %88, %cst_43 {dimension_numbers = #tpu.dot_dimension_numbers<[1], [0], [0], [1], [0, 0, 1, 1], [], []>} : vector<16x160xf32>, vector<160x33xf32>, vector<16x33xf32> -> vector<16x33xf32>
    %90 = vector.broadcast %6 : vector<1x33xf32> to vector<16x33xf32>
    %91 = arith.addf %89, %90 : vector<16x33xf32>
    %92 = arith.addf %80, %91 : vector<16x33xf32>
    %cst_44 = arith.constant dense<0.000000e+00> : vector<16x33xf32>
    %93 = tpu.matmul %92, %2, %cst_44 {dimension_numbers = #tpu.dot_dimension_numbers<[1], [0], [0], [1], [0, 0, 1, 1], [], []>} : vector<16x33xf32>, vector<33x33xf32>, vector<16x33xf32> -> vector<16x33xf32>
    %94 = arith.subf %92, %93 : vector<16x33xf32>
    %95 = arith.mulf %94, %94 : vector<16x33xf32>
    %cst_45 = arith.constant dense<0.000000e+00> : vector<16x33xf32>
    %96 = tpu.matmul %95, %2, %cst_45 {dimension_numbers = #tpu.dot_dimension_numbers<[1], [0], [0], [1], [0, 0, 1, 1], [], []>} : vector<16x33xf32>, vector<33x33xf32>, vector<16x33xf32> -> vector<16x33xf32>
    %cst_46 = arith.constant 9.99999974E-6 : f32
    %97 = vector.broadcast %cst_46 : f32 to vector<16x33xf32>
    %98 = arith.addf %96, %97 : vector<16x33xf32>
    %99 = math.rsqrt %98 : vector<16x33xf32>
    %100 = arith.mulf %94, %99 : vector<16x33xf32>
    %101 = vector.broadcast %7 : vector<1x33xf32> to vector<16x33xf32>
    %102 = arith.mulf %100, %101 : vector<16x33xf32>
    %103 = vector.broadcast %8 : vector<1x33xf32> to vector<16x33xf32>
    %104 = arith.addf %102, %103 : vector<16x33xf32>
    %c0_47 = arith.constant 0 : index
    %c0_48 = arith.constant 0 : index
    %105 = vector.load %arg11[%c0_47, %c0_48] : memref<33x320xf32, #tpu.memory_space<vmem>>, vector<33x320xf32>
    %cst_49 = arith.constant dense<0.000000e+00> : vector<16x320xf32>
    %106 = tpu.matmul %104, %105, %cst_49 {dimension_numbers = #tpu.dot_dimension_numbers<[1], [0], [0], [1], [0, 0, 1, 1], [], []>} : vector<16x33xf32>, vector<33x320xf32>, vector<16x320xf32> -> vector<16x320xf32>
    %c0_50 = arith.constant 0 : index
    %c0_51 = arith.constant 0 : index
    %107 = vector.load %arg12[%c0_50, %c0_51] : memref<1x320xf32, #tpu.memory_space<vmem>>, vector<1x320xf32>
    %108 = vector.broadcast %107 : vector<1x320xf32> to vector<16x320xf32>
    %109 = arith.addf %106, %108 : vector<16x320xf32>
    %c0_52 = arith.constant 0 : index
    %c0_53 = arith.constant 0 : index
    %110 = vector.load %arg13[%c0_52, %c0_53] : memref<16x320xf32, #tpu.memory_space<vmem>>, vector<16x320xf32>
    tpu.vector_store %arg13[%c0_52, %c0_53], %109 {strides = array<i32>} : memref<16x320xf32, #tpu.memory_space<vmem>>, vector<16x320xf32>,
    return
  }
}

</mosaic_0001>

<llo_original>
// kernel: tpu_custom_call.1
$region0: #{tpu_custom_call.1}
  #allocation0 [shape = 'u32[]', space=smem, size = 0x4, offset = 0x4, fixed_abs, tag = 'smem constant byte address 0x4 - core index']
  #allocation1 [shape = 'u32[144,128]{1,0:T(1,128)}', space=vmem, size = 0x12000, scoped, tag = 'internal scratch']
  %s0 = inlined_call_operand.vmem [shape: f32[2,8,33], index: 0, kind: input, shape index: {}]
  %s1 = inlined_call_operand.vmem [shape: f32[33,80], index: 1, kind: input, shape index: {}]
  %s2 = inlined_call_operand.vmem [shape: f32[33,80], index: 2, kind: input, shape index: {}]
  %s3 = inlined_call_operand.hbm [shape: f32[33,80], index: 3, kind: input, shape index: {}]
  %s4 = inlined_call_operand.hbm [shape: f32[3,80], index: 4, kind: input, shape index: {}]
  %s5 = inlined_call_operand.vmem [shape: f32[80,33], index: 5, kind: input, shape index: {}]
  %s6 = inlined_call_operand.hbm [shape: f32[33,33], index: 6, kind: input, shape index: {}]
  %s7 = inlined_call_operand.hbm [shape: f32[6,33], index: 7, kind: input, shape index: {}]
  %s8 = inlined_call_operand.vmem [shape: f32[33,160], index: 8, kind: input, shape index: {}]
  %s9 = inlined_call_operand.vmem [shape: f32[1,160], index: 9, kind: input, shape index: {}]
  %s10 = inlined_call_operand.vmem [shape: f32[160,33], index: 10, kind: input, shape index: {}]
  %s11 = inlined_call_operand.vmem [shape: f32[33,320], index: 11, kind: input, shape index: {}]
  %s12 = inlined_call_operand.vmem [shape: f32[1,320], index: 12, kind: input, shape index: {}]
  %s13 = inlined_call_operand.hbm [shape: f32[16,320], index: 13, kind: output, shape index: {}]
  %s14 = sld [smem:[#allocation0]]
  $region78: #{tpu_custom_call.1} parent=0
    _
  %s16 = ssub.s32 1, %s14
  %s17 = scalar_select 0, %s16, %s14
  $region1: #{tpu_custom_call.1} parent=0
    #allocation2 [shape = 'u8[20480]{0}', space=vmem, size = 0x5000, scoped, tag = 'input window, operand 3, single buffered']
    #allocation3 [shape = 's32[1]{0}', space=sflag, size = 0x4, scoped, tag = 'scoped memory for tpu_custom_call.1']
    #allocation4 [shape = 's32[1]{0}', space=sflag, size = 0x4, scoped, tag = 'scoped memory for tpu_custom_call.1']
    #allocation5 [shape = 'u8[2048]{0}', space=vmem, size = 0x800, scoped, tag = 'input window, operand 4, single buffered']
    #allocation6 [shape = 's32[1]{0}', space=sflag, size = 0x4, scoped, tag = 'scoped memory for tpu_custom_call.1']
    #allocation7 [shape = 'u8[20480]{0}', space=vmem, size = 0x5000, scoped, tag = 'input window, operand 6, single buffered']
    #allocation8 [shape = 'u8[4096]{0}', space=vmem, size = 0x1000, scoped, tag = 'input window, operand 7, single buffered']
    #allocation9 [shape = 's32[1]{0}', space=sflag, size = 0x4, scoped, tag = 'scoped memory for tpu_custom_call.1']
    #allocation10 [shape = 'u8[24576]{0}', space=vmem, size = 0x6000, scoped, tag = 'output window, operand 0, single buffered']
    %18 = vsyncpa [#allocation3], 0
    %19 = vsyncpa [#allocation6], 0
    %20 = vsyncpa [#allocation9], 0
    %21 = vsyncpa [#allocation4], 0
    // Predicated region
    $region2: #{tpu_custom_call.1} parent=1 // pred_check
      _
    $region3: #{tpu_custom_call.1} parent=1 // pred_check_branch
      %23 = sbr.rel (0) target = $region5
    $region4: #{tpu_custom_call.1} parent=1 // pred_region
      _
    $region5: #{tpu_custom_call.1} parent=1 // pred_fallthru
      _
    // Predicated region
    $region6: #{tpu_custom_call.1} parent=1 // pred_check
      _
    $region7: #{tpu_custom_call.1} parent=1 // pred_check_branch
      %25 = sbr.rel (0) target = $region9
    $region8: #{tpu_custom_call.1} parent=1 // pred_region
      _
    $region9: #{tpu_custom_call.1} parent=1 // pred_fallthru
      _
    // Predicated region
    $region10: #{tpu_custom_call.1} parent=1 // pred_check
      _
    $region11: #{tpu_custom_call.1} parent=1 // pred_check_branch
      %27 = sbr.rel (0) target = $region13
    $region12: #{tpu_custom_call.1} parent=1 // pred_region
      _
    $region13: #{tpu_custom_call.1} parent=1 // pred_fallthru
      _
    // Predicated region
    $region14: #{tpu_custom_call.1} parent=1 // pred_check
      _
    $region15: #{tpu_custom_call.1} parent=1 // pred_check_branch
      %29 = sbr.rel (0) target = $region17
    $region16: #{tpu_custom_call.1} parent=1 // pred_region
      %s31 = ssub.s32 640, 640
      %32 = vsyncadd [#allocation3], %s31
      %s33 = sshll.u32 [#allocation2], 4
      %s34 = int_to_ptr.vmem [resolvable:$true] %s33
      %39 = dma.hbm_to_vmem [thread:$0]  %s3, 640, %s34, [#allocation3], 128, 128, 8
    $region17: #{tpu_custom_call.1} parent=1 // pred_fallthru
      _
    // Predicated region
    $region18: #{tpu_custom_call.1} parent=1 // pred_check
      _
    $region19: #{tpu_custom_call.1} parent=1 // pred_check_branch
      %41 = sbr.rel (0) target = $region21
    $region20: #{tpu_custom_call.1} parent=1 // pred_region
      %s43 = ssub.s32 64, 64
      %44 = vsyncadd [#allocation6], %s43
      %s46 = sshll.u32 [#allocation5], 4
      %s47 = int_to_ptr.vmem [resolvable:$true] %s46
      %49 = dma.hbm_to_vmem [thread:$0]  %s4, 64, %s47, [#allocation6]
    $region21: #{tpu_custom_call.1} parent=1 // pred_fallthru
      _
    // Predicated region
    $region22: #{tpu_custom_call.1} parent=1 // pred_check
      _
    $region23: #{tpu_custom_call.1} parent=1 // pred_check_branch
      %51 = sbr.rel (0) target = $region25
    $region24: #{tpu_custom_call.1} parent=1 // pred_region
      _
    $region25: #{tpu_custom_call.1} parent=1 // pred_fallthru
      _
    // Predicated region
    $region26: #{tpu_custom_call.1} parent=1 // pred_check
      _
    $region27: #{tpu_custom_call.1} parent=1 // pred_check_branch
      %53 = sbr.rel (0) target = $region29
    $region28: #{tpu_custom_call.1} parent=1 // pred_region
      %s55 = ssub.s32 640, 640
      %56 = vsyncadd [#allocation6], %s55
      %s57 = sshll.u32 [#allocation7], 4
      %s58 = int_to_ptr.vmem [resolvable:$true] %s57
      %63 = dma.hbm_to_vmem [thread:$0]  %s6, 640, %s58, [#allocation6], 128, 128, 8
    $region29: #{tpu_custom_call.1} parent=1 // pred_fallthru
      _
    // Predicated region
    $region30: #{tpu_custom_call.1} parent=1 // pred_check
      _
    $region31: #{tpu_custom_call.1} parent=1 // pred_check_branch
      %65 = sbr.rel (0) target = $region33
    $region32: #{tpu_custom_call.1} parent=1 // pred_region
      %s67 = ssub.s32 128, 128
      %68 = vsyncadd [#allocation9], %s67
      %s70 = sshll.u32 [#allocation8], 4
      %s71 = int_to_ptr.vmem [resolvable:$true] %s70
      %73 = dma.hbm_to_vmem [thread:$0]  %s7, 128, %s71, [#allocation9]
    $region33: #{tpu_custom_call.1} parent=1 // pred_fallthru
      _
    // Predicated region
    $region34: #{tpu_custom_call.1} parent=1 // pred_check
      _
    $region35: #{tpu_custom_call.1} parent=1 // pred_check_branch
      %75 = sbr.rel (0) target = $region37
    $region36: #{tpu_custom_call.1} parent=1 // pred_region
      _
    $region37: #{tpu_custom_call.1} parent=1 // pred_fallthru
      _
    // Predicated region
    $region38: #{tpu_custom_call.1} parent=1 // pred_check
      _
    $region39: #{tpu_custom_call.1} parent=1 // pred_check_branch
      %77 = sbr.rel (0) target = $region41
    $region40: #{tpu_custom_call.1} parent=1 // pred_region
      _
    $region41: #{tpu_custom_call.1} parent=1 // pred_fallthru
      _
    // Predicated region
    $region42: #{tpu_custom_call.1} parent=1 // pred_check
      _
    $region43: #{tpu_custom_call.1} parent=1 // pred_check_branch
      %79 = sbr.rel (0) target = $region45
    $region44: #{tpu_custom_call.1} parent=1 // pred_region
      _
    $region45: #{tpu_custom_call.1} parent=1 // pred_fallthru
      _
    // Predicated region
    $region46: #{tpu_custom_call.1} parent=1 // pred_check
      _
    $region47: #{tpu_custom_call.1} parent=1 // pred_check_branch
      %81 = sbr.rel (0) target = $region49
    $region48: #{tpu_custom_call.1} parent=1 // pred_region
      _
    $region49: #{tpu_custom_call.1} parent=1 // pred_fallthru
      _
    // Predicated region
    $region50: #{tpu_custom_call.1} parent=1 // pred_check
      _
    $region51: #{tpu_custom_call.1} parent=1 // pred_check_branch
      %83 = sbr.rel (0) target = $region53
    $region52: #{tpu_custom_call.1} parent=1 // pred_region
      _
    $region53: #{tpu_custom_call.1} parent=1 // pred_fallthru
      _
    // Predicated region
    $region54: #{tpu_custom_call.1} parent=1 // pred_check
      _
    $region55: #{tpu_custom_call.1} parent=1 // pred_check_branch
      %85 = sbr.rel (0) target = $region57
    $region56: #{tpu_custom_call.1} parent=1 // pred_region
      %86 = dma.done [#allocation3], 640
    $region57: #{tpu_custom_call.1} parent=1 // pred_fallthru
      _
    // Predicated region
    $region58: #{tpu_custom_call.1} parent=1 // pred_check
      _
    $region59: #{tpu_custom_call.1} parent=1 // pred_check_branch
      %88 = sbr.rel (0) target = $region61
    $region60: #{tpu_custom_call.1} parent=1 // pred_region
      %89 = dma.done [#allocation6], 64
    $region61: #{tpu_custom_call.1} parent=1 // pred_fallthru
      _
    // Predicated region
    $region62: #{tpu_custom_call.1} parent=1 // pred_check
      _
    $region63: #{tpu_custom_call.1} parent=1 // pred_check_branch
      %91 = sbr.rel (0) target = $region65
    $region64: #{tpu_custom_call.1} parent=1 // pred_region
      %92 = dma.done [#allocation6], 640
    $region65: #{tpu_custom_call.1} parent=1 // pred_fallthru
      _
    // Predicated region
    $region66: #{tpu_custom_call.1} parent=1 // pred_check
      _
    $region67: #{tpu_custom_call.1} parent=1 // pred_check_branch
      %94 = sbr.rel (0) target = $region69
    $region68: #{tpu_custom_call.1} parent=1 // pred_region
      %95 = dma.done [#allocation9], 128
    $region69: #{tpu_custom_call.1} parent=1 // pred_fallthru
      _
    %v96 = vld [vmem:[%s0] sm:$0xff]
    %v97 = vld [vmem:[%s0 + $0x8] sm:$0xff]
    %v98 = vld [vmem:[#allocation7] sm:$0xff]
    %v99 = vld [vmem:[#allocation7 + $0x8] sm:$0xff]
    %v100 = vld [vmem:[#allocation7 + $0x10] sm:$0xff]
    %v101 = vld [vmem:[#allocation7 + $0x18] sm:$0xff]
    %v102 = vld [vmem:[#allocation7 + $0x20] sm:$0x1]
    %v103 = vld [vmem:[#allocation8] sm:$0x1]
    %v104 = vld [vmem:[#allocation8 + $0x1] sm:$0x1]
    %v105 = vld [vmem:[#allocation8 + $0x2] sm:$0x1]
    %v106 = vld [vmem:[#allocation8 + $0x3] sm:$0x1]
    %v107 = vld [vmem:[#allocation8 + $0x4] sm:$0x1]
    %v108 = vld [vmem:[#allocation8 + $0x5] sm:$0x1]
    %v109 = vld [vmem:[%s1] sm:$0xff]
    %v110 = vld [vmem:[%s1 + $0x8] sm:$0xff]
    %v111 = vld [vmem:[%s1 + $0x10] sm:$0xff]
    %v112 = vld [vmem:[%s1 + $0x18] sm:$0xff]
    %v113 = vld [vmem:[%s1 + $0x20] sm:$0x1]
    %v114 = vld [vmem:[#allocation5] sm:$0x1]
    %v115 = vlaneseq
    %v116 = vshrl.u32 %v115, 7
    %v117 = vsub.s32 0, %v116
    %v118 = vrot.slane %v114, %v117
    %vm119 = vcmask 269312
    %v121 = vsel %vm119, %v96, 0
    %v124 = vsel %vm119, %v97, 0
    %vm126 = vcmask 1040384
    %v128 = vsel %vm126, %v113, 0
    %130 = vmatprep.subr.mxu0 0.0
    %131 = vmatpush1.msra.mxu0 0.0
    %132 = vmatprep.subr.mxu0 0.0
    %133 = vmatpush1.msra.mxu0 0.0
    %134 = vmatprep.subr.mxu0 0.0
    %135 = vmatpush1.msra.mxu0 0.0
    %136 = vmatprep.subr.mxu0 0.0
    %137 = vmatpush1.msra.mxu0 0.0
    %138 = vmatprep.subr.mxu0 0.0
    %139 = vmatpush1.msra.mxu0 0.0
    %140 = vmatprep.subr.mxu0 0.0
    %141 = vmatpush1.msra.mxu0 0.0
    %142 = vmatprep.subr.mxu0 0.0
    %143 = vmatpush1.msra.mxu0 0.0
    %144 = vmatprep.subr.mxu0 0.0
    %145 = vmatpush1.msra.mxu0 0.0
    %146 = vmatprep.subr.mxu0 0.0
    %147 = vmatpush1.msra.mxu0 0.0
    %148 = vmatprep.subr.mxu0 0.0
    %149 = vmatpush1.msra.mxu0 0.0
    %150 = vmatprep.subr.mxu0 0.0
    %151 = vmatpush1.msra.mxu0 0.0
    %152 = vmatprep.subr.mxu0 0.0
    %153 = vmatpush1.msra.mxu0 %v128
    %154 = vmatprep.subr.mxu0 0.0
    %155 = vmatpush1.msra.mxu0 %v112
    %156 = vmatprep.subr.mxu0 0.0
    %157 = vmatpush1.msra.mxu0 %v111
    %158 = vmatprep.subr.mxu0 0.0
    %159 = vmatpush1.msra.mxu0 %v110
    %160 = vmatprep.subr.mxu0 0.0
    %161 = vmatpush1.msra.mxu0 %v109
    %162 = vmatprep.subr.mxu0 0.0
    %163 = vmatpush2.msra.mxu0 0.0
    %164 = vmatprep.subr.mxu0 0.0
    %165 = vmatpush2.msra.mxu0 0.0
    %166 = vmatprep.subr.mxu0 0.0
    %167 = vmatpush2.msra.mxu0 0.0
    %168 = vmatprep.subr.mxu0 0.0
    %169 = vmatpush2.msra.mxu0 0.0
    %170 = vmatprep.subr.mxu0 0.0
    %171 = vmatpush2.msra.mxu0 0.0
    %172 = vmatprep.subr.mxu0 0.0
    %173 = vmatpush2.msra.mxu0 0.0
    %174 = vmatprep.subr.mxu0 0.0
    %175 = vmatpush2.msra.mxu0 0.0
    %176 = vmatprep.subr.mxu0 0.0
    %177 = vmatpush2.msra.mxu0 0.0
    %178 = vmatprep.subr.mxu0 0.0
    %179 = vmatpush2.msra.mxu0 0.0
    %180 = vmatprep.subr.mxu0 0.0
    %181 = vmatpush2.msra.mxu0 0.0
    %182 = vmatprep.subr.mxu0 0.0
    %183 = vmatpush2.msra.mxu0 0.0
    %184 = vmatprep.subr.mxu0 0.0
    %185 = vmatpush2.msra.mxu0 0.0
    %186 = vmatprep.subr.mxu0 0.0
    %187 = vmatpush2.msra.mxu0 0.0
    %188 = vmatprep.subr.mxu0 0.0
    %189 = vmatpush2.msra.mxu0 0.0
    %190 = vmatprep.subr.mxu0 0.0
    %191 = vmatpush2.msra.mxu0 0.0
    %192 = vmatprep.subr.mxu0 0.0
    %193 = vmatpush2.msra.mxu0 0.0
    %194 = vmatprep.mubr.f32.mxu0 0.0
    %195 = vmatmul.mubr.f32.gmra.mxu0 %v121
    %v196 = vpop.f32.mrf.mxu0
    %v197 = vadd.f32 %v118, %v196
    %v198 = vpop.f32.mrf.mxu0
    %199 = vmatprep.mubr.f32.mxu0 0.0
    %200 = vmatmul.mubr.f32.gmra.mxu0 %v124
    %v201 = vpop.f32.mrf.mxu0
    %v202 = vadd.f32 %v118, %v201
    %v203 = vpop.f32.mrf.mxu0
    %204 = vdwg.mxu0
    %v205 = vld [vmem:[%s2] sm:$0xff]
    %v206 = vld [vmem:[%s2 + $0x8] sm:$0xff]
    %v207 = vld [vmem:[%s2 + $0x10] sm:$0xff]
    %v208 = vld [vmem:[%s2 + $0x18] sm:$0xff]
    %v209 = vld [vmem:[%s2 + $0x20] sm:$0x1]
    %v210 = vld [vmem:[#allocation5 + $0x1] sm:$0x1]
    %v211 = vlaneseq
    %v212 = vshrl.u32 %v211, 7
    %v213 = vsub.s32 0, %v212
    %v214 = vrot.slane %v210, %v213
    %v216 = vsel %vm126, %v209, 0
    %218 = vmatprep.subr.mxu0 0.0
    %219 = vmatpush1.msra.mxu0 0.0
    %220 = vmatprep.subr.mxu0 0.0
    %221 = vmatpush1.msra.mxu0 0.0
    %222 = vmatprep.subr.mxu0 0.0
    %223 = vmatpush1.msra.mxu0 0.0
    %224 = vmatprep.subr.mxu0 0.0
    %225 = vmatpush1.msra.mxu0 0.0
    %226 = vmatprep.subr.mxu0 0.0
    %227 = vmatpush1.msra.mxu0 0.0
    %228 = vmatprep.subr.mxu0 0.0
    %229 = vmatpush1.msra.mxu0 0.0
    %230 = vmatprep.subr.mxu0 0.0
    %231 = vmatpush1.msra.mxu0 0.0
    %232 = vmatprep.subr.mxu0 0.0
    %233 = vmatpush1.msra.mxu0 0.0
    %234 = vmatprep.subr.mxu0 0.0
    %235 = vmatpush1.msra.mxu0 0.0
    %236 = vmatprep.subr.mxu0 0.0
    %237 = vmatpush1.msra.mxu0 0.0
    %238 = vmatprep.subr.mxu0 0.0
    %239 = vmatpush1.msra.mxu0 0.0
    %240 = vmatprep.subr.mxu0 0.0
    %241 = vmatpush1.msra.mxu0 %v216
    %242 = vmatprep.subr.mxu0 0.0
    %243 = vmatpush1.msra.mxu0 %v208
    %244 = vmatprep.subr.mxu0 0.0
    %245 = vmatpush1.msra.mxu0 %v207
    %246 = vmatprep.subr.mxu0 0.0
    %247 = vmatpush1.msra.mxu0 %v206
    %248 = vmatprep.subr.mxu0 0.0
    %249 = vmatpush1.msra.mxu0 %v205
    %250 = vmatprep.subr.mxu0 0.0
    %251 = vmatpush2.msra.mxu0 0.0
    %252 = vmatprep.subr.mxu0 0.0
    %253 = vmatpush2.msra.mxu0 0.0
    %254 = vmatprep.subr.mxu0 0.0
    %255 = vmatpush2.msra.mxu0 0.0
    %256 = vmatprep.subr.mxu0 0.0
    %257 = vmatpush2.msra.mxu0 0.0
    %258 = vmatprep.subr.mxu0 0.0
    %259 = vmatpush2.msra.mxu0 0.0
    %260 = vmatprep.subr.mxu0 0.0
    %261 = vmatpush2.msra.mxu0 0.0
    %262 = vmatprep.subr.mxu0 0.0
    %263 = vmatpush2.msra.mxu0 0.0
    %264 = vmatprep.subr.mxu0 0.0
    %265 = vmatpush2.msra.mxu0 0.0
    %266 = vmatprep.subr.mxu0 0.0
    %267 = vmatpush2.msra.mxu0 0.0
    %268 = vmatprep.subr.mxu0 0.0
    %269 = vmatpush2.msra.mxu0 0.0
    %270 = vmatprep.subr.mxu0 0.0
    %271 = vmatpush2.msra.mxu0 0.0
    %272 = vmatprep.subr.mxu0 0.0
    %273 = vmatpush2.msra.mxu0 0.0
    %274 = vmatprep.subr.mxu0 0.0
    %275 = vmatpush2.msra.mxu0 0.0
    %276 = vmatprep.subr.mxu0 0.0
    %277 = vmatpush2.msra.mxu0 0.0
    %278 = vmatprep.subr.mxu0 0.0
    %279 = vmatpush2.msra.mxu0 0.0
    %280 = vmatprep.subr.mxu0 0.0
    %281 = vmatpush2.msra.mxu0 0.0
    %282 = vmatprep.mubr.f32.mxu0 0.0
    %283 = vmatmul.mubr.f32.gmra.mxu0 %v121
    %v284 = vpop.f32.mrf.mxu0
    %v285 = vadd.f32 %v214, %v284
    %v286 = vpop.f32.mrf.mxu0
    %287 = vmatprep.mubr.f32.mxu0 0.0
    %288 = vmatmul.mubr.f32.gmra.mxu0 %v124
    %v289 = vpop.f32.mrf.mxu0
    %v290 = vadd.f32 %v214, %v289
    %v291 = vpop.f32.mrf.mxu0
    %292 = vdwg.mxu0
    %v293 = vld [vmem:[#allocation2] sm:$0xff]
    %v294 = vld [vmem:[#allocation2 + $0x8] sm:$0xff]
    %v295 = vld [vmem:[#allocation2 + $0x10] sm:$0xff]
    %v296 = vld [vmem:[#allocation2 + $0x18] sm:$0xff]
    %v297 = vld [vmem:[#allocation2 + $0x20] sm:$0x1]
    %v298 = vld [vmem:[#allocation5 + $0x2] sm:$0x1]
    %v299 = vlaneseq
    %v300 = vshrl.u32 %v299, 7
    %v301 = vsub.s32 0, %v300
    %v302 = vrot.slane %v298, %v301
    %v304 = vsel %vm126, %v297, 0
    %306 = vmatprep.subr.mxu0 0.0
    %307 = vmatpush1.msra.mxu0 0.0
    %308 = vmatprep.subr.mxu0 0.0
    %309 = vmatpush1.msra.mxu0 0.0
    %310 = vmatprep.subr.mxu0 0.0
    %311 = vmatpush1.msra.mxu0 0.0
    %312 = vmatprep.subr.mxu0 0.0
    %313 = vmatpush1.msra.mxu0 0.0
    %314 = vmatprep.subr.mxu0 0.0
    %315 = vmatpush1.msra.mxu0 0.0
    %316 = vmatprep.subr.mxu0 0.0
    %317 = vmatpush1.msra.mxu0 0.0
    %318 = vmatprep.subr.mxu0 0.0
    %319 = vmatpush1.msra.mxu0 0.0
    %320 = vmatprep.subr.mxu0 0.0
    %321 = vmatpush1.msra.mxu0 0.0
    %322 = vmatprep.subr.mxu0 0.0
    %323 = vmatpush1.msra.mxu0 0.0
    %324 = vmatprep.subr.mxu0 0.0
    %325 = vmatpush1.msra.mxu0 0.0
    %326 = vmatprep.subr.mxu0 0.0
    %327 = vmatpush1.msra.mxu0 0.0
    %328 = vmatprep.subr.mxu0 0.0
    %329 = vmatpush1.msra.mxu0 %v304
    %330 = vmatprep.subr.mxu0 0.0
    %331 = vmatpush1.msra.mxu0 %v296
    %332 = vmatprep.subr.mxu0 0.0
    %333 = vmatpush1.msra.mxu0 %v295
    %334 = vmatprep.subr.mxu0 0.0
    %335 = vmatpush1.msra.mxu0 %v294
    %336 = vmatprep.subr.mxu0 0.0
    %337 = vmatpush1.msra.mxu0 %v293
    %338 = vmatprep.subr.mxu0 0.0
    %339 = vmatpush2.msra.mxu0 0.0
    %340 = vmatprep.subr.mxu0 0.0
    %341 = vmatpush2.msra.mxu0 0.0
    %342 = vmatprep.subr.mxu0 0.0
    %343 = vmatpush2.msra.mxu0 0.0
    %344 = vmatprep.subr.mxu0 0.0
    %345 = vmatpush2.msra.mxu0 0.0
    %346 = vmatprep.subr.mxu0 0.0
    %347 = vmatpush2.msra.mxu0 0.0
    %348 = vmatprep.subr.mxu0 0.0
    %349 = vmatpush2.msra.mxu0 0.0
    %350 = vmatprep.subr.mxu0 0.0
    %351 = vmatpush2.msra.mxu0 0.0
    %352 = vmatprep.subr.mxu0 0.0
    %353 = vmatpush2.msra.mxu0 0.0
    %354 = vmatprep.subr.mxu0 0.0
    %355 = vmatpush2.msra.mxu0 0.0
    %356 = vmatprep.subr.mxu0 0.0
    %357 = vmatpush2.msra.mxu0 0.0
    %358 = vmatprep.subr.mxu0 0.0
    %359 = vmatpush2.msra.mxu0 0.0
    %360 = vmatprep.subr.mxu0 0.0
    %361 = vmatpush2.msra.mxu0 0.0
    %362 = vmatprep.subr.mxu0 0.0
    %363 = vmatpush2.msra.mxu0 0.0
    %364 = vmatprep.subr.mxu0 0.0
    %365 = vmatpush2.msra.mxu0 0.0
    %366 = vmatprep.subr.mxu0 0.0
    %367 = vmatpush2.msra.mxu0 0.0
    %368 = vmatprep.subr.mxu0 0.0
    %369 = vmatpush2.msra.mxu0 0.0
    %370 = vmatprep.mubr.f32.mxu0 0.0
    %371 = vmatmul.mubr.f32.gmra.mxu0 %v121
    %v372 = vpop.f32.mrf.mxu0
    %v373 = vadd.f32 %v302, %v372
    %v374 = vpop.f32.mrf.mxu0
    %375 = vmatprep.mubr.f32.mxu0 0.0
    %376 = vmatmul.mubr.f32.gmra.mxu0 %v124
    %v377 = vpop.f32.mrf.mxu0
    %v378 = vadd.f32 %v302, %v377
    %v379 = vpop.f32.mrf.mxu0
    %380 = vdwg.mxu0
    %383 = vrot.lane.b32.xlu0 %v197, 112
    %v384 = vpop.permute.xlu0 %383
    %385 = vrot.lane.b32.xlu0 %v202, 112
    %v386 = vpop.permute.xlu0 %385
    %387 = vrot.lane.b32.xlu0 %v197, 96
    %v388 = vpop.permute.xlu0 %387
    %389 = vrot.lane.b32.xlu0 %v202, 96
    %v390 = vpop.permute.xlu0 %389
    %391 = vrot.lane.b32.xlu0 %v197, 80
    %v392 = vpop.permute.xlu0 %391
    %393 = vrot.lane.b32.xlu0 %v202, 80
    %v394 = vpop.permute.xlu0 %393
    %395 = vrot.lane.b32.xlu0 %v197, 64
    %v396 = vpop.permute.xlu0 %395
    %397 = vrot.lane.b32.xlu0 %v202, 64
    %v398 = vpop.permute.xlu0 %397
    %401 = vrot.lane.b32.xlu0 %v285, 112
    %v402 = vpop.permute.xlu0 %401
    %403 = vrot.lane.b32.xlu0 %v290, 112
    %v404 = vpop.permute.xlu0 %403
    %405 = vrot.lane.b32.xlu0 %v285, 96
    %v406 = vpop.permute.xlu0 %405
    %407 = vrot.lane.b32.xlu0 %v290, 96
    %v408 = vpop.permute.xlu0 %407
    %409 = vrot.lane.b32.xlu0 %v285, 80
    %v410 = vpop.permute.xlu0 %409
    %411 = vrot.lane.b32.xlu0 %v290, 80
    %v412 = vpop.permute.xlu0 %411
    %413 = vrot.lane.b32.xlu0 %v285, 64
    %v414 = vpop.permute.xlu0 %413
    %415 = vrot.lane.b32.xlu0 %v290, 64
    %v416 = vpop.permute.xlu0 %415
    %419 = vrot.lane.b32.xlu0 %v373, 112
    %v420 = vpop.permute.xlu0 %419
    %421 = vrot.lane.b32.xlu0 %v378, 112
    %v422 = vpop.permute.xlu0 %421
    %425 = vrot.lane.b32.xlu0 %v373, 96
    %v426 = vpop.permute.xlu0 %425
    %427 = vrot.lane.b32.xlu0 %v378, 96
    %v428 = vpop.permute.xlu0 %427
    %431 = vrot.lane.b32.xlu0 %v373, 80
    %v432 = vpop.permute.xlu0 %431
    %433 = vrot.lane.b32.xlu0 %v378, 80
    %v434 = vpop.permute.xlu0 %433
    %437 = vrot.lane.b32.xlu0 %v373, 64
    %v438 = vpop.permute.xlu0 %437
    %439 = vrot.lane.b32.xlu0 %v378, 64
    %v440 = vpop.permute.xlu0 %439
    %vm443 = vcmask 130048
    %v444 = vsel %vm443, %v197, 0
    %v446 = vsel %vm443, %v285, 0
    %448 = vmatprep.subr.mxu0 0.0
    %449 = vmatpush1.xpose.msra.mxu0 0.0
    %450 = vmatprep.subr.mxu0 0.0
    %451 = vmatpush1.xpose.msra.mxu0 0.0
    %452 = vmatprep.subr.mxu0 0.0
    %453 = vmatpush1.xpose.msra.mxu0 0.0
    %454 = vmatprep.subr.mxu0 0.0
    %455 = vmatpush1.xpose.msra.mxu0 0.0
    %456 = vmatprep.subr.mxu0 0.0
    %457 = vmatpush1.xpose.msra.mxu0 0.0
    %458 = vmatprep.subr.mxu0 0.0
    %459 = vmatpush1.xpose.msra.mxu0 0.0
    %460 = vmatprep.subr.mxu0 0.0
    %461 = vmatpush1.xpose.msra.mxu0 0.0
    %462 = vmatprep.subr.mxu0 0.0
    %463 = vmatpush1.xpose.msra.mxu0 0.0
    %464 = vmatprep.subr.mxu0 0.0
    %465 = vmatpush1.xpose.msra.mxu0 0.0
    %466 = vmatprep.subr.mxu0 0.0
    %467 = vmatpush1.xpose.msra.mxu0 0.0
    %468 = vmatprep.subr.mxu0 0.0
    %469 = vmatpush1.xpose.msra.mxu0 0.0
    %470 = vmatprep.subr.mxu0 0.0
    %471 = vmatpush1.xpose.msra.mxu0 0.0
    %472 = vmatprep.subr.mxu0 0.0
    %473 = vmatpush1.xpose.msra.mxu0 0.0
    %474 = vmatprep.subr.mxu0 0.0
    %475 = vmatpush1.xpose.msra.mxu0 0.0
    %476 = vmatprep.subr.mxu0 0.0
    %477 = vmatpush1.xpose.msra.mxu0 0.0
    %478 = vmatprep.subr.mxu0 0.0
    %479 = vmatpush1.xpose.msra.mxu0 %v446
    %480 = vmatprep.subr.mxu0 0.0
    %481 = vmatpush2.xpose.msra.mxu0 0.0
    %482 = vmatprep.subr.mxu0 0.0
    %483 = vmatpush2.xpose.msra.mxu0 0.0
    %484 = vmatprep.subr.mxu0 0.0
    %485 = vmatpush2.xpose.msra.mxu0 0.0
    %486 = vmatprep.subr.mxu0 0.0
    %487 = vmatpush2.xpose.msra.mxu0 0.0
    %488 = vmatprep.subr.mxu0 0.0
    %489 = vmatpush2.xpose.msra.mxu0 0.0
    %490 = vmatprep.subr.mxu0 0.0
    %491 = vmatpush2.xpose.msra.mxu0 0.0
    %492 = vmatprep.subr.mxu0 0.0
    %493 = vmatpush2.xpose.msra.mxu0 0.0
    %494 = vmatprep.subr.mxu0 0.0
    %495 = vmatpush2.xpose.msra.mxu0 0.0
    %496 = vmatprep.subr.mxu0 0.0
    %497 = vmatpush2.xpose.msra.mxu0 0.0
    %498 = vmatprep.subr.mxu0 0.0
    %499 = vmatpush2.xpose.msra.mxu0 0.0
    %500 = vmatprep.subr.mxu0 0.0
    %501 = vmatpush2.xpose.msra.mxu0 0.0
    %502 = vmatprep.subr.mxu0 0.0
    %503 = vmatpush2.xpose.msra.mxu0 0.0
    %504 = vmatprep.subr.mxu0 0.0
    %505 = vmatpush2.xpose.msra.mxu0 0.0
    %506 = vmatprep.subr.mxu0 0.0
    %507 = vmatpush2.xpose.msra.mxu0 0.0
    %508 = vmatprep.subr.mxu0 0.0
    %509 = vmatpush2.xpose.msra.mxu0 0.0
    %510 = vmatprep.subr.mxu0 0.0
    %511 = vmatpush2.xpose.msra.mxu0 0.0
    %512 = vmatprep.mubr.f32.mxu0 0.0
    %513 = vmatmul.mubr.f32.gmra.mxu0 %v444
    %v514 = vpop.f32.mrf.mxu0
    %v515 = vadd.f32 0.0, %v514
    %v516 = vpop.f32.mrf.mxu0
    %517 = vdwg.mxu0
    %v518 = vsel %vm443, %v202, 0
    %v520 = vsel %vm443, %v290, 0
    %522 = vmatprep.subr.mxu0 0.0
    %523 = vmatpush1.xpose.msra.mxu0 0.0
    %524 = vmatprep.subr.mxu0 0.0
    %525 = vmatpush1.xpose.msra.mxu0 0.0
    %526 = vmatprep.subr.mxu0 0.0
    %527 = vmatpush1.xpose.msra.mxu0 0.0
    %528 = vmatprep.subr.mxu0 0.0
    %529 = vmatpush1.xpose.msra.mxu0 0.0
    %530 = vmatprep.subr.mxu0 0.0
    %531 = vmatpush1.xpose.msra.mxu0 0.0
    %532 = vmatprep.subr.mxu0 0.0
    %533 = vmatpush1.xpose.msra.mxu0 0.0
    %534 = vmatprep.subr.mxu0 0.0
    %535 = vmatpush1.xpose.msra.mxu0 0.0
    %536 = vmatprep.subr.mxu0 0.0
    %537 = vmatpush1.xpose.msra.mxu0 0.0
    %538 = vmatprep.subr.mxu0 0.0
    %539 = vmatpush1.xpose.msra.mxu0 0.0
    %540 = vmatprep.subr.mxu0 0.0
    %541 = vmatpush1.xpose.msra.mxu0 0.0
    %542 = vmatprep.subr.mxu0 0.0
    %543 = vmatpush1.xpose.msra.mxu0 0.0
    %544 = vmatprep.subr.mxu0 0.0
    %545 = vmatpush1.xpose.msra.mxu0 0.0
    %546 = vmatprep.subr.mxu0 0.0
    %547 = vmatpush1.xpose.msra.mxu0 0.0
    %548 = vmatprep.subr.mxu0 0.0
    %549 = vmatpush1.xpose.msra.mxu0 0.0
    %550 = vmatprep.subr.mxu0 0.0
    %551 = vmatpush1.xpose.msra.mxu0 0.0
    %552 = vmatprep.subr.mxu0 0.0
    %553 = vmatpush1.xpose.msra.mxu0 %v520
    %554 = vmatprep.subr.mxu0 0.0
    %555 = vmatpush2.xpose.msra.mxu0 0.0
    %556 = vmatprep.subr.mxu0 0.0
    %557 = vmatpush2.xpose.msra.mxu0 0.0
    %558 = vmatprep.subr.mxu0 0.0
    %559 = vmatpush2.xpose.msra.mxu0 0.0
    %560 = vmatprep.subr.mxu0 0.0
    %561 = vmatpush2.xpose.msra.mxu0 0.0
    %562 = vmatprep.subr.mxu0 0.0
    %563 = vmatpush2.xpose.msra.mxu0 0.0
    %564 = vmatprep.subr.mxu0 0.0
    %565 = vmatpush2.xpose.msra.mxu0 0.0
    %566 = vmatprep.subr.mxu0 0.0
    %567 = vmatpush2.xpose.msra.mxu0 0.0
    %568 = vmatprep.subr.mxu0 0.0
    %569 = vmatpush2.xpose.msra.mxu0 0.0
    %570 = vmatprep.subr.mxu0 0.0
    %571 = vmatpush2.xpose.msra.mxu0 0.0
    %572 = vmatprep.subr.mxu0 0.0
    %573 = vmatpush2.xpose.msra.mxu0 0.0
    %574 = vmatprep.subr.mxu0 0.0
    %575 = vmatpush2.xpose.msra.mxu0 0.0
    %576 = vmatprep.subr.mxu0 0.0
    %577 = vmatpush2.xpose.msra.mxu0 0.0
    %578 = vmatprep.subr.mxu0 0.0
    %579 = vmatpush2.xpose.msra.mxu0 0.0
    %580 = vmatprep.subr.mxu0 0.0
    %581 = vmatpush2.xpose.msra.mxu0 0.0
    %582 = vmatprep.subr.mxu0 0.0
    %583 = vmatpush2.xpose.msra.mxu0 0.0
    %584 = vmatprep.subr.mxu0 0.0
    %585 = vmatpush2.xpose.msra.mxu0 0.0
    %586 = vmatprep.mubr.f32.mxu0 0.0
    %587 = vmatmul.mubr.f32.gmra.mxu0 %v518
    %v588 = vpop.f32.mrf.mxu0
    %v589 = vadd.f32 0.0, %v588
    %v590 = vpop.f32.mrf.mxu0
    %591 = vdwg.mxu0
    %v592 = vsel %vm443, %v384, 0
    %v594 = vsel %vm443, %v402, 0
    %596 = vmatprep.subr.mxu0 0.0
    %597 = vmatpush1.xpose.msra.mxu0 0.0
    %598 = vmatprep.subr.mxu0 0.0
    %599 = vmatpush1.xpose.msra.mxu0 0.0
    %600 = vmatprep.subr.mxu0 0.0
    %601 = vmatpush1.xpose.msra.mxu0 0.0
    %602 = vmatprep.subr.mxu0 0.0
    %603 = vmatpush1.xpose.msra.mxu0 0.0
    %604 = vmatprep.subr.mxu0 0.0
    %605 = vmatpush1.xpose.msra.mxu0 0.0
    %606 = vmatprep.subr.mxu0 0.0
    %607 = vmatpush1.xpose.msra.mxu0 0.0
    %608 = vmatprep.subr.mxu0 0.0
    %609 = vmatpush1.xpose.msra.mxu0 0.0
    %610 = vmatprep.subr.mxu0 0.0
    %611 = vmatpush1.xpose.msra.mxu0 0.0
    %612 = vmatprep.subr.mxu0 0.0
    %613 = vmatpush1.xpose.msra.mxu0 0.0
    %614 = vmatprep.subr.mxu0 0.0
    %615 = vmatpush1.xpose.msra.mxu0 0.0
    %616 = vmatprep.subr.mxu0 0.0
    %617 = vmatpush1.xpose.msra.mxu0 0.0
    %618 = vmatprep.subr.mxu0 0.0
    %619 = vmatpush1.xpose.msra.mxu0 0.0
    %620 = vmatprep.subr.mxu0 0.0
    %621 = vmatpush1.xpose.msra.mxu0 0.0
    %622 = vmatprep.subr.mxu0 0.0
    %623 = vmatpush1.xpose.msra.mxu0 0.0
    %624 = vmatprep.subr.mxu0 0.0
    %625 = vmatpush1.xpose.msra.mxu0 0.0
    %626 = vmatprep.subr.mxu0 0.0
    %627 = vmatpush1.xpose.msra.mxu0 %v594
    %628 = vmatprep.subr.mxu0 0.0
    %629 = vmatpush2.xpose.msra.mxu0 0.0
    %630 = vmatprep.subr.mxu0 0.0
    %631 = vmatpush2.xpose.msra.mxu0 0.0
    %632 = vmatprep.subr.mxu0 0.0
    %633 = vmatpush2.xpose.msra.mxu0 0.0
    %634 = vmatprep.subr.mxu0 0.0
    %635 = vmatpush2.xpose.msra.mxu0 0.0
    %636 = vmatprep.subr.mxu0 0.0
    %637 = vmatpush2.xpose.msra.mxu0 0.0
    %638 = vmatprep.subr.mxu0 0.0
    %639 = vmatpush2.xpose.msra.mxu0 0.0
    %640 = vmatprep.subr.mxu0 0.0
    %641 = vmatpush2.xpose.msra.mxu0 0.0
    %642 = vmatprep.subr.mxu0 0.0
    %643 = vmatpush2.xpose.msra.mxu0 0.0
    %644 = vmatprep.subr.mxu0 0.0
    %645 = vmatpush2.xpose.msra.mxu0 0.0
    %646 = vmatprep.subr.mxu0 0.0
    %647 = vmatpush2.xpose.msra.mxu0 0.0
    %648 = vmatprep.subr.mxu0 0.0
    %649 = vmatpush2.xpose.msra.mxu0 0.0
    %650 = vmatprep.subr.mxu0 0.0
    %651 = vmatpush2.xpose.msra.mxu0 0.0
    %652 = vmatprep.subr.mxu0 0.0
    %653 = vmatpush2.xpose.msra.mxu0 0.0
    %654 = vmatprep.subr.mxu0 0.0
    %655 = vmatpush2.xpose.msra.mxu0 0.0
    %656 = vmatprep.subr.mxu0 0.0
    %657 = vmatpush2.xpose.msra.mxu0 0.0
    %658 = vmatprep.subr.mxu0 0.0
    %659 = vmatpush2.xpose.msra.mxu0 0.0
    %660 = vmatprep.mubr.f32.mxu0 0.0
    %661 = vmatmul.mubr.f32.gmra.mxu0 %v592
    %v662 = vpop.f32.mrf.mxu0
    %v663 = vadd.f32 0.0, %v662
    %v664 = vpop.f32.mrf.mxu0
    %665 = vdwg.mxu0
    %v666 = vsel %vm443, %v386, 0
    %v668 = vsel %vm443, %v404, 0
    %670 = vmatprep.subr.mxu0 0.0
    %671 = vmatpush1.xpose.msra.mxu0 0.0
    %672 = vmatprep.subr.mxu0 0.0
    %673 = vmatpush1.xpose.msra.mxu0 0.0
    %674 = vmatprep.subr.mxu0 0.0
    %675 = vmatpush1.xpose.msra.mxu0 0.0
    %676 = vmatprep.subr.mxu0 0.0
    %677 = vmatpush1.xpose.msra.mxu0 0.0
    %678 = vmatprep.subr.mxu0 0.0
    %679 = vmatpush1.xpose.msra.mxu0 0.0
    %680 = vmatprep.subr.mxu0 0.0
    %681 = vmatpush1.xpose.msra.mxu0 0.0
    %682 = vmatprep.subr.mxu0 0.0
    %683 = vmatpush1.xpose.msra.mxu0 0.0
    %684 = vmatprep.subr.mxu0 0.0
    %685 = vmatpush1.xpose.msra.mxu0 0.0
    %686 = vmatprep.subr.mxu0 0.0
    %687 = vmatpush1.xpose.msra.mxu0 0.0
    %688 = vmatprep.subr.mxu0 0.0
    %689 = vmatpush1.xpose.msra.mxu0 0.0
    %690 = vmatprep.subr.mxu0 0.0
    %691 = vmatpush1.xpose.msra.mxu0 0.0
    %692 = vmatprep.subr.mxu0 0.0
    %693 = vmatpush1.xpose.msra.mxu0 0.0
    %694 = vmatprep.subr.mxu0 0.0
    %695 = vmatpush1.xpose.msra.mxu0 0.0
    %696 = vmatprep.subr.mxu0 0.0
    %697 = vmatpush1.xpose.msra.mxu0 0.0
    %698 = vmatprep.subr.mxu0 0.0
    %699 = vmatpush1.xpose.msra.mxu0 0.0
    %700 = vmatprep.subr.mxu0 0.0
    %701 = vmatpush1.xpose.msra.mxu0 %v668
    %702 = vmatprep.subr.mxu0 0.0
    %703 = vmatpush2.xpose.msra.mxu0 0.0
    %704 = vmatprep.subr.mxu0 0.0
    %705 = vmatpush2.xpose.msra.mxu0 0.0
    %706 = vmatprep.subr.mxu0 0.0
    %707 = vmatpush2.xpose.msra.mxu0 0.0
    %708 = vmatprep.subr.mxu0 0.0
    %709 = vmatpush2.xpose.msra.mxu0 0.0
    %710 = vmatprep.subr.mxu0 0.0
    %711 = vmatpush2.xpose.msra.mxu0 0.0
    %712 = vmatprep.subr.mxu0 0.0
    %713 = vmatpush2.xpose.msra.mxu0 0.0
    %714 = vmatprep.subr.mxu0 0.0
    %715 = vmatpush2.xpose.msra.mxu0 0.0
    %716 = vmatprep.subr.mxu0 0.0
    %717 = vmatpush2.xpose.msra.mxu0 0.0
    %718 = vmatprep.subr.mxu0 0.0
    %719 = vmatpush2.xpose.msra.mxu0 0.0
    %720 = vmatprep.subr.mxu0 0.0
    %721 = vmatpush2.xpose.msra.mxu0 0.0
    %722 = vmatprep.subr.mxu0 0.0
    %723 = vmatpush2.xpose.msra.mxu0 0.0
    %724 = vmatprep.subr.mxu0 0.0
    %725 = vmatpush2.xpose.msra.mxu0 0.0
    %726 = vmatprep.subr.mxu0 0.0
    %727 = vmatpush2.xpose.msra.mxu0 0.0
    %728 = vmatprep.subr.mxu0 0.0
    %729 = vmatpush2.xpose.msra.mxu0 0.0
    %730 = vmatprep.subr.mxu0 0.0
    %731 = vmatpush2.xpose.msra.mxu0 0.0
    %732 = vmatprep.subr.mxu0 0.0
    %733 = vmatpush2.xpose.msra.mxu0 0.0
    %734 = vmatprep.mubr.f32.mxu0 0.0
    %735 = vmatmul.mubr.f32.gmra.mxu0 %v666
    %v736 = vpop.f32.mrf.mxu0
    %v737 = vadd.f32 0.0, %v736
    %v738 = vpop.f32.mrf.mxu0
    %739 = vdwg.mxu0
    %v740 = vsel %vm443, %v388, 0
    %v742 = vsel %vm443, %v406, 0
    %744 = vmatprep.subr.mxu0 0.0
    %745 = vmatpush1.xpose.msra.mxu0 0.0
    %746 = vmatprep.subr.mxu0 0.0
    %747 = vmatpush1.xpose.msra.mxu0 0.0
    %748 = vmatprep.subr.mxu0 0.0
    %749 = vmatpush1.xpose.msra.mxu0 0.0
    %750 = vmatprep.subr.mxu0 0.0
    %751 = vmatpush1.xpose.msra.mxu0 0.0
    %752 = vmatprep.subr.mxu0 0.0
    %753 = vmatpush1.xpose.msra.mxu0 0.0
    %754 = vmatprep.subr.mxu0 0.0
    %755 = vmatpush1.xpose.msra.mxu0 0.0
    %756 = vmatprep.subr.mxu0 0.0
    %757 = vmatpush1.xpose.msra.mxu0 0.0
    %758 = vmatprep.subr.mxu0 0.0
    %759 = vmatpush1.xpose.msra.mxu0 0.0
    %760 = vmatprep.subr.mxu0 0.0
    %761 = vmatpush1.xpose.msra.mxu0 0.0
    %762 = vmatprep.subr.mxu0 0.0
    %763 = vmatpush1.xpose.msra.mxu0 0.0
    %764 = vmatprep.subr.mxu0 0.0
    %765 = vmatpush1.xpose.msra.mxu0 0.0
    %766 = vmatprep.subr.mxu0 0.0
    %767 = vmatpush1.xpose.msra.mxu0 0.0
    %768 = vmatprep.subr.mxu0 0.0
    %769 = vmatpush1.xpose.msra.mxu0 0.0
    %770 = vmatprep.subr.mxu0 0.0
    %771 = vmatpush1.xpose.msra.mxu0 0.0
    %772 = vmatprep.subr.mxu0 0.0
    %773 = vmatpush1.xpose.msra.mxu0 0.0
    %774 = vmatprep.subr.mxu0 0.0
    %775 = vmatpush1.xpose.msra.mxu0 %v742
    %776 = vmatprep.subr.mxu0 0.0
    %777 = vmatpush2.xpose.msra.mxu0 0.0
    %778 = vmatprep.subr.mxu0 0.0
    %779 = vmatpush2.xpose.msra.mxu0 0.0
    %780 = vmatprep.subr.mxu0 0.0
    %781 = vmatpush2.xpose.msra.mxu0 0.0
    %782 = vmatprep.subr.mxu0 0.0
    %783 = vmatpush2.xpose.msra.mxu0 0.0
    %784 = vmatprep.subr.mxu0 0.0
    %785 = vmatpush2.xpose.msra.mxu0 0.0
    %786 = vmatprep.subr.mxu0 0.0
    %787 = vmatpush2.xpose.msra.mxu0 0.0
    %788 = vmatprep.subr.mxu0 0.0
    %789 = vmatpush2.xpose.msra.mxu0 0.0
    %790 = vmatprep.subr.mxu0 0.0
    %791 = vmatpush2.xpose.msra.mxu0 0.0
    %792 = vmatprep.subr.mxu0 0.0
    %793 = vmatpush2.xpose.msra.mxu0 0.0
    %794 = vmatprep.subr.mxu0 0.0
    %795 = vmatpush2.xpose.msra.mxu0 0.0
    %796 = vmatprep.subr.mxu0 0.0
    %797 = vmatpush2.xpose.msra.mxu0 0.0
    %798 = vmatprep.subr.mxu0 0.0
    %799 = vmatpush2.xpose.msra.mxu0 0.0
    %800 = vmatprep.subr.mxu0 0.0
    %801 = vmatpush2.xpose.msra.mxu0 0.0
    %802 = vmatprep.subr.mxu0 0.0
    %803 = vmatpush2.xpose.msra.mxu0 0.0
    %804 = vmatprep.subr.mxu0 0.0
    %805 = vmatpush2.xpose.msra.mxu0 0.0
    %806 = vmatprep.subr.mxu0 0.0
    %807 = vmatpush2.xpose.msra.mxu0 0.0
    %808 = vmatprep.mubr.f32.mxu0 0.0
    %809 = vmatmul.mubr.f32.gmra.mxu0 %v740
    %v810 = vpop.f32.mrf.mxu0
    %v811 = vadd.f32 0.0, %v810
    %v812 = vpop.f32.mrf.mxu0
    %813 = vdwg.mxu0
    %v814 = vsel %vm443, %v390, 0
    %v816 = vsel %vm443, %v408, 0
    %818 = vmatprep.subr.mxu0 0.0
    %819 = vmatpush1.xpose.msra.mxu0 0.0
    %820 = vmatprep.subr.mxu0 0.0
    %821 = vmatpush1.xpose.msra.mxu0 0.0
    %822 = vmatprep.subr.mxu0 0.0
    %823 = vmatpush1.xpose.msra.mxu0 0.0
    %824 = vmatprep.subr.mxu0 0.0
    %825 = vmatpush1.xpose.msra.mxu0 0.0
    %826 = vmatprep.subr.mxu0 0.0
    %827 = vmatpush1.xpose.msra.mxu0 0.0
    %828 = vmatprep.subr.mxu0 0.0
    %829 = vmatpush1.xpose.msra.mxu0 0.0
    %830 = vmatprep.subr.mxu0 0.0
    %831 = vmatpush1.xpose.msra.mxu0 0.0
    %832 = vmatprep.subr.mxu0 0.0
    %833 = vmatpush1.xpose.msra.mxu0 0.0
    %834 = vmatprep.subr.mxu0 0.0
    %835 = vmatpush1.xpose.msra.mxu0 0.0
    %836 = vmatprep.subr.mxu0 0.0
    %837 = vmatpush1.xpose.msra.mxu0 0.0
    %838 = vmatprep.subr.mxu0 0.0
    %839 = vmatpush1.xpose.msra.mxu0 0.0
    %840 = vmatprep.subr.mxu0 0.0
    %841 = vmatpush1.xpose.msra.mxu0 0.0
    %842 = vmatprep.subr.mxu0 0.0
    %843 = vmatpush1.xpose.msra.mxu0 0.0
    %844 = vmatprep.subr.mxu0 0.0
    %845 = vmatpush1.xpose.msra.mxu0 0.0
    %846 = vmatprep.subr.mxu0 0.0
    %847 = vmatpush1.xpose.msra.mxu0 0.0
    %848 = vmatprep.subr.mxu0 0.0
    %849 = vmatpush1.xpose.msra.mxu0 %v816
    %850 = vmatprep.subr.mxu0 0.0
    %851 = vmatpush2.xpose.msra.mxu0 0.0
    %852 = vmatprep.subr.mxu0 0.0
    %853 = vmatpush2.xpose.msra.mxu0 0.0
    %854 = vmatprep.subr.mxu0 0.0
    %855 = vmatpush2.xpose.msra.mxu0 0.0
    %856 = vmatprep.subr.mxu0 0.0
    %857 = vmatpush2.xpose.msra.mxu0 0.0
    %858 = vmatprep.subr.mxu0 0.0
    %859 = vmatpush2.xpose.msra.mxu0 0.0
    %860 = vmatprep.subr.mxu0 0.0
    %861 = vmatpush2.xpose.msra.mxu0 0.0
    %862 = vmatprep.subr.mxu0 0.0
    %863 = vmatpush2.xpose.msra.mxu0 0.0
    %864 = vmatprep.subr.mxu0 0.0
    %865 = vmatpush2.xpose.msra.mxu0 0.0
    %866 = vmatprep.subr.mxu0 0.0
    %867 = vmatpush2.xpose.msra.mxu0 0.0
    %868 = vmatprep.subr.mxu0 0.0
    %869 = vmatpush2.xpose.msra.mxu0 0.0
    %870 = vmatprep.subr.mxu0 0.0
    %871 = vmatpush2.xpose.msra.mxu0 0.0
    %872 = vmatprep.subr.mxu0 0.0
    %873 = vmatpush2.xpose.msra.mxu0 0.0
    %874 = vmatprep.subr.mxu0 0.0
    %875 = vmatpush2.xpose.msra.mxu0 0.0
    %876 = vmatprep.subr.mxu0 0.0
    %877 = vmatpush2.xpose.msra.mxu0 0.0
    %878 = vmatprep.subr.mxu0 0.0
    %879 = vmatpush2.xpose.msra.mxu0 0.0
    %880 = vmatprep.subr.mxu0 0.0
    %881 = vmatpush2.xpose.msra.mxu0 0.0
    %882 = vmatprep.mubr.f32.mxu0 0.0
    %883 = vmatmul.mubr.f32.gmra.mxu0 %v814
    %v884 = vpop.f32.mrf.mxu0
    %v885 = vadd.f32 0.0, %v884
    %v886 = vpop.f32.mrf.mxu0
    %887 = vdwg.mxu0
    %v888 = vsel %vm443, %v392, 0
    %v890 = vsel %vm443, %v410, 0
    %892 = vmatprep.subr.mxu0 0.0
    %893 = vmatpush1.xpose.msra.mxu0 0.0
    %894 = vmatprep.subr.mxu0 0.0
    %895 = vmatpush1.xpose.msra.mxu0 0.0
    %896 = vmatprep.subr.mxu0 0.0
    %897 = vmatpush1.xpose.msra.mxu0 0.0
    %898 = vmatprep.subr.mxu0 0.0
    %899 = vmatpush1.xpose.msra.mxu0 0.0
    %900 = vmatprep.subr.mxu0 0.0
    %901 = vmatpush1.xpose.msra.mxu0 0.0
    %902 = vmatprep.subr.mxu0 0.0
    %903 = vmatpush1.xpose.msra.mxu0 0.0
    %904 = vmatprep.subr.mxu0 0.0
    %905 = vmatpush1.xpose.msra.mxu0 0.0
    %906 = vmatprep.subr.mxu0 0.0
    %907 = vmatpush1.xpose.msra.mxu0 0.0
    %908 = vmatprep.subr.mxu0 0.0
    %909 = vmatpush1.xpose.msra.mxu0 0.0
    %910 = vmatprep.subr.mxu0 0.0
    %911 = vmatpush1.xpose.msra.mxu0 0.0
    %912 = vmatprep.subr.mxu0 0.0
    %913 = vmatpush1.xpose.msra.mxu0 0.0
    %914 = vmatprep.subr.mxu0 0.0
    %915 = vmatpush1.xpose.msra.mxu0 0.0
    %916 = vmatprep.subr.mxu0 0.0
    %917 = vmatpush1.xpose.msra.mxu0 0.0
    %918 = vmatprep.subr.mxu0 0.0
    %919 = vmatpush1.xpose.msra.mxu0 0.0
    %920 = vmatprep.subr.mxu0 0.0
    %921 = vmatpush1.xpose.msra.mxu0 0.0
    %922 = vmatprep.subr.mxu0 0.0
    %923 = vmatpush1.xpose.msra.mxu0 %v890
    %924 = vmatprep.subr.mxu0 0.0
    %925 = vmatpush2.xpose.msra.mxu0 0.0
    %926 = vmatprep.subr.mxu0 0.0
    %927 = vmatpush2.xpose.msra.mxu0 0.0
    %928 = vmatprep.subr.mxu0 0.0
    %929 = vmatpush2.xpose.msra.mxu0 0.0
    %930 = vmatprep.subr.mxu0 0.0
    %931 = vmatpush2.xpose.msra.mxu0 0.0
    %932 = vmatprep.subr.mxu0 0.0
    %933 = vmatpush2.xpose.msra.mxu0 0.0
    %934 = vmatprep.subr.mxu0 0.0
    %935 = vmatpush2.xpose.msra.mxu0 0.0
    %936 = vmatprep.subr.mxu0 0.0
    %937 = vmatpush2.xpose.msra.mxu0 0.0
    %938 = vmatprep.subr.mxu0 0.0
    %939 = vmatpush2.xpose.msra.mxu0 0.0
    %940 = vmatprep.subr.mxu0 0.0
    %941 = vmatpush2.xpose.msra.mxu0 0.0
    %942 = vmatprep.subr.mxu0 0.0
    %943 = vmatpush2.xpose.msra.mxu0 0.0
    %944 = vmatprep.subr.mxu0 0.0
    %945 = vmatpush2.xpose.msra.mxu0 0.0
    %946 = vmatprep.subr.mxu0 0.0
    %947 = vmatpush2.xpose.msra.mxu0 0.0
    %948 = vmatprep.subr.mxu0 0.0
    %949 = vmatpush2.xpose.msra.mxu0 0.0
    %950 = vmatprep.subr.mxu0 0.0
    %951 = vmatpush2.xpose.msra.mxu0 0.0
    %952 = vmatprep.subr.mxu0 0.0
    %953 = vmatpush2.xpose.msra.mxu0 0.0
    %954 = vmatprep.subr.mxu0 0.0
    %955 = vmatpush2.xpose.msra.mxu0 0.0
    %956 = vmatprep.mubr.f32.mxu0 0.0
    %957 = vmatmul.mubr.f32.gmra.mxu0 %v888
    %v958 = vpop.f32.mrf.mxu0
    %v959 = vadd.f32 0.0, %v958
    %v960 = vpop.f32.mrf.mxu0
    %961 = vdwg.mxu0
    %v962 = vsel %vm443, %v394, 0
    %v964 = vsel %vm443, %v412, 0
    %966 = vmatprep.subr.mxu0 0.0
    %967 = vmatpush1.xpose.msra.mxu0 0.0
    %968 = vmatprep.subr.mxu0 0.0
    %969 = vmatpush1.xpose.msra.mxu0 0.0
    %970 = vmatprep.subr.mxu0 0.0
    %971 = vmatpush1.xpose.msra.mxu0 0.0
    %972 = vmatprep.subr.mxu0 0.0
    %973 = vmatpush1.xpose.msra.mxu0 0.0
    %974 = vmatprep.subr.mxu0 0.0
    %975 = vmatpush1.xpose.msra.mxu0 0.0
    %976 = vmatprep.subr.mxu0 0.0
    %977 = vmatpush1.xpose.msra.mxu0 0.0
    %978 = vmatprep.subr.mxu0 0.0
    %979 = vmatpush1.xpose.msra.mxu0 0.0
    %980 = vmatprep.subr.mxu0 0.0
    %981 = vmatpush1.xpose.msra.mxu0 0.0
    %982 = vmatprep.subr.mxu0 0.0
    %983 = vmatpush1.xpose.msra.mxu0 0.0
    %984 = vmatprep.subr.mxu0 0.0
    %985 = vmatpush1.xpose.msra.mxu0 0.0
    %986 = vmatprep.subr.mxu0 0.0
    %987 = vmatpush1.xpose.msra.mxu0 0.0
    %988 = vmatprep.subr.mxu0 0.0
    %989 = vmatpush1.xpose.msra.mxu0 0.0
    %990 = vmatprep.subr.mxu0 0.0
    %991 = vmatpush1.xpose.msra.mxu0 0.0
    %992 = vmatprep.subr.mxu0 0.0
    %993 = vmatpush1.xpose.msra.mxu0 0.0
    %994 = vmatprep.subr.mxu0 0.0
    %995 = vmatpush1.xpose.msra.mxu0 0.0
    %996 = vmatprep.subr.mxu0 0.0
    %997 = vmatpush1.xpose.msra.mxu0 %v964
    %998 = vmatprep.subr.mxu0 0.0
    %999 = vmatpush2.xpose.msra.mxu0 0.0
    %1000 = vmatprep.subr.mxu0 0.0
    %1001 = vmatpush2.xpose.msra.mxu0 0.0
    %1002 = vmatprep.subr.mxu0 0.0
    %1003 = vmatpush2.xpose.msra.mxu0 0.0
    %1004 = vmatprep.subr.mxu0 0.0
    %1005 = vmatpush2.xpose.msra.mxu0 0.0
    %1006 = vmatprep.subr.mxu0 0.0
    %1007 = vmatpush2.xpose.msra.mxu0 0.0
    %1008 = vmatprep.subr.mxu0 0.0
    %1009 = vmatpush2.xpose.msra.mxu0 0.0
    %1010 = vmatprep.subr.mxu0 0.0
    %1011 = vmatpush2.xpose.msra.mxu0 0.0
    %1012 = vmatprep.subr.mxu0 0.0
    %1013 = vmatpush2.xpose.msra.mxu0 0.0
    %1014 = vmatprep.subr.mxu0 0.0
    %1015 = vmatpush2.xpose.msra.mxu0 0.0
    %1016 = vmatprep.subr.mxu0 0.0
    %1017 = vmatpush2.xpose.msra.mxu0 0.0
    %1018 = vmatprep.subr.mxu0 0.0
    %1019 = vmatpush2.xpose.msra.mxu0 0.0
    %1020 = vmatprep.subr.mxu0 0.0
    %1021 = vmatpush2.xpose.msra.mxu0 0.0
    %1022 = vmatprep.subr.mxu0 0.0
    %1023 = vmatpush2.xpose.msra.mxu0 0.0
    %1024 = vmatprep.subr.mxu0 0.0
    %1025 = vmatpush2.xpose.msra.mxu0 0.0
    %1026 = vmatprep.subr.mxu0 0.0
    %1027 = vmatpush2.xpose.msra.mxu0 0.0
    %1028 = vmatprep.subr.mxu0 0.0
    %1029 = vmatpush2.xpose.msra.mxu0 0.0
    %1030 = vmatprep.mubr.f32.mxu0 0.0
    %1031 = vmatmul.mubr.f32.gmra.mxu0 %v962
    %v1032 = vpop.f32.mrf.mxu0
    %v1033 = vadd.f32 0.0, %v1032
    %v1034 = vpop.f32.mrf.mxu0
    %1035 = vdwg.mxu0
    %v1036 = vsel %vm443, %v396, 0
    %v1038 = vsel %vm443, %v414, 0
    %1040 = vmatprep.subr.mxu0 0.0
    %1041 = vmatpush1.xpose.msra.mxu0 0.0
    %1042 = vmatprep.subr.mxu0 0.0
    %1043 = vmatpush1.xpose.msra.mxu0 0.0
    %1044 = vmatprep.subr.mxu0 0.0
    %1045 = vmatpush1.xpose.msra.mxu0 0.0
    %1046 = vmatprep.subr.mxu0 0.0
    %1047 = vmatpush1.xpose.msra.mxu0 0.0
    %1048 = vmatprep.subr.mxu0 0.0
    %1049 = vmatpush1.xpose.msra.mxu0 0.0
    %1050 = vmatprep.subr.mxu0 0.0
    %1051 = vmatpush1.xpose.msra.mxu0 0.0
    %1052 = vmatprep.subr.mxu0 0.0
    %1053 = vmatpush1.xpose.msra.mxu0 0.0
    %1054 = vmatprep.subr.mxu0 0.0
    %1055 = vmatpush1.xpose.msra.mxu0 0.0
    %1056 = vmatprep.subr.mxu0 0.0
    %1057 = vmatpush1.xpose.msra.mxu0 0.0
    %1058 = vmatprep.subr.mxu0 0.0
    %1059 = vmatpush1.xpose.msra.mxu0 0.0
    %1060 = vmatprep.subr.mxu0 0.0
    %1061 = vmatpush1.xpose.msra.mxu0 0.0
    %1062 = vmatprep.subr.mxu0 0.0
    %1063 = vmatpush1.xpose.msra.mxu0 0.0
    %1064 = vmatprep.subr.mxu0 0.0
    %1065 = vmatpush1.xpose.msra.mxu0 0.0
    %1066 = vmatprep.subr.mxu0 0.0
    %1067 = vmatpush1.xpose.msra.mxu0 0.0
    %1068 = vmatprep.subr.mxu0 0.0
    %1069 = vmatpush1.xpose.msra.mxu0 0.0
    %1070 = vmatprep.subr.mxu0 0.0
    %1071 = vmatpush1.xpose.msra.mxu0 %v1038
    %1072 = vmatprep.subr.mxu0 0.0
    %1073 = vmatpush2.xpose.msra.mxu0 0.0
    %1074 = vmatprep.subr.mxu0 0.0
    %1075 = vmatpush2.xpose.msra.mxu0 0.0
    %1076 = vmatprep.subr.mxu0 0.0
    %1077 = vmatpush2.xpose.msra.mxu0 0.0
    %1078 = vmatprep.subr.mxu0 0.0
    %1079 = vmatpush2.xpose.msra.mxu0 0.0
    %1080 = vmatprep.subr.mxu0 0.0
    %1081 = vmatpush2.xpose.msra.mxu0 0.0
    %1082 = vmatprep.subr.mxu0 0.0
    %1083 = vmatpush2.xpose.msra.mxu0 0.0
    %1084 = vmatprep.subr.mxu0 0.0
    %1085 = vmatpush2.xpose.msra.mxu0 0.0
    %1086 = vmatprep.subr.mxu0 0.0
    %1087 = vmatpush2.xpose.msra.mxu0 0.0
    %1088 = vmatprep.subr.mxu0 0.0
    %1089 = vmatpush2.xpose.msra.mxu0 0.0
    %1090 = vmatprep.subr.mxu0 0.0
    %1091 = vmatpush2.xpose.msra.mxu0 0.0
    %1092 = vmatprep.subr.mxu0 0.0
    %1093 = vmatpush2.xpose.msra.mxu0 0.0
    %1094 = vmatprep.subr.mxu0 0.0
    %1095 = vmatpush2.xpose.msra.mxu0 0.0
    %1096 = vmatprep.subr.mxu0 0.0
    %1097 = vmatpush2.xpose.msra.mxu0 0.0
    %1098 = vmatprep.subr.mxu0 0.0
    %1099 = vmatpush2.xpose.msra.mxu0 0.0
    %1100 = vmatprep.subr.mxu0 0.0
    %1101 = vmatpush2.xpose.msra.mxu0 0.0
    %1102 = vmatprep.subr.mxu0 0.0
    %1103 = vmatpush2.xpose.msra.mxu0 0.0
    %1104 = vmatprep.mubr.f32.mxu0 0.0
    %1105 = vmatmul.mubr.f32.gmra.mxu0 %v1036
    %v1106 = vpop.f32.mrf.mxu0
    %v1107 = vadd.f32 0.0, %v1106
    %v1108 = vpop.f32.mrf.mxu0
    %1109 = vdwg.mxu0
    %v1110 = vsel %vm443, %v398, 0
    %v1112 = vsel %vm443, %v416, 0
    %1114 = vmatprep.subr.mxu0 0.0
    %1115 = vmatpush1.xpose.msra.mxu0 0.0
    %1116 = vmatprep.subr.mxu0 0.0
    %1117 = vmatpush1.xpose.msra.mxu0 0.0
    %1118 = vmatprep.subr.mxu0 0.0
    %1119 = vmatpush1.xpose.msra.mxu0 0.0
    %1120 = vmatprep.subr.mxu0 0.0
    %1121 = vmatpush1.xpose.msra.mxu0 0.0
    %1122 = vmatprep.subr.mxu0 0.0
    %1123 = vmatpush1.xpose.msra.mxu0 0.0
    %1124 = vmatprep.subr.mxu0 0.0
    %1125 = vmatpush1.xpose.msra.mxu0 0.0
    %1126 = vmatprep.subr.mxu0 0.0
    %1127 = vmatpush1.xpose.msra.mxu0 0.0
    %1128 = vmatprep.subr.mxu0 0.0
    %1129 = vmatpush1.xpose.msra.mxu0 0.0
    %1130 = vmatprep.subr.mxu0 0.0
    %1131 = vmatpush1.xpose.msra.mxu0 0.0
    %1132 = vmatprep.subr.mxu0 0.0
    %1133 = vmatpush1.xpose.msra.mxu0 0.0
    %1134 = vmatprep.subr.mxu0 0.0
    %1135 = vmatpush1.xpose.msra.mxu0 0.0
    %1136 = vmatprep.subr.mxu0 0.0
    %1137 = vmatpush1.xpose.msra.mxu0 0.0
    %1138 = vmatprep.subr.mxu0 0.0
    %1139 = vmatpush1.xpose.msra.mxu0 0.0
    %1140 = vmatprep.subr.mxu0 0.0
    %1141 = vmatpush1.xpose.msra.mxu0 0.0
    %1142 = vmatprep.subr.mxu0 0.0
    %1143 = vmatpush1.xpose.msra.mxu0 0.0
    %1144 = vmatprep.subr.mxu0 0.0
    %1145 = vmatpush1.xpose.msra.mxu0 %v1112
    %1146 = vmatprep.subr.mxu0 0.0
    %1147 = vmatpush2.xpose.msra.mxu0 0.0
    %1148 = vmatprep.subr.mxu0 0.0
    %1149 = vmatpush2.xpose.msra.mxu0 0.0
    %1150 = vmatprep.subr.mxu0 0.0
    %1151 = vmatpush2.xpose.msra.mxu0 0.0
    %1152 = vmatprep.subr.mxu0 0.0
    %1153 = vmatpush2.xpose.msra.mxu0 0.0
    %1154 = vmatprep.subr.mxu0 0.0
    %1155 = vmatpush2.xpose.msra.mxu0 0.0
    %1156 = vmatprep.subr.mxu0 0.0
    %1157 = vmatpush2.xpose.msra.mxu0 0.0
    %1158 = vmatprep.subr.mxu0 0.0
    %1159 = vmatpush2.xpose.msra.mxu0 0.0
    %1160 = vmatprep.subr.mxu0 0.0
    %1161 = vmatpush2.xpose.msra.mxu0 0.0
    %1162 = vmatprep.subr.mxu0 0.0
    %1163 = vmatpush2.xpose.msra.mxu0 0.0
    %1164 = vmatprep.subr.mxu0 0.0
    %1165 = vmatpush2.xpose.msra.mxu0 0.0
    %1166 = vmatprep.subr.mxu0 0.0
    %1167 = vmatpush2.xpose.msra.mxu0 0.0
    %1168 = vmatprep.subr.mxu0 0.0
    %1169 = vmatpush2.xpose.msra.mxu0 0.0
    %1170 = vmatprep.subr.mxu0 0.0
    %1171 = vmatpush2.xpose.msra.mxu0 0.0
    %1172 = vmatprep.subr.mxu0 0.0
    %1173 = vmatpush2.xpose.msra.mxu0 0.0
    %1174 = vmatprep.subr.mxu0 0.0
    %1175 = vmatpush2.xpose.msra.mxu0 0.0
    %1176 = vmatprep.subr.mxu0 0.0
    %1177 = vmatpush2.xpose.msra.mxu0 0.0
    %1178 = vmatprep.mubr.f32.mxu0 0.0
    %1179 = vmatmul.mubr.f32.gmra.mxu0 %v1110
    %v1180 = vpop.f32.mrf.mxu0
    %v1181 = vadd.f32 0.0, %v1180
    %v1182 = vpop.f32.mrf.mxu0
    %1183 = vdwg.mxu0
    %vm1184 = vcmask 64512
    %v1185 = vsel %vm1184, %v515, -inf
    %1186 = vmax.xlane.f32.xlu0 %v1185
    %v1187 = vpop.xlane.xlu0 %1186
    %v1188 = vsel %vm1184, %v589, -inf
    %1189 = vmax.xlane.f32.xlu0 %v1188
    %v1190 = vpop.xlane.xlu0 %1189
    %v1191 = vsel %vm1184, %v663, -inf
    %1192 = vmax.xlane.f32.xlu0 %v1191
    %v1193 = vpop.xlane.xlu0 %1192
    %v1194 = vsel %vm1184, %v737, -inf
    %1195 = vmax.xlane.f32.xlu0 %v1194
    %v1196 = vpop.xlane.xlu0 %1195
    %v1197 = vsel %vm1184, %v811, -inf
    %1198 = vmax.xlane.f32.xlu0 %v1197
    %v1199 = vpop.xlane.xlu0 %1198
    %v1200 = vsel %vm1184, %v885, -inf
    %1201 = vmax.xlane.f32.xlu0 %v1200
    %v1202 = vpop.xlane.xlu0 %1201
    %v1203 = vsel %vm1184, %v959, -inf
    %1204 = vmax.xlane.f32.xlu0 %v1203
    %v1205 = vpop.xlane.xlu0 %1204
    %v1206 = vsel %vm1184, %v1033, -inf
    %1207 = vmax.xlane.f32.xlu0 %v1206
    %v1208 = vpop.xlane.xlu0 %1207
    %v1209 = vsel %vm1184, %v1107, -inf
    %1210 = vmax.xlane.f32.xlu0 %v1209
    %v1211 = vpop.xlane.xlu0 %1210
    %v1212 = vsel %vm1184, %v1181, -inf
    %1213 = vmax.xlane.f32.xlu0 %v1212
    %v1214 = vpop.xlane.xlu0 %1213
    %v1215 = vsub.f32 %v515, %v1187
    %v1216 = vsub.f32 %v589, %v1190
    %v1217 = vsub.f32 %v663, %v1193
    %v1218 = vsub.f32 %v737, %v1196
    %v1219 = vsub.f32 %v811, %v1199
    %v1220 = vsub.f32 %v885, %v1202
    %v1221 = vsub.f32 %v959, %v1205
    %v1222 = vsub.f32 %v1033, %v1208
    %v1223 = vsub.f32 %v1107, %v1211
    %v1224 = vsub.f32 %v1181, %v1214
    %v1225 = vmul.f32 %v1215, 1.442695
    %v1226 = vpow.pop %v1225
    %v1227 = vmul.f32 %v1216, 1.442695
    %v1228 = vpow.pop %v1227
    %v1229 = vmul.f32 %v1217, 1.442695
    %v1230 = vpow.pop %v1229
    %v1231 = vmul.f32 %v1218, 1.442695
    %v1232 = vpow.pop %v1231
    %v1233 = vmul.f32 %v1219, 1.442695
    %v1234 = vpow.pop %v1233
    %v1235 = vmul.f32 %v1220, 1.442695
    %v1236 = vpow.pop %v1235
    %v1237 = vmul.f32 %v1221, 1.442695
    %v1238 = vpow.pop %v1237
    %v1239 = vmul.f32 %v1222, 1.442695
    %v1240 = vpow.pop %v1239
    %v1241 = vmul.f32 %v1223, 1.442695
    %v1242 = vpow.pop %v1241
    %v1243 = vmul.f32 %v1224, 1.442695
    %v1244 = vpow.pop %v1243
    %v1245 = vsel %vm1184, %v1226, 0.0
    %1246 = vadd.xlane.f32.xlu0 %v1245
    %v1247 = vpop.xlane.xlu0 %1246
    %v1248 = vsel %vm1184, %v1228, 0.0
    %1249 = vadd.xlane.f32.xlu0 %v1248
    %v1250 = vpop.xlane.xlu0 %1249
    %v1251 = vsel %vm1184, %v1230, 0.0
    %1252 = vadd.xlane.f32.xlu0 %v1251
    %v1253 = vpop.xlane.xlu0 %1252
    %v1254 = vsel %vm1184, %v1232, 0.0
    %1255 = vadd.xlane.f32.xlu0 %v1254
    %v1256 = vpop.xlane.xlu0 %1255
    %v1257 = vsel %vm1184, %v1234, 0.0
    %1258 = vadd.xlane.f32.xlu0 %v1257
    %v1259 = vpop.xlane.xlu0 %1258
    %v1260 = vsel %vm1184, %v1236, 0.0
    %1261 = vadd.xlane.f32.xlu0 %v1260
    %v1262 = vpop.xlane.xlu0 %1261
    %v1263 = vsel %vm1184, %v1238, 0.0
    %1264 = vadd.xlane.f32.xlu0 %v1263
    %v1265 = vpop.xlane.xlu0 %1264
    %v1266 = vsel %vm1184, %v1240, 0.0
    %1267 = vadd.xlane.f32.xlu0 %v1266
    %v1268 = vpop.xlane.xlu0 %1267
    %v1269 = vsel %vm1184, %v1242, 0.0
    %1270 = vadd.xlane.f32.xlu0 %v1269
    %v1271 = vpop.xlane.xlu0 %1270
    %v1272 = vsel %vm1184, %v1244, 0.0
    %1273 = vadd.xlane.f32.xlu0 %v1272
    %v1274 = vpop.xlane.xlu0 %1273
    %v1275 = vrcp.pop %v1247
    %v1276 = vrcp.pop %v1250
    %v1277 = vrcp.pop %v1253
    %v1278 = vrcp.pop %v1256
    %v1279 = vrcp.pop %v1259
    %v1280 = vrcp.pop %v1262
    %v1281 = vrcp.pop %v1265
    %v1282 = vrcp.pop %v1268
    %v1283 = vrcp.pop %v1271
    %v1284 = vrcp.pop %v1274
    %v1285 = vmul.f32 %v1226, %v1275
    %v1286 = vmul.f32 %v1228, %v1276
    %v1287 = vmul.f32 %v1230, %v1277
    %v1288 = vmul.f32 %v1232, %v1278
    %v1289 = vmul.f32 %v1234, %v1279
    %v1290 = vmul.f32 %v1236, %v1280
    %v1291 = vmul.f32 %v1238, %v1281
    %v1292 = vmul.f32 %v1240, %v1282
    %v1293 = vmul.f32 %v1242, %v1283
    %v1294 = vmul.f32 %v1244, %v1284
    %v1296 = vsel %vm1184, %v1285, 0
    %1298 = vmatprep.subr.mxu0 0.0
    %1299 = vmatpush1.msra.mxu0 0.0
    %1300 = vmatprep.subr.mxu0 0.0
    %1301 = vmatpush1.msra.mxu0 0.0
    %1302 = vmatprep.subr.mxu0 0.0
    %1303 = vmatpush1.msra.mxu0 0.0
    %1304 = vmatprep.subr.mxu0 0.0
    %1305 = vmatpush1.msra.mxu0 0.0
    %1306 = vmatprep.subr.mxu0 0.0
    %1307 = vmatpush1.msra.mxu0 0.0
    %1308 = vmatprep.subr.mxu0 0.0
    %1309 = vmatpush1.msra.mxu0 0.0
    %1310 = vmatprep.subr.mxu0 0.0
    %1311 = vmatpush1.msra.mxu0 0.0
    %1312 = vmatprep.subr.mxu0 0.0
    %1313 = vmatpush1.msra.mxu0 0.0
    %1314 = vmatprep.subr.mxu0 0.0
    %1315 = vmatpush1.msra.mxu0 0.0
    %1316 = vmatprep.subr.mxu0 0.0
    %1317 = vmatpush1.msra.mxu0 0.0
    %1318 = vmatprep.subr.mxu0 0.0
    %1319 = vmatpush1.msra.mxu0 0.0
    %1320 = vmatprep.subr.mxu0 0.0
    %1321 = vmatpush1.msra.mxu0 0.0
    %1322 = vmatprep.subr.mxu0 0.0
    %1323 = vmatpush1.msra.mxu0 0.0
    %1324 = vmatprep.subr.mxu0 0.0
    %1325 = vmatpush1.msra.mxu0 0.0
    %1326 = vmatprep.subr.mxu0 0.0
    %1327 = vmatpush1.msra.mxu0 0.0
    %1328 = vmatprep.subr.mxu0 0.0
    %1329 = vmatpush1.msra.mxu0 %v373
    %1330 = vmatprep.subr.mxu0 0.0
    %1331 = vmatpush2.msra.mxu0 0.0
    %1332 = vmatprep.subr.mxu0 0.0
    %1333 = vmatpush2.msra.mxu0 0.0
    %1334 = vmatprep.subr.mxu0 0.0
    %1335 = vmatpush2.msra.mxu0 0.0
    %1336 = vmatprep.subr.mxu0 0.0
    %1337 = vmatpush2.msra.mxu0 0.0
    %1338 = vmatprep.subr.mxu0 0.0
    %1339 = vmatpush2.msra.mxu0 0.0
    %1340 = vmatprep.subr.mxu0 0.0
    %1341 = vmatpush2.msra.mxu0 0.0
    %1342 = vmatprep.subr.mxu0 0.0
    %1343 = vmatpush2.msra.mxu0 0.0
    %1344 = vmatprep.subr.mxu0 0.0
    %1345 = vmatpush2.msra.mxu0 0.0
    %1346 = vmatprep.subr.mxu0 0.0
    %1347 = vmatpush2.msra.mxu0 0.0
    %1348 = vmatprep.subr.mxu0 0.0
    %1349 = vmatpush2.msra.mxu0 0.0
    %1350 = vmatprep.subr.mxu0 0.0
    %1351 = vmatpush2.msra.mxu0 0.0
    %1352 = vmatprep.subr.mxu0 0.0
    %1353 = vmatpush2.msra.mxu0 0.0
    %1354 = vmatprep.subr.mxu0 0.0
    %1355 = vmatpush2.msra.mxu0 0.0
    %1356 = vmatprep.subr.mxu0 0.0
    %1357 = vmatpush2.msra.mxu0 0.0
    %1358 = vmatprep.subr.mxu0 0.0
    %1359 = vmatpush2.msra.mxu0 0.0
    %1360 = vmatprep.subr.mxu0 0.0
    %1361 = vmatpush2.msra.mxu0 0.0
    %1362 = vmatprep.mubr.f32.mxu0 0.0
    %1363 = vmatmul.mubr.f32.gmra.mxu0 %v1296
    %v1364 = vpop.f32.mrf.mxu0
    %v1365 = vadd.f32 0.0, %v1364
    %v1366 = vpop.f32.mrf.mxu0
    %1367 = vdwg.mxu0
    %v1369 = vsel %vm1184, %v1286, 0
    %1371 = vmatprep.subr.mxu0 0.0
    %1372 = vmatpush1.msra.mxu0 0.0
    %1373 = vmatprep.subr.mxu0 0.0
    %1374 = vmatpush1.msra.mxu0 0.0
    %1375 = vmatprep.subr.mxu0 0.0
    %1376 = vmatpush1.msra.mxu0 0.0
    %1377 = vmatprep.subr.mxu0 0.0
    %1378 = vmatpush1.msra.mxu0 0.0
    %1379 = vmatprep.subr.mxu0 0.0
    %1380 = vmatpush1.msra.mxu0 0.0
    %1381 = vmatprep.subr.mxu0 0.0
    %1382 = vmatpush1.msra.mxu0 0.0
    %1383 = vmatprep.subr.mxu0 0.0
    %1384 = vmatpush1.msra.mxu0 0.0
    %1385 = vmatprep.subr.mxu0 0.0
    %1386 = vmatpush1.msra.mxu0 0.0
    %1387 = vmatprep.subr.mxu0 0.0
    %1388 = vmatpush1.msra.mxu0 0.0
    %1389 = vmatprep.subr.mxu0 0.0
    %1390 = vmatpush1.msra.mxu0 0.0
    %1391 = vmatprep.subr.mxu0 0.0
    %1392 = vmatpush1.msra.mxu0 0.0
    %1393 = vmatprep.subr.mxu0 0.0
    %1394 = vmatpush1.msra.mxu0 0.0
    %1395 = vmatprep.subr.mxu0 0.0
    %1396 = vmatpush1.msra.mxu0 0.0
    %1397 = vmatprep.subr.mxu0 0.0
    %1398 = vmatpush1.msra.mxu0 0.0
    %1399 = vmatprep.subr.mxu0 0.0
    %1400 = vmatpush1.msra.mxu0 0.0
    %1401 = vmatprep.subr.mxu0 0.0
    %1402 = vmatpush1.msra.mxu0 %v378
    %1403 = vmatprep.subr.mxu0 0.0
    %1404 = vmatpush2.msra.mxu0 0.0
    %1405 = vmatprep.subr.mxu0 0.0
    %1406 = vmatpush2.msra.mxu0 0.0
    %1407 = vmatprep.subr.mxu0 0.0
    %1408 = vmatpush2.msra.mxu0 0.0
    %1409 = vmatprep.subr.mxu0 0.0
    %1410 = vmatpush2.msra.mxu0 0.0
    %1411 = vmatprep.subr.mxu0 0.0
    %1412 = vmatpush2.msra.mxu0 0.0
    %1413 = vmatprep.subr.mxu0 0.0
    %1414 = vmatpush2.msra.mxu0 0.0
    %1415 = vmatprep.subr.mxu0 0.0
    %1416 = vmatpush2.msra.mxu0 0.0
    %1417 = vmatprep.subr.mxu0 0.0
    %1418 = vmatpush2.msra.mxu0 0.0
    %1419 = vmatprep.subr.mxu0 0.0
    %1420 = vmatpush2.msra.mxu0 0.0
    %1421 = vmatprep.subr.mxu0 0.0
    %1422 = vmatpush2.msra.mxu0 0.0
    %1423 = vmatprep.subr.mxu0 0.0
    %1424 = vmatpush2.msra.mxu0 0.0
    %1425 = vmatprep.subr.mxu0 0.0
    %1426 = vmatpush2.msra.mxu0 0.0
    %1427 = vmatprep.subr.mxu0 0.0
    %1428 = vmatpush2.msra.mxu0 0.0
    %1429 = vmatprep.subr.mxu0 0.0
    %1430 = vmatpush2.msra.mxu0 0.0
    %1431 = vmatprep.subr.mxu0 0.0
    %1432 = vmatpush2.msra.mxu0 0.0
    %1433 = vmatprep.subr.mxu0 0.0
    %1434 = vmatpush2.msra.mxu0 0.0
    %1435 = vmatprep.mubr.f32.mxu0 0.0
    %1436 = vmatmul.mubr.f32.gmra.mxu0 %v1369
    %v1437 = vpop.f32.mrf.mxu0
    %v1438 = vadd.f32 0.0, %v1437
    %v1439 = vpop.f32.mrf.mxu0
    %1440 = vdwg.mxu0
    %v1442 = vsel %vm1184, %v1287, 0
    %1444 = vmatprep.subr.mxu0 0.0
    %1445 = vmatpush1.msra.mxu0 0.0
    %1446 = vmatprep.subr.mxu0 0.0
    %1447 = vmatpush1.msra.mxu0 0.0
    %1448 = vmatprep.subr.mxu0 0.0
    %1449 = vmatpush1.msra.mxu0 0.0
    %1450 = vmatprep.subr.mxu0 0.0
    %1451 = vmatpush1.msra.mxu0 0.0
    %1452 = vmatprep.subr.mxu0 0.0
    %1453 = vmatpush1.msra.mxu0 0.0
    %1454 = vmatprep.subr.mxu0 0.0
    %1455 = vmatpush1.msra.mxu0 0.0
    %1456 = vmatprep.subr.mxu0 0.0
    %1457 = vmatpush1.msra.mxu0 0.0
    %1458 = vmatprep.subr.mxu0 0.0
    %1459 = vmatpush1.msra.mxu0 0.0
    %1460 = vmatprep.subr.mxu0 0.0
    %1461 = vmatpush1.msra.mxu0 0.0
    %1462 = vmatprep.subr.mxu0 0.0
    %1463 = vmatpush1.msra.mxu0 0.0
    %1464 = vmatprep.subr.mxu0 0.0
    %1465 = vmatpush1.msra.mxu0 0.0
    %1466 = vmatprep.subr.mxu0 0.0
    %1467 = vmatpush1.msra.mxu0 0.0
    %1468 = vmatprep.subr.mxu0 0.0
    %1469 = vmatpush1.msra.mxu0 0.0
    %1470 = vmatprep.subr.mxu0 0.0
    %1471 = vmatpush1.msra.mxu0 0.0
    %1472 = vmatprep.subr.mxu0 0.0
    %1473 = vmatpush1.msra.mxu0 0.0
    %1474 = vmatprep.subr.mxu0 0.0
    %1475 = vmatpush1.msra.mxu0 %v420
    %1476 = vmatprep.subr.mxu0 0.0
    %1477 = vmatpush2.msra.mxu0 0.0
    %1478 = vmatprep.subr.mxu0 0.0
    %1479 = vmatpush2.msra.mxu0 0.0
    %1480 = vmatprep.subr.mxu0 0.0
    %1481 = vmatpush2.msra.mxu0 0.0
    %1482 = vmatprep.subr.mxu0 0.0
    %1483 = vmatpush2.msra.mxu0 0.0
    %1484 = vmatprep.subr.mxu0 0.0
    %1485 = vmatpush2.msra.mxu0 0.0
    %1486 = vmatprep.subr.mxu0 0.0
    %1487 = vmatpush2.msra.mxu0 0.0
    %1488 = vmatprep.subr.mxu0 0.0
    %1489 = vmatpush2.msra.mxu0 0.0
    %1490 = vmatprep.subr.mxu0 0.0
    %1491 = vmatpush2.msra.mxu0 0.0
    %1492 = vmatprep.subr.mxu0 0.0
    %1493 = vmatpush2.msra.mxu0 0.0
    %1494 = vmatprep.subr.mxu0 0.0
    %1495 = vmatpush2.msra.mxu0 0.0
    %1496 = vmatprep.subr.mxu0 0.0
    %1497 = vmatpush2.msra.mxu0 0.0
    %1498 = vmatprep.subr.mxu0 0.0
    %1499 = vmatpush2.msra.mxu0 0.0
    %1500 = vmatprep.subr.mxu0 0.0
    %1501 = vmatpush2.msra.mxu0 0.0
    %1502 = vmatprep.subr.mxu0 0.0
    %1503 = vmatpush2.msra.mxu0 0.0
    %1504 = vmatprep.subr.mxu0 0.0
    %1505 = vmatpush2.msra.mxu0 0.0
    %1506 = vmatprep.subr.mxu0 0.0
    %1507 = vmatpush2.msra.mxu0 0.0
    %1508 = vmatprep.mubr.f32.mxu0 0.0
    %1509 = vmatmul.mubr.f32.gmra.mxu0 %v1442
    %v1510 = vpop.f32.mrf.mxu0
    %v1511 = vadd.f32 0.0, %v1510
    %v1512 = vpop.f32.mrf.mxu0
    %1513 = vdwg.mxu0
    %v1515 = vsel %vm1184, %v1288, 0
    %1517 = vmatprep.subr.mxu0 0.0
    %1518 = vmatpush1.msra.mxu0 0.0
    %1519 = vmatprep.subr.mxu0 0.0
    %1520 = vmatpush1.msra.mxu0 0.0
    %1521 = vmatprep.subr.mxu0 0.0
    %1522 = vmatpush1.msra.mxu0 0.0
    %1523 = vmatprep.subr.mxu0 0.0
    %1524 = vmatpush1.msra.mxu0 0.0
    %1525 = vmatprep.subr.mxu0 0.0
    %1526 = vmatpush1.msra.mxu0 0.0
    %1527 = vmatprep.subr.mxu0 0.0
    %1528 = vmatpush1.msra.mxu0 0.0
    %1529 = vmatprep.subr.mxu0 0.0
    %1530 = vmatpush1.msra.mxu0 0.0
    %1531 = vmatprep.subr.mxu0 0.0
    %1532 = vmatpush1.msra.mxu0 0.0
    %1533 = vmatprep.subr.mxu0 0.0
    %1534 = vmatpush1.msra.mxu0 0.0
    %1535 = vmatprep.subr.mxu0 0.0
    %1536 = vmatpush1.msra.mxu0 0.0
    %1537 = vmatprep.subr.mxu0 0.0
    %1538 = vmatpush1.msra.mxu0 0.0
    %1539 = vmatprep.subr.mxu0 0.0
    %1540 = vmatpush1.msra.mxu0 0.0
    %1541 = vmatprep.subr.mxu0 0.0
    %1542 = vmatpush1.msra.mxu0 0.0
    %1543 = vmatprep.subr.mxu0 0.0
    %1544 = vmatpush1.msra.mxu0 0.0
    %1545 = vmatprep.subr.mxu0 0.0
    %1546 = vmatpush1.msra.mxu0 0.0
    %1547 = vmatprep.subr.mxu0 0.0
    %1548 = vmatpush1.msra.mxu0 %v422
    %1549 = vmatprep.subr.mxu0 0.0
    %1550 = vmatpush2.msra.mxu0 0.0
    %1551 = vmatprep.subr.mxu0 0.0
    %1552 = vmatpush2.msra.mxu0 0.0
    %1553 = vmatprep.subr.mxu0 0.0
    %1554 = vmatpush2.msra.mxu0 0.0
    %1555 = vmatprep.subr.mxu0 0.0
    %1556 = vmatpush2.msra.mxu0 0.0
    %1557 = vmatprep.subr.mxu0 0.0
    %1558 = vmatpush2.msra.mxu0 0.0
    %1559 = vmatprep.subr.mxu0 0.0
    %1560 = vmatpush2.msra.mxu0 0.0
    %1561 = vmatprep.subr.mxu0 0.0
    %1562 = vmatpush2.msra.mxu0 0.0
    %1563 = vmatprep.subr.mxu0 0.0
    %1564 = vmatpush2.msra.mxu0 0.0
    %1565 = vmatprep.subr.mxu0 0.0
    %1566 = vmatpush2.msra.mxu0 0.0
    %1567 = vmatprep.subr.mxu0 0.0
    %1568 = vmatpush2.msra.mxu0 0.0
    %1569 = vmatprep.subr.mxu0 0.0
    %1570 = vmatpush2.msra.mxu0 0.0
    %1571 = vmatprep.subr.mxu0 0.0
    %1572 = vmatpush2.msra.mxu0 0.0
    %1573 = vmatprep.subr.mxu0 0.0
    %1574 = vmatpush2.msra.mxu0 0.0
    %1575 = vmatprep.subr.mxu0 0.0
    %1576 = vmatpush2.msra.mxu0 0.0
    %1577 = vmatprep.subr.mxu0 0.0
    %1578 = vmatpush2.msra.mxu0 0.0
    %1579 = vmatprep.subr.mxu0 0.0
    %1580 = vmatpush2.msra.mxu0 0.0
    %1581 = vmatprep.mubr.f32.mxu0 0.0
    %1582 = vmatmul.mubr.f32.gmra.mxu0 %v1515
    %v1583 = vpop.f32.mrf.mxu0
    %v1584 = vadd.f32 0.0, %v1583
    %v1585 = vpop.f32.mrf.mxu0
    %1586 = vdwg.mxu0
    %v1588 = vsel %vm1184, %v1289, 0
    %1590 = vmatprep.subr.mxu0 0.0
    %1591 = vmatpush1.msra.mxu0 0.0
    %1592 = vmatprep.subr.mxu0 0.0
    %1593 = vmatpush1.msra.mxu0 0.0
    %1594 = vmatprep.subr.mxu0 0.0
    %1595 = vmatpush1.msra.mxu0 0.0
    %1596 = vmatprep.subr.mxu0 0.0
    %1597 = vmatpush1.msra.mxu0 0.0
    %1598 = vmatprep.subr.mxu0 0.0
    %1599 = vmatpush1.msra.mxu0 0.0
    %1600 = vmatprep.subr.mxu0 0.0
    %1601 = vmatpush1.msra.mxu0 0.0
    %1602 = vmatprep.subr.mxu0 0.0
    %1603 = vmatpush1.msra.mxu0 0.0
    %1604 = vmatprep.subr.mxu0 0.0
    %1605 = vmatpush1.msra.mxu0 0.0
    %1606 = vmatprep.subr.mxu0 0.0
    %1607 = vmatpush1.msra.mxu0 0.0
    %1608 = vmatprep.subr.mxu0 0.0
    %1609 = vmatpush1.msra.mxu0 0.0
    %1610 = vmatprep.subr.mxu0 0.0
    %1611 = vmatpush1.msra.mxu0 0.0
    %1612 = vmatprep.subr.mxu0 0.0
    %1613 = vmatpush1.msra.mxu0 0.0
    %1614 = vmatprep.subr.mxu0 0.0
    %1615 = vmatpush1.msra.mxu0 0.0
    %1616 = vmatprep.subr.mxu0 0.0
    %1617 = vmatpush1.msra.mxu0 0.0
    %1618 = vmatprep.subr.mxu0 0.0
    %1619 = vmatpush1.msra.mxu0 0.0
    %1620 = vmatprep.subr.mxu0 0.0
    %1621 = vmatpush1.msra.mxu0 %v426
    %1622 = vmatprep.subr.mxu0 0.0
    %1623 = vmatpush2.msra.mxu0 0.0
    %1624 = vmatprep.subr.mxu0 0.0
    %1625 = vmatpush2.msra.mxu0 0.0
    %1626 = vmatprep.subr.mxu0 0.0
    %1627 = vmatpush2.msra.mxu0 0.0
    %1628 = vmatprep.subr.mxu0 0.0
    %1629 = vmatpush2.msra.mxu0 0.0
    %1630 = vmatprep.subr.mxu0 0.0
    %1631 = vmatpush2.msra.mxu0 0.0
    %1632 = vmatprep.subr.mxu0 0.0
    %1633 = vmatpush2.msra.mxu0 0.0
    %1634 = vmatprep.subr.mxu0 0.0
    %1635 = vmatpush2.msra.mxu0 0.0
    %1636 = vmatprep.subr.mxu0 0.0
    %1637 = vmatpush2.msra.mxu0 0.0
    %1638 = vmatprep.subr.mxu0 0.0
    %1639 = vmatpush2.msra.mxu0 0.0
    %1640 = vmatprep.subr.mxu0 0.0
    %1641 = vmatpush2.msra.mxu0 0.0
    %1642 = vmatprep.subr.mxu0 0.0
    %1643 = vmatpush2.msra.mxu0 0.0
    %1644 = vmatprep.subr.mxu0 0.0
    %1645 = vmatpush2.msra.mxu0 0.0
    %1646 = vmatprep.subr.mxu0 0.0
    %1647 = vmatpush2.msra.mxu0 0.0
    %1648 = vmatprep.subr.mxu0 0.0
    %1649 = vmatpush2.msra.mxu0 0.0
    %1650 = vmatprep.subr.mxu0 0.0
    %1651 = vmatpush2.msra.mxu0 0.0
    %1652 = vmatprep.subr.mxu0 0.0
    %1653 = vmatpush2.msra.mxu0 0.0
    %1654 = vmatprep.mubr.f32.mxu0 0.0
    %1655 = vmatmul.mubr.f32.gmra.mxu0 %v1588
    %v1656 = vpop.f32.mrf.mxu0
    %v1657 = vadd.f32 0.0, %v1656
    %v1658 = vpop.f32.mrf.mxu0
    %1659 = vdwg.mxu0
    %v1661 = vsel %vm1184, %v1290, 0
    %1663 = vmatprep.subr.mxu0 0.0
    %1664 = vmatpush1.msra.mxu0 0.0
    %1665 = vmatprep.subr.mxu0 0.0
    %1666 = vmatpush1.msra.mxu0 0.0
    %1667 = vmatprep.subr.mxu0 0.0
    %1668 = vmatpush1.msra.mxu0 0.0
    %1669 = vmatprep.subr.mxu0 0.0
    %1670 = vmatpush1.msra.mxu0 0.0
    %1671 = vmatprep.subr.mxu0 0.0
    %1672 = vmatpush1.msra.mxu0 0.0
    %1673 = vmatprep.subr.mxu0 0.0
    %1674 = vmatpush1.msra.mxu0 0.0
    %1675 = vmatprep.subr.mxu0 0.0
    %1676 = vmatpush1.msra.mxu0 0.0
    %1677 = vmatprep.subr.mxu0 0.0
    %1678 = vmatpush1.msra.mxu0 0.0
    %1679 = vmatprep.subr.mxu0 0.0
    %1680 = vmatpush1.msra.mxu0 0.0
    %1681 = vmatprep.subr.mxu0 0.0
    %1682 = vmatpush1.msra.mxu0 0.0
    %1683 = vmatprep.subr.mxu0 0.0
    %1684 = vmatpush1.msra.mxu0 0.0
    %1685 = vmatprep.subr.mxu0 0.0
    %1686 = vmatpush1.msra.mxu0 0.0
    %1687 = vmatprep.subr.mxu0 0.0
    %1688 = vmatpush1.msra.mxu0 0.0
    %1689 = vmatprep.subr.mxu0 0.0
    %1690 = vmatpush1.msra.mxu0 0.0
    %1691 = vmatprep.subr.mxu0 0.0
    %1692 = vmatpush1.msra.mxu0 0.0
    %1693 = vmatprep.subr.mxu0 0.0
    %1694 = vmatpush1.msra.mxu0 %v428
    %1695 = vmatprep.subr.mxu0 0.0
    %1696 = vmatpush2.msra.mxu0 0.0
    %1697 = vmatprep.subr.mxu0 0.0
    %1698 = vmatpush2.msra.mxu0 0.0
    %1699 = vmatprep.subr.mxu0 0.0
    %1700 = vmatpush2.msra.mxu0 0.0
    %1701 = vmatprep.subr.mxu0 0.0
    %1702 = vmatpush2.msra.mxu0 0.0
    %1703 = vmatprep.subr.mxu0 0.0
    %1704 = vmatpush2.msra.mxu0 0.0
    %1705 = vmatprep.subr.mxu0 0.0
    %1706 = vmatpush2.msra.mxu0 0.0
    %1707 = vmatprep.subr.mxu0 0.0
    %1708 = vmatpush2.msra.mxu0 0.0
    %1709 = vmatprep.subr.mxu0 0.0
    %1710 = vmatpush2.msra.mxu0 0.0
    %1711 = vmatprep.subr.mxu0 0.0
    %1712 = vmatpush2.msra.mxu0 0.0
    %1713 = vmatprep.subr.mxu0 0.0
    %1714 = vmatpush2.msra.mxu0 0.0
    %1715 = vmatprep.subr.mxu0 0.0
    %1716 = vmatpush2.msra.mxu0 0.0
    %1717 = vmatprep.subr.mxu0 0.0
    %1718 = vmatpush2.msra.mxu0 0.0
    %1719 = vmatprep.subr.mxu0 0.0
    %1720 = vmatpush2.msra.mxu0 0.0
    %1721 = vmatprep.subr.mxu0 0.0
    %1722 = vmatpush2.msra.mxu0 0.0
    %1723 = vmatprep.subr.mxu0 0.0
    %1724 = vmatpush2.msra.mxu0 0.0
    %1725 = vmatprep.subr.mxu0 0.0
    %1726 = vmatpush2.msra.mxu0 0.0
    %1727 = vmatprep.mubr.f32.mxu0 0.0
    %1728 = vmatmul.mubr.f32.gmra.mxu0 %v1661
    %v1729 = vpop.f32.mrf.mxu0
    %v1730 = vadd.f32 0.0, %v1729
    %v1731 = vpop.f32.mrf.mxu0
    %1732 = vdwg.mxu0
    %v1734 = vsel %vm1184, %v1291, 0
    %1736 = vmatprep.subr.mxu0 0.0
    %1737 = vmatpush1.msra.mxu0 0.0
    %1738 = vmatprep.subr.mxu0 0.0
    %1739 = vmatpush1.msra.mxu0 0.0
    %1740 = vmatprep.subr.mxu0 0.0
    %1741 = vmatpush1.msra.mxu0 0.0
    %1742 = vmatprep.subr.mxu0 0.0
    %1743 = vmatpush1.msra.mxu0 0.0
    %1744 = vmatprep.subr.mxu0 0.0
    %1745 = vmatpush1.msra.mxu0 0.0
    %1746 = vmatprep.subr.mxu0 0.0
    %1747 = vmatpush1.msra.mxu0 0.0
    %1748 = vmatprep.subr.mxu0 0.0
    %1749 = vmatpush1.msra.mxu0 0.0
    %1750 = vmatprep.subr.mxu0 0.0
    %1751 = vmatpush1.msra.mxu0 0.0
    %1752 = vmatprep.subr.mxu0 0.0
    %1753 = vmatpush1.msra.mxu0 0.0
    %1754 = vmatprep.subr.mxu0 0.0
    %1755 = vmatpush1.msra.mxu0 0.0
    %1756 = vmatprep.subr.mxu0 0.0
    %1757 = vmatpush1.msra.mxu0 0.0
    %1758 = vmatprep.subr.mxu0 0.0
    %1759 = vmatpush1.msra.mxu0 0.0
    %1760 = vmatprep.subr.mxu0 0.0
    %1761 = vmatpush1.msra.mxu0 0.0
    %1762 = vmatprep.subr.mxu0 0.0
    %1763 = vmatpush1.msra.mxu0 0.0
    %1764 = vmatprep.subr.mxu0 0.0
    %1765 = vmatpush1.msra.mxu0 0.0
    %1766 = vmatprep.subr.mxu0 0.0
    %1767 = vmatpush1.msra.mxu0 %v432
    %1768 = vmatprep.subr.mxu0 0.0
    %1769 = vmatpush2.msra.mxu0 0.0
    %1770 = vmatprep.subr.mxu0 0.0
    %1771 = vmatpush2.msra.mxu0 0.0
    %1772 = vmatprep.subr.mxu0 0.0
    %1773 = vmatpush2.msra.mxu0 0.0
    %1774 = vmatprep.subr.mxu0 0.0
    %1775 = vmatpush2.msra.mxu0 0.0
    %1776 = vmatprep.subr.mxu0 0.0
    %1777 = vmatpush2.msra.mxu0 0.0
    %1778 = vmatprep.subr.mxu0 0.0
    %1779 = vmatpush2.msra.mxu0 0.0
    %1780 = vmatprep.subr.mxu0 0.0
    %1781 = vmatpush2.msra.mxu0 0.0
    %1782 = vmatprep.subr.mxu0 0.0
    %1783 = vmatpush2.msra.mxu0 0.0
    %1784 = vmatprep.subr.mxu0 0.0
    %1785 = vmatpush2.msra.mxu0 0.0
    %1786 = vmatprep.subr.mxu0 0.0
    %1787 = vmatpush2.msra.mxu0 0.0
    %1788 = vmatprep.subr.mxu0 0.0
    %1789 = vmatpush2.msra.mxu0 0.0
    %1790 = vmatprep.subr.mxu0 0.0
    %1791 = vmatpush2.msra.mxu0 0.0
    %1792 = vmatprep.subr.mxu0 0.0
    %1793 = vmatpush2.msra.mxu0 0.0
    %1794 = vmatprep.subr.mxu0 0.0
    %1795 = vmatpush2.msra.mxu0 0.0
    %1796 = vmatprep.subr.mxu0 0.0
    %1797 = vmatpush2.msra.mxu0 0.0
    %1798 = vmatprep.subr.mxu0 0.0
    %1799 = vmatpush2.msra.mxu0 0.0
    %1800 = vmatprep.mubr.f32.mxu0 0.0
    %1801 = vmatmul.mubr.f32.gmra.mxu0 %v1734
    %v1802 = vpop.f32.mrf.mxu0
    %v1803 = vadd.f32 0.0, %v1802
    %v1804 = vpop.f32.mrf.mxu0
    %1805 = vdwg.mxu0
    %v1807 = vsel %vm1184, %v1292, 0
    %1809 = vmatprep.subr.mxu0 0.0
    %1810 = vmatpush1.msra.mxu0 0.0
    %1811 = vmatprep.subr.mxu0 0.0
    %1812 = vmatpush1.msra.mxu0 0.0
    %1813 = vmatprep.subr.mxu0 0.0
    %1814 = vmatpush1.msra.mxu0 0.0
    %1815 = vmatprep.subr.mxu0 0.0
    %1816 = vmatpush1.msra.mxu0 0.0
    %1817 = vmatprep.subr.mxu0 0.0
    %1818 = vmatpush1.msra.mxu0 0.0
    %1819 = vmatprep.subr.mxu0 0.0
    %1820 = vmatpush1.msra.mxu0 0.0
    %1821 = vmatprep.subr.mxu0 0.0
    %1822 = vmatpush1.msra.mxu0 0.0
    %1823 = vmatprep.subr.mxu0 0.0
    %1824 = vmatpush1.msra.mxu0 0.0
    %1825 = vmatprep.subr.mxu0 0.0
    %1826 = vmatpush1.msra.mxu0 0.0
    %1827 = vmatprep.subr.mxu0 0.0
    %1828 = vmatpush1.msra.mxu0 0.0
    %1829 = vmatprep.subr.mxu0 0.0
    %1830 = vmatpush1.msra.mxu0 0.0
    %1831 = vmatprep.subr.mxu0 0.0
    %1832 = vmatpush1.msra.mxu0 0.0
    %1833 = vmatprep.subr.mxu0 0.0
    %1834 = vmatpush1.msra.mxu0 0.0
    %1835 = vmatprep.subr.mxu0 0.0
    %1836 = vmatpush1.msra.mxu0 0.0
    %1837 = vmatprep.subr.mxu0 0.0
    %1838 = vmatpush1.msra.mxu0 0.0
    %1839 = vmatprep.subr.mxu0 0.0
    %1840 = vmatpush1.msra.mxu0 %v434
    %1841 = vmatprep.subr.mxu0 0.0
    %1842 = vmatpush2.msra.mxu0 0.0
    %1843 = vmatprep.subr.mxu0 0.0
    %1844 = vmatpush2.msra.mxu0 0.0
    %1845 = vmatprep.subr.mxu0 0.0
    %1846 = vmatpush2.msra.mxu0 0.0
    %1847 = vmatprep.subr.mxu0 0.0
    %1848 = vmatpush2.msra.mxu0 0.0
    %1849 = vmatprep.subr.mxu0 0.0
    %1850 = vmatpush2.msra.mxu0 0.0
    %1851 = vmatprep.subr.mxu0 0.0
    %1852 = vmatpush2.msra.mxu0 0.0
    %1853 = vmatprep.subr.mxu0 0.0
    %1854 = vmatpush2.msra.mxu0 0.0
    %1855 = vmatprep.subr.mxu0 0.0
    %1856 = vmatpush2.msra.mxu0 0.0
    %1857 = vmatprep.subr.mxu0 0.0
    %1858 = vmatpush2.msra.mxu0 0.0
    %1859 = vmatprep.subr.mxu0 0.0
    %1860 = vmatpush2.msra.mxu0 0.0
    %1861 = vmatprep.subr.mxu0 0.0
    %1862 = vmatpush2.msra.mxu0 0.0
    %1863 = vmatprep.subr.mxu0 0.0
    %1864 = vmatpush2.msra.mxu0 0.0
    %1865 = vmatprep.subr.mxu0 0.0
    %1866 = vmatpush2.msra.mxu0 0.0
    %1867 = vmatprep.subr.mxu0 0.0
    %1868 = vmatpush2.msra.mxu0 0.0
    %1869 = vmatprep.subr.mxu0 0.0
    %1870 = vmatpush2.msra.mxu0 0.0
    %1871 = vmatprep.subr.mxu0 0.0
    %1872 = vmatpush2.msra.mxu0 0.0
    %1873 = vmatprep.mubr.f32.mxu0 0.0
    %1874 = vmatmul.mubr.f32.gmra.mxu0 %v1807
    %v1875 = vpop.f32.mrf.mxu0
    %v1876 = vadd.f32 0.0, %v1875
    %v1877 = vpop.f32.mrf.mxu0
    %1878 = vdwg.mxu0
    %v1880 = vsel %vm1184, %v1293, 0
    %1882 = vmatprep.subr.mxu0 0.0
    %1883 = vmatpush1.msra.mxu0 0.0
    %1884 = vmatprep.subr.mxu0 0.0
    %1885 = vmatpush1.msra.mxu0 0.0
    %1886 = vmatprep.subr.mxu0 0.0
    %1887 = vmatpush1.msra.mxu0 0.0
    %1888 = vmatprep.subr.mxu0 0.0
    %1889 = vmatpush1.msra.mxu0 0.0
    %1890 = vmatprep.subr.mxu0 0.0
    %1891 = vmatpush1.msra.mxu0 0.0
    %1892 = vmatprep.subr.mxu0 0.0
    %1893 = vmatpush1.msra.mxu0 0.0
    %1894 = vmatprep.subr.mxu0 0.0
    %1895 = vmatpush1.msra.mxu0 0.0
    %1896 = vmatprep.subr.mxu0 0.0
    %1897 = vmatpush1.msra.mxu0 0.0
    %1898 = vmatprep.subr.mxu0 0.0
    %1899 = vmatpush1.msra.mxu0 0.0
    %1900 = vmatprep.subr.mxu0 0.0
    %1901 = vmatpush1.msra.mxu0 0.0
    %1902 = vmatprep.subr.mxu0 0.0
    %1903 = vmatpush1.msra.mxu0 0.0
    %1904 = vmatprep.subr.mxu0 0.0
    %1905 = vmatpush1.msra.mxu0 0.0
    %1906 = vmatprep.subr.mxu0 0.0
    %1907 = vmatpush1.msra.mxu0 0.0
    %1908 = vmatprep.subr.mxu0 0.0
    %1909 = vmatpush1.msra.mxu0 0.0
    %1910 = vmatprep.subr.mxu0 0.0
    %1911 = vmatpush1.msra.mxu0 0.0
    %1912 = vmatprep.subr.mxu0 0.0
    %1913 = vmatpush1.msra.mxu0 %v438
    %1914 = vmatprep.subr.mxu0 0.0
    %1915 = vmatpush2.msra.mxu0 0.0
    %1916 = vmatprep.subr.mxu0 0.0
    %1917 = vmatpush2.msra.mxu0 0.0
    %1918 = vmatprep.subr.mxu0 0.0
    %1919 = vmatpush2.msra.mxu0 0.0
    %1920 = vmatprep.subr.mxu0 0.0
    %1921 = vmatpush2.msra.mxu0 0.0
    %1922 = vmatprep.subr.mxu0 0.0
    %1923 = vmatpush2.msra.mxu0 0.0
    %1924 = vmatprep.subr.mxu0 0.0
    %1925 = vmatpush2.msra.mxu0 0.0
    %1926 = vmatprep.subr.mxu0 0.0
    %1927 = vmatpush2.msra.mxu0 0.0
    %1928 = vmatprep.subr.mxu0 0.0
    %1929 = vmatpush2.msra.mxu0 0.0
    %1930 = vmatprep.subr.mxu0 0.0
    %1931 = vmatpush2.msra.mxu0 0.0
    %1932 = vmatprep.subr.mxu0 0.0
    %1933 = vmatpush2.msra.mxu0 0.0
    %1934 = vmatprep.subr.mxu0 0.0
    %1935 = vmatpush2.msra.mxu0 0.0
    %1936 = vmatprep.subr.mxu0 0.0
    %1937 = vmatpush2.msra.mxu0 0.0
    %1938 = vmatprep.subr.mxu0 0.0
    %1939 = vmatpush2.msra.mxu0 0.0
    %1940 = vmatprep.subr.mxu0 0.0
    %1941 = vmatpush2.msra.mxu0 0.0
    %1942 = vmatprep.subr.mxu0 0.0
    %1943 = vmatpush2.msra.mxu0 0.0
    %1944 = vmatprep.subr.mxu0 0.0
    %1945 = vmatpush2.msra.mxu0 0.0
    %1946 = vmatprep.mubr.f32.mxu0 0.0
    %1947 = vmatmul.mubr.f32.gmra.mxu0 %v1880
    %v1948 = vpop.f32.mrf.mxu0
    %v1949 = vadd.f32 0.0, %v1948
    %v1950 = vpop.f32.mrf.mxu0
    %1951 = vdwg.mxu0
    %v1953 = vsel %vm1184, %v1294, 0
    %1955 = vmatprep.subr.mxu0 0.0
    %1956 = vmatpush1.msra.mxu0 0.0
    %1957 = vmatprep.subr.mxu0 0.0
    %1958 = vmatpush1.msra.mxu0 0.0
    %1959 = vmatprep.subr.mxu0 0.0
    %1960 = vmatpush1.msra.mxu0 0.0
    %1961 = vmatprep.subr.mxu0 0.0
    %1962 = vmatpush1.msra.mxu0 0.0
    %1963 = vmatprep.subr.mxu0 0.0
    %1964 = vmatpush1.msra.mxu0 0.0
    %1965 = vmatprep.subr.mxu0 0.0
    %1966 = vmatpush1.msra.mxu0 0.0
    %1967 = vmatprep.subr.mxu0 0.0
    %1968 = vmatpush1.msra.mxu0 0.0
    %1969 = vmatprep.subr.mxu0 0.0
    %1970 = vmatpush1.msra.mxu0 0.0
    %1971 = vmatprep.subr.mxu0 0.0
    %1972 = vmatpush1.msra.mxu0 0.0
    %1973 = vmatprep.subr.mxu0 0.0
    %1974 = vmatpush1.msra.mxu0 0.0
    %1975 = vmatprep.subr.mxu0 0.0
    %1976 = vmatpush1.msra.mxu0 0.0
    %1977 = vmatprep.subr.mxu0 0.0
    %1978 = vmatpush1.msra.mxu0 0.0
    %1979 = vmatprep.subr.mxu0 0.0
    %1980 = vmatpush1.msra.mxu0 0.0
    %1981 = vmatprep.subr.mxu0 0.0
    %1982 = vmatpush1.msra.mxu0 0.0
    %1983 = vmatprep.subr.mxu0 0.0
    %1984 = vmatpush1.msra.mxu0 0.0
    %1985 = vmatprep.subr.mxu0 0.0
    %1986 = vmatpush1.msra.mxu0 %v440
    %1987 = vmatprep.subr.mxu0 0.0
    %1988 = vmatpush2.msra.mxu0 0.0
    %1989 = vmatprep.subr.mxu0 0.0
    %1990 = vmatpush2.msra.mxu0 0.0
    %1991 = vmatprep.subr.mxu0 0.0
    %1992 = vmatpush2.msra.mxu0 0.0
    %1993 = vmatprep.subr.mxu0 0.0
    %1994 = vmatpush2.msra.mxu0 0.0
    %1995 = vmatprep.subr.mxu0 0.0
    %1996 = vmatpush2.msra.mxu0 0.0
    %1997 = vmatprep.subr.mxu0 0.0
    %1998 = vmatpush2.msra.mxu0 0.0
    %1999 = vmatprep.subr.mxu0 0.0
    %2000 = vmatpush2.msra.mxu0 0.0
    %2001 = vmatprep.subr.mxu0 0.0
    %2002 = vmatpush2.msra.mxu0 0.0
    %2003 = vmatprep.subr.mxu0 0.0
    %2004 = vmatpush2.msra.mxu0 0.0
    %2005 = vmatprep.subr.mxu0 0.0
    %2006 = vmatpush2.msra.mxu0 0.0
    %2007 = vmatprep.subr.mxu0 0.0
    %2008 = vmatpush2.msra.mxu0 0.0
    %2009 = vmatprep.subr.mxu0 0.0
    %2010 = vmatpush2.msra.mxu0 0.0
    %2011 = vmatprep.subr.mxu0 0.0
    %2012 = vmatpush2.msra.mxu0 0.0
    %2013 = vmatprep.subr.mxu0 0.0
    %2014 = vmatpush2.msra.mxu0 0.0
    %2015 = vmatprep.subr.mxu0 0.0
    %2016 = vmatpush2.msra.mxu0 0.0
    %2017 = vmatprep.subr.mxu0 0.0
    %2018 = vmatpush2.msra.mxu0 0.0
    %2019 = vmatprep.mubr.f32.mxu0 0.0
    %2020 = vmatmul.mubr.f32.gmra.mxu0 %v1953
    %v2021 = vpop.f32.mrf.mxu0
    %v2022 = vadd.f32 0.0, %v2021
    %v2023 = vpop.f32.mrf.mxu0
    %2024 = vdwg.mxu0
    %2027 = vrot.lane.b32.xlu0 %v1511, 16
    %v2028 = vpop.permute.xlu0 %2027
    %2029 = vrot.lane.b32.xlu0 %v1584, 16
    %v2030 = vpop.permute.xlu0 %2029
    %2035 = vrot.lane.b32.xlu0 %v1657, 32
    %v2036 = vpop.permute.xlu0 %2035
    %2037 = vrot.lane.b32.xlu0 %v1730, 32
    %v2038 = vpop.permute.xlu0 %2037
    %2043 = vrot.lane.b32.xlu0 %v1803, 48
    %v2044 = vpop.permute.xlu0 %2043
    %2045 = vrot.lane.b32.xlu0 %v1876, 48
    %v2046 = vpop.permute.xlu0 %2045
    %2051 = vrot.lane.b32.xlu0 %v1949, 64
    %v2052 = vpop.permute.xlu0 %2051
    %2053 = vrot.lane.b32.xlu0 %v2022, 64
    %v2054 = vpop.permute.xlu0 %2053
    %v2057 = vsel %vm443, %v1365, %v2028
    %v2058 = vsel %vm443, %v1438, %v2030
    %vm2059 = vcmask 261120
    %v2060 = vsel %vm2059, %v2057, %v2036
    %v2061 = vsel %vm2059, %v2058, %v2038
    %vm2062 = vcmask 392192
    %v2063 = vsel %vm2062, %v2060, %v2044
    %v2064 = vsel %vm2062, %v2061, %v2046
    %vm2065 = vcmask 523264
    %v2066 = vsel %vm2065, %v2063, %v2052
    %v2067 = vsel %vm2065, %v2064, %v2054
    %v2068 = vld [vmem:[%s5] sm:$0xff]
    %v2069 = vld [vmem:[%s5 + $0x8] sm:$0xff]
    %v2070 = vld [vmem:[%s5 + $0x10] sm:$0xff]
    %v2071 = vld [vmem:[%s5 + $0x18] sm:$0xff]
    %v2072 = vld [vmem:[%s5 + $0x20] sm:$0xff]
    %v2073 = vld [vmem:[%s5 + $0x28] sm:$0xff]
    %v2074 = vld [vmem:[%s5 + $0x30] sm:$0xff]
    %v2075 = vld [vmem:[%s5 + $0x38] sm:$0xff]
    %v2076 = vld [vmem:[%s5 + $0x40] sm:$0xff]
    %v2077 = vld [vmem:[%s5 + $0x48] sm:$0xff]
    %v2078 = vlaneseq
    %v2079 = vshrl.u32 %v2078, 7
    %v2080 = vsub.s32 0, %v2079
    %v2081 = vrot.slane %v103, %v2080
    %vm2082 = vcmask 654336
    %v2084 = vsel %vm2082, %v2066, 0
    %v2087 = vsel %vm2082, %v2067, 0
    %2089 = vmatprep.subr.mxu0 0.0
    %2090 = vmatpush1.msra.mxu0 0.0
    %2091 = vmatprep.subr.mxu0 0.0
    %2092 = vmatpush1.msra.mxu0 0.0
    %2093 = vmatprep.subr.mxu0 0.0
    %2094 = vmatpush1.msra.mxu0 0.0
    %2095 = vmatprep.subr.mxu0 0.0
    %2096 = vmatpush1.msra.mxu0 0.0
    %2097 = vmatprep.subr.mxu0 0.0
    %2098 = vmatpush1.msra.mxu0 0.0
    %2099 = vmatprep.subr.mxu0 0.0
    %2100 = vmatpush1.msra.mxu0 0.0
    %2101 = vmatprep.subr.mxu0 0.0
    %2102 = vmatpush1.msra.mxu0 %v2077
    %2103 = vmatprep.subr.mxu0 0.0
    %2104 = vmatpush1.msra.mxu0 %v2076
    %2105 = vmatprep.subr.mxu0 0.0
    %2106 = vmatpush1.msra.mxu0 %v2075
    %2107 = vmatprep.subr.mxu0 0.0
    %2108 = vmatpush1.msra.mxu0 %v2074
    %2109 = vmatprep.subr.mxu0 0.0
    %2110 = vmatpush1.msra.mxu0 %v2073
    %2111 = vmatprep.subr.mxu0 0.0
    %2112 = vmatpush1.msra.mxu0 %v2072
    %2113 = vmatprep.subr.mxu0 0.0
    %2114 = vmatpush1.msra.mxu0 %v2071
    %2115 = vmatprep.subr.mxu0 0.0
    %2116 = vmatpush1.msra.mxu0 %v2070
    %2117 = vmatprep.subr.mxu0 0.0
    %2118 = vmatpush1.msra.mxu0 %v2069
    %2119 = vmatprep.subr.mxu0 0.0
    %2120 = vmatpush1.msra.mxu0 %v2068
    %2121 = vmatprep.subr.mxu0 0.0
    %2122 = vmatpush2.msra.mxu0 0.0
    %2123 = vmatprep.subr.mxu0 0.0
    %2124 = vmatpush2.msra.mxu0 0.0
    %2125 = vmatprep.subr.mxu0 0.0
    %2126 = vmatpush2.msra.mxu0 0.0
    %2127 = vmatprep.subr.mxu0 0.0
    %2128 = vmatpush2.msra.mxu0 0.0
    %2129 = vmatprep.subr.mxu0 0.0
    %2130 = vmatpush2.msra.mxu0 0.0
    %2131 = vmatprep.subr.mxu0 0.0
    %2132 = vmatpush2.msra.mxu0 0.0
    %2133 = vmatprep.subr.mxu0 0.0
    %2134 = vmatpush2.msra.mxu0 0.0
    %2135 = vmatprep.subr.mxu0 0.0
    %2136 = vmatpush2.msra.mxu0 0.0
    %2137 = vmatprep.subr.mxu0 0.0
    %2138 = vmatpush2.msra.mxu0 0.0
    %2139 = vmatprep.subr.mxu0 0.0
    %2140 = vmatpush2.msra.mxu0 0.0
    %2141 = vmatprep.subr.mxu0 0.0
    %2142 = vmatpush2.msra.mxu0 0.0
    %2143 = vmatprep.subr.mxu0 0.0
    %2144 = vmatpush2.msra.mxu0 0.0
    %2145 = vmatprep.subr.mxu0 0.0
    %2146 = vmatpush2.msra.mxu0 0.0
    %2147 = vmatprep.subr.mxu0 0.0
    %2148 = vmatpush2.msra.mxu0 0.0
    %2149 = vmatprep.subr.mxu0 0.0
    %2150 = vmatpush2.msra.mxu0 0.0
    %2151 = vmatprep.subr.mxu0 0.0
    %2152 = vmatpush2.msra.mxu0 0.0
    %2153 = vmatprep.mubr.f32.mxu0 0.0
    %2154 = vmatmul.mubr.f32.gmra.mxu0 %v2084
    %v2155 = vpop.f32.mrf.mxu0
    %v2156 = vadd.f32 %v2081, %v2155
    %v2157 = vpop.f32.mrf.mxu0
    %2158 = vmatprep.mubr.f32.mxu0 0.0
    %2159 = vmatmul.mubr.f32.gmra.mxu0 %v2087
    %v2160 = vpop.f32.mrf.mxu0
    %v2161 = vadd.f32 %v2081, %v2160
    %v2162 = vpop.f32.mrf.mxu0
    %2163 = vdwg.mxu0
    %v2164 = vadd.f32 %v96, %v2156
    %v2165 = vadd.f32 %v97, %v2161
    %v2167 = vsel %vm119, %v2164, 0
    %v2170 = vsel %vm119, %v2165, 0
    %v2173 = vsel %vm126, %v102, 0
    %2175 = vmatprep.subr.mxu0 0.0
    %2176 = vmatpush1.msra.mxu0 0.0
    %2177 = vmatprep.subr.mxu0 0.0
    %2178 = vmatpush1.msra.mxu0 0.0
    %2179 = vmatprep.subr.mxu0 0.0
    %2180 = vmatpush1.msra.mxu0 0.0
    %2181 = vmatprep.subr.mxu0 0.0
    %2182 = vmatpush1.msra.mxu0 0.0
    %2183 = vmatprep.subr.mxu0 0.0
    %2184 = vmatpush1.msra.mxu0 0.0
    %2185 = vmatprep.subr.mxu0 0.0
    %2186 = vmatpush1.msra.mxu0 0.0
    %2187 = vmatprep.subr.mxu0 0.0
    %2188 = vmatpush1.msra.mxu0 0.0
    %2189 = vmatprep.subr.mxu0 0.0
    %2190 = vmatpush1.msra.mxu0 0.0
    %2191 = vmatprep.subr.mxu0 0.0
    %2192 = vmatpush1.msra.mxu0 0.0
    %2193 = vmatprep.subr.mxu0 0.0
    %2194 = vmatpush1.msra.mxu0 0.0
    %2195 = vmatprep.subr.mxu0 0.0
    %2196 = vmatpush1.msra.mxu0 0.0
    %2197 = vmatprep.subr.mxu0 0.0
    %2198 = vmatpush1.msra.mxu0 %v2173
    %2199 = vmatprep.subr.mxu0 0.0
    %2200 = vmatpush1.msra.mxu0 %v101
    %2201 = vmatprep.subr.mxu0 0.0
    %2202 = vmatpush1.msra.mxu0 %v100
    %2203 = vmatprep.subr.mxu0 0.0
    %2204 = vmatpush1.msra.mxu0 %v99
    %2205 = vmatprep.subr.mxu0 0.0
    %2206 = vmatpush1.msra.mxu0 %v98
    %2207 = vmatprep.subr.mxu0 0.0
    %2208 = vmatpush2.msra.mxu0 0.0
    %2209 = vmatprep.subr.mxu0 0.0
    %2210 = vmatpush2.msra.mxu0 0.0
    %2211 = vmatprep.subr.mxu0 0.0
    %2212 = vmatpush2.msra.mxu0 0.0
    %2213 = vmatprep.subr.mxu0 0.0
    %2214 = vmatpush2.msra.mxu0 0.0
    %2215 = vmatprep.subr.mxu0 0.0
    %2216 = vmatpush2.msra.mxu0 0.0
    %2217 = vmatprep.subr.mxu0 0.0
    %2218 = vmatpush2.msra.mxu0 0.0
    %2219 = vmatprep.subr.mxu0 0.0
    %2220 = vmatpush2.msra.mxu0 0.0
    %2221 = vmatprep.subr.mxu0 0.0
    %2222 = vmatpush2.msra.mxu0 0.0
    %2223 = vmatprep.subr.mxu0 0.0
    %2224 = vmatpush2.msra.mxu0 0.0
    %2225 = vmatprep.subr.mxu0 0.0
    %2226 = vmatpush2.msra.mxu0 0.0
    %2227 = vmatprep.subr.mxu0 0.0
    %2228 = vmatpush2.msra.mxu0 0.0
    %2229 = vmatprep.subr.mxu0 0.0
    %2230 = vmatpush2.msra.mxu0 0.0
    %2231 = vmatprep.subr.mxu0 0.0
    %2232 = vmatpush2.msra.mxu0 0.0
    %2233 = vmatprep.subr.mxu0 0.0
    %2234 = vmatpush2.msra.mxu0 0.0
    %2235 = vmatprep.subr.mxu0 0.0
    %2236 = vmatpush2.msra.mxu0 0.0
    %2237 = vmatprep.subr.mxu0 0.0
    %2238 = vmatpush2.msra.mxu0 0.0
    %2239 = vmatprep.mubr.f32.mxu0 0.0
    %2240 = vmatmul.mubr.f32.gmra.mxu0 %v2167
    %v2241 = vpop.f32.mrf.mxu0
    %v2242 = vadd.f32 0.0, %v2241
    %v2243 = vpop.f32.mrf.mxu0
    %2244 = vmatprep.mubr.f32.mxu0 0.0
    %2245 = vmatmul.mubr.f32.gmra.mxu0 %v2170
    %v2246 = vpop.f32.mrf.mxu0
    %v2247 = vadd.f32 0.0, %v2246
    %v2248 = vpop.f32.mrf.mxu0
    %2249 = vdwg.mxu0
    %v2250 = vsub.f32 %v2164, %v2242
    %v2251 = vsub.f32 %v2165, %v2247
    %v2252 = vmul.f32 %v2250, %v2250
    %v2253 = vmul.f32 %v2251, %v2251
    %v2255 = vsel %vm119, %v2252, 0
    %v2258 = vsel %vm119, %v2253, 0
    %2260 = vmatprep.subr.mxu0 0.0
    %2261 = vmatpush1.msra.mxu0 0.0
    %2262 = vmatprep.subr.mxu0 0.0
    %2263 = vmatpush1.msra.mxu0 0.0
    %2264 = vmatprep.subr.mxu0 0.0
    %2265 = vmatpush1.msra.mxu0 0.0
    %2266 = vmatprep.subr.mxu0 0.0
    %2267 = vmatpush1.msra.mxu0 0.0
    %2268 = vmatprep.subr.mxu0 0.0
    %2269 = vmatpush1.msra.mxu0 0.0
    %2270 = vmatprep.subr.mxu0 0.0
    %2271 = vmatpush1.msra.mxu0 0.0
    %2272 = vmatprep.subr.mxu0 0.0
    %2273 = vmatpush1.msra.mxu0 0.0
    %2274 = vmatprep.subr.mxu0 0.0
    %2275 = vmatpush1.msra.mxu0 0.0
    %2276 = vmatprep.subr.mxu0 0.0
    %2277 = vmatpush1.msra.mxu0 0.0
    %2278 = vmatprep.subr.mxu0 0.0
    %2279 = vmatpush1.msra.mxu0 0.0
    %2280 = vmatprep.subr.mxu0 0.0
    %2281 = vmatpush1.msra.mxu0 0.0
    %2282 = vmatprep.subr.mxu0 0.0
    %2283 = vmatpush1.msra.mxu0 %v2173
    %2284 = vmatprep.subr.mxu0 0.0
    %2285 = vmatpush1.msra.mxu0 %v101
    %2286 = vmatprep.subr.mxu0 0.0
    %2287 = vmatpush1.msra.mxu0 %v100
    %2288 = vmatprep.subr.mxu0 0.0
    %2289 = vmatpush1.msra.mxu0 %v99
    %2290 = vmatprep.subr.mxu0 0.0
    %2291 = vmatpush1.msra.mxu0 %v98
    %2292 = vmatprep.subr.mxu0 0.0
    %2293 = vmatpush2.msra.mxu0 0.0
    %2294 = vmatprep.subr.mxu0 0.0
    %2295 = vmatpush2.msra.mxu0 0.0
    %2296 = vmatprep.subr.mxu0 0.0
    %2297 = vmatpush2.msra.mxu0 0.0
    %2298 = vmatprep.subr.mxu0 0.0
    %2299 = vmatpush2.msra.mxu0 0.0
    %2300 = vmatprep.subr.mxu0 0.0
    %2301 = vmatpush2.msra.mxu0 0.0
    %2302 = vmatprep.subr.mxu0 0.0
    %2303 = vmatpush2.msra.mxu0 0.0
    %2304 = vmatprep.subr.mxu0 0.0
    %2305 = vmatpush2.msra.mxu0 0.0
    %2306 = vmatprep.subr.mxu0 0.0
    %2307 = vmatpush2.msra.mxu0 0.0
    %2308 = vmatprep.subr.mxu0 0.0
    %2309 = vmatpush2.msra.mxu0 0.0
    %2310 = vmatprep.subr.mxu0 0.0
    %2311 = vmatpush2.msra.mxu0 0.0
    %2312 = vmatprep.subr.mxu0 0.0
    %2313 = vmatpush2.msra.mxu0 0.0
    %2314 = vmatprep.subr.mxu0 0.0
    %2315 = vmatpush2.msra.mxu0 0.0
    %2316 = vmatprep.subr.mxu0 0.0
    %2317 = vmatpush2.msra.mxu0 0.0
    %2318 = vmatprep.subr.mxu0 0.0
    %2319 = vmatpush2.msra.mxu0 0.0
    %2320 = vmatprep.subr.mxu0 0.0
    %2321 = vmatpush2.msra.mxu0 0.0
    %2322 = vmatprep.subr.mxu0 0.0
    %2323 = vmatpush2.msra.mxu0 0.0
    %2324 = vmatprep.mubr.f32.mxu0 0.0
    %2325 = vmatmul.mubr.f32.gmra.mxu0 %v2255
    %v2326 = vpop.f32.mrf.mxu0
    %v2327 = vadd.f32 1e-05, %v2326
    %v2328 = vpop.f32.mrf.mxu0
    %2329 = vmatprep.mubr.f32.mxu0 0.0
    %2330 = vmatmul.mubr.f32.gmra.mxu0 %v2258
    %v2331 = vpop.f32.mrf.mxu0
    %v2332 = vadd.f32 1e-05, %v2331
    %v2333 = vpop.f32.mrf.mxu0
    %2334 = vdwg.mxu0
    %v2335 = vrsqrt.pop %v2327
    %v2336 = vrsqrt.pop %v2332
    %v2337 = vmul.f32 %v2250, %v2335
    %v2338 = vmul.f32 %v2251, %v2336
    %v2339 = vlaneseq
    %v2340 = vshrl.u32 %v2339, 7
    %v2341 = vsub.s32 0, %v2340
    %v2342 = vrot.slane %v104, %v2341
    %v2343 = vmul.f32 %v2337, %v2342
    %v2344 = vmul.f32 %v2338, %v2342
    %v2345 = vlaneseq
    %v2346 = vshrl.u32 %v2345, 7
    %v2347 = vsub.s32 0, %v2346
    %v2348 = vrot.slane %v105, %v2347
    %v2349 = vadd.f32 %v2343, %v2348
    %v2350 = vadd.f32 %v2344, %v2348
    %v2351 = vld [vmem:[%s8] sm:$0xff]
    %v2352 = vld [vmem:[%s8 + $0x8] sm:$0xff]
    %v2353 = vld [vmem:[%s8 + $0x10] sm:$0xff]
    %v2354 = vld [vmem:[%s8 + $0x18] sm:$0xff]
    %v2355 = vld [vmem:[%s8 + $0x20] sm:$0xff]
    %v2356 = vld [vmem:[%s8 + $0x28] sm:$0xff]
    %v2357 = vld [vmem:[%s8 + $0x30] sm:$0xff]
    %v2358 = vld [vmem:[%s8 + $0x38] sm:$0xff]
    %v2359 = vld [vmem:[%s8 + $0x40] sm:$0x1]
    %v2360 = vld [vmem:[%s8 + $0x48] sm:$0x1]
    %v2361 = vld [vmem:[%s9] sm:$0x3]
    %v2363 = vlaneseq
    %v2364 = vshrl.u32 %v2363, 7
    %v2365 = vsub.s32 0, %v2364
    %v2366 = vrot.slane %v2361, %v2365
    %v2367 = vlaneseq
    %v2368 = vshrl.u32 %v2367, 7
    %v2369 = vsub.s32 1, %v2368
    %v2370 = vrot.slane %v2361, %v2369
    %v2374 = vsel %vm119, %v2349, 0
    %v2377 = vsel %vm119, %v2350, 0
    %v2380 = vsel %vm126, %v2359, 0
    %v2383 = vsel %vm126, %v2360, 0
    %2385 = vmatprep.subr.mxu0 0.0
    %2386 = vmatpush1.msra.mxu0 0.0
    %2387 = vmatprep.subr.mxu0 0.0
    %2388 = vmatpush1.msra.mxu0 0.0
    %2389 = vmatprep.subr.mxu0 0.0
    %2390 = vmatpush1.msra.mxu0 0.0
    %2391 = vmatprep.subr.mxu0 0.0
    %2392 = vmatpush1.msra.mxu0 0.0
    %2393 = vmatprep.subr.mxu0 0.0
    %2394 = vmatpush1.msra.mxu0 0.0
    %2395 = vmatprep.subr.mxu0 0.0
    %2396 = vmatpush1.msra.mxu0 0.0
    %2397 = vmatprep.subr.mxu0 0.0
    %2398 = vmatpush1.msra.mxu0 0.0
    %2399 = vmatprep.subr.mxu0 0.0
    %2400 = vmatpush1.msra.mxu0 0.0
    %2401 = vmatprep.subr.mxu0 0.0
    %2402 = vmatpush1.msra.mxu0 0.0
    %2403 = vmatprep.subr.mxu0 0.0
    %2404 = vmatpush1.msra.mxu0 0.0
    %2405 = vmatprep.subr.mxu0 0.0
    %2406 = vmatpush1.msra.mxu0 0.0
    %2407 = vmatprep.subr.mxu0 %v2383
    %2408 = vmatpush1.msra.mxu0 %v2380
    %2409 = vmatprep.subr.mxu0 %v2358
    %2410 = vmatpush1.msra.mxu0 %v2357
    %2411 = vmatprep.subr.mxu0 %v2356
    %2412 = vmatpush1.msra.mxu0 %v2355
    %2413 = vmatprep.subr.mxu0 %v2354
    %2414 = vmatpush1.msra.mxu0 %v2353
    %2415 = vmatprep.subr.mxu0 %v2352
    %2416 = vmatpush1.msra.mxu0 %v2351
    %2417 = vmatprep.subr.mxu0 0.0
    %2418 = vmatpush2.msra.mxu0 0.0
    %2419 = vmatprep.subr.mxu0 0.0
    %2420 = vmatpush2.msra.mxu0 0.0
    %2421 = vmatprep.subr.mxu0 0.0
    %2422 = vmatpush2.msra.mxu0 0.0
    %2423 = vmatprep.subr.mxu0 0.0
    %2424 = vmatpush2.msra.mxu0 0.0
    %2425 = vmatprep.subr.mxu0 0.0
    %2426 = vmatpush2.msra.mxu0 0.0
    %2427 = vmatprep.subr.mxu0 0.0
    %2428 = vmatpush2.msra.mxu0 0.0
    %2429 = vmatprep.subr.mxu0 0.0
    %2430 = vmatpush2.msra.mxu0 0.0
    %2431 = vmatprep.subr.mxu0 0.0
    %2432 = vmatpush2.msra.mxu0 0.0
    %2433 = vmatprep.subr.mxu0 0.0
    %2434 = vmatpush2.msra.mxu0 0.0
    %2435 = vmatprep.subr.mxu0 0.0
    %2436 = vmatpush2.msra.mxu0 0.0
    %2437 = vmatprep.subr.mxu0 0.0
    %2438 = vmatpush2.msra.mxu0 0.0
    %2439 = vmatprep.subr.mxu0 0.0
    %2440 = vmatpush2.msra.mxu0 0.0
    %2441 = vmatprep.subr.mxu0 0.0
    %2442 = vmatpush2.msra.mxu0 0.0
    %2443 = vmatprep.subr.mxu0 0.0
    %2444 = vmatpush2.msra.mxu0 0.0
    %2445 = vmatprep.subr.mxu0 0.0
    %2446 = vmatpush2.msra.mxu0 0.0
    %2447 = vmatprep.subr.mxu0 0.0
    %2448 = vmatpush2.msra.mxu0 0.0
    %2449 = vmatprep.mubr.f32.mxu0 0.0
    %2450 = vmatmul.mubr.f32.gmra.mxu0 %v2374
    %v2451 = vpop.f32.mrf.mxu0
    %v2452 = vadd.f32 %v2366, %v2451
    %v2453 = vpop.f32.mrf.mxu0
    %v2454 = vadd.f32 %v2370, %v2453
    %2455 = vmatprep.mubr.f32.mxu0 0.0
    %2456 = vmatmul.mubr.f32.gmra.mxu0 %v2377
    %v2457 = vpop.f32.mrf.mxu0
    %v2458 = vadd.f32 %v2366, %v2457
    %v2459 = vpop.f32.mrf.mxu0
    %v2460 = vadd.f32 %v2370, %v2459
    %2461 = vdwg.mxu0
    %v2462 = vmax.f32 %v2452, 0.0
    %v2463 = vmax.f32 %v2454, 0.0
    %v2464 = vmax.f32 %v2458, 0.0
    %v2465 = vmax.f32 %v2460, 0.0
    %v2466 = vld [vmem:[%s10] sm:$0xff]
    %v2467 = vld [vmem:[%s10 + $0x8] sm:$0xff]
    %v2468 = vld [vmem:[%s10 + $0x10] sm:$0xff]
    %v2469 = vld [vmem:[%s10 + $0x18] sm:$0xff]
    %v2470 = vld [vmem:[%s10 + $0x20] sm:$0xff]
    %v2471 = vld [vmem:[%s10 + $0x28] sm:$0xff]
    %v2472 = vld [vmem:[%s10 + $0x30] sm:$0xff]
    %v2473 = vld [vmem:[%s10 + $0x38] sm:$0xff]
    %v2474 = vld [vmem:[%s10 + $0x40] sm:$0xff]
    %v2475 = vld [vmem:[%s10 + $0x48] sm:$0xff]
    %v2476 = vld [vmem:[%s10 + $0x50] sm:$0xff]
    %v2477 = vld [vmem:[%s10 + $0x58] sm:$0xff]
    %v2478 = vld [vmem:[%s10 + $0x60] sm:$0xff]
    %v2479 = vld [vmem:[%s10 + $0x68] sm:$0xff]
    %v2480 = vld [vmem:[%s10 + $0x70] sm:$0xff]
    %v2481 = vld [vmem:[%s10 + $0x78] sm:$0xff]
    %v2482 = vld [vmem:[%s10 + $0x80] sm:$0xff]
    %v2483 = vld [vmem:[%s10 + $0x88] sm:$0xff]
    %v2484 = vld [vmem:[%s10 + $0x90] sm:$0xff]
    %v2485 = vld [vmem:[%s10 + $0x98] sm:$0xff]
    %v2486 = vlaneseq
    %v2487 = vshrl.u32 %v2486, 7
    %v2488 = vsub.s32 0, %v2487
    %v2489 = vrot.slane %v106, %v2488
    %v2491 = vsel %vm2059, %v2463, 0
    %v2494 = vsel %vm2059, %v2465, 0
    %2496 = vmatprep.subr.mxu0 0.0
    %2497 = vmatpush1.msra.mxu0 %v2481
    %2498 = vmatprep.subr.mxu0 0.0
    %2499 = vmatpush1.msra.mxu0 %v2480
    %2500 = vmatprep.subr.mxu0 0.0
    %2501 = vmatpush1.msra.mxu0 %v2479
    %2502 = vmatprep.subr.mxu0 0.0
    %2503 = vmatpush1.msra.mxu0 %v2478
    %2504 = vmatprep.subr.mxu0 0.0
    %2505 = vmatpush1.msra.mxu0 %v2477
    %2506 = vmatprep.subr.mxu0 0.0
    %2507 = vmatpush1.msra.mxu0 %v2476
    %2508 = vmatprep.subr.mxu0 0.0
    %2509 = vmatpush1.msra.mxu0 %v2475
    %2510 = vmatprep.subr.mxu0 0.0
    %2511 = vmatpush1.msra.mxu0 %v2474
    %2512 = vmatprep.subr.mxu0 0.0
    %2513 = vmatpush1.msra.mxu0 %v2473
    %2514 = vmatprep.subr.mxu0 0.0
    %2515 = vmatpush1.msra.mxu0 %v2472
    %2516 = vmatprep.subr.mxu0 0.0
    %2517 = vmatpush1.msra.mxu0 %v2471
    %2518 = vmatprep.subr.mxu0 0.0
    %2519 = vmatpush1.msra.mxu0 %v2470
    %2520 = vmatprep.subr.mxu0 0.0
    %2521 = vmatpush1.msra.mxu0 %v2469
    %2522 = vmatprep.subr.mxu0 0.0
    %2523 = vmatpush1.msra.mxu0 %v2468
    %2524 = vmatprep.subr.mxu0 0.0
    %2525 = vmatpush1.msra.mxu0 %v2467
    %2526 = vmatprep.subr.mxu0 0.0
    %2527 = vmatpush1.msra.mxu0 %v2466
    %2528 = vmatprep.subr.mxu0 0.0
    %2529 = vmatpush2.msra.mxu0 0.0
    %2530 = vmatprep.subr.mxu0 0.0
    %2531 = vmatpush2.msra.mxu0 0.0
    %2532 = vmatprep.subr.mxu0 0.0
    %2533 = vmatpush2.msra.mxu0 0.0
    %2534 = vmatprep.subr.mxu0 0.0
    %2535 = vmatpush2.msra.mxu0 0.0
    %2536 = vmatprep.subr.mxu0 0.0
    %2537 = vmatpush2.msra.mxu0 0.0
    %2538 = vmatprep.subr.mxu0 0.0
    %2539 = vmatpush2.msra.mxu0 0.0
    %2540 = vmatprep.subr.mxu0 0.0
    %2541 = vmatpush2.msra.mxu0 0.0
    %2542 = vmatprep.subr.mxu0 0.0
    %2543 = vmatpush2.msra.mxu0 0.0
    %2544 = vmatprep.subr.mxu0 0.0
    %2545 = vmatpush2.msra.mxu0 0.0
    %2546 = vmatprep.subr.mxu0 0.0
    %2547 = vmatpush2.msra.mxu0 0.0
    %2548 = vmatprep.subr.mxu0 0.0
    %2549 = vmatpush2.msra.mxu0 0.0
    %2550 = vmatprep.subr.mxu0 0.0
    %2551 = vmatpush2.msra.mxu0 0.0
    %2552 = vmatprep.subr.mxu0 0.0
    %2553 = vmatpush2.msra.mxu0 %v2485
    %2554 = vmatprep.subr.mxu0 0.0
    %2555 = vmatpush2.msra.mxu0 %v2484
    %2556 = vmatprep.subr.mxu0 0.0
    %2557 = vmatpush2.msra.mxu0 %v2483
    %2558 = vmatprep.subr.mxu0 0.0
    %2559 = vmatpush2.msra.mxu0 %v2482
    %2560 = vmatprep.mubr.f32.mxu0 %v2491
    %2561 = vmatmul.mubr.f32.gmra.mxu0 %v2462
    %v2562 = vpop.f32.mrf.mxu0
    %v2563 = vadd.f32 %v2489, %v2562
    %v2564 = vpop.f32.mrf.mxu0
    %2565 = vmatprep.mubr.f32.mxu0 %v2494
    %2566 = vmatmul.mubr.f32.gmra.mxu0 %v2464
    %v2567 = vpop.f32.mrf.mxu0
    %v2568 = vadd.f32 %v2489, %v2567
    %v2569 = vpop.f32.mrf.mxu0
    %2570 = vdwg.mxu0
    %v2571 = vadd.f32 %v2349, %v2563
    %v2572 = vadd.f32 %v2350, %v2568
    %v2574 = vsel %vm119, %v2571, 0
    %v2577 = vsel %vm119, %v2572, 0
    %2579 = vmatprep.subr.mxu0 0.0
    %2580 = vmatpush1.msra.mxu0 0.0
    %2581 = vmatprep.subr.mxu0 0.0
    %2582 = vmatpush1.msra.mxu0 0.0
    %2583 = vmatprep.subr.mxu0 0.0
    %2584 = vmatpush1.msra.mxu0 0.0
    %2585 = vmatprep.subr.mxu0 0.0
    %2586 = vmatpush1.msra.mxu0 0.0
    %2587 = vmatprep.subr.mxu0 0.0
    %2588 = vmatpush1.msra.mxu0 0.0
    %2589 = vmatprep.subr.mxu0 0.0
    %2590 = vmatpush1.msra.mxu0 0.0
    %2591 = vmatprep.subr.mxu0 0.0
    %2592 = vmatpush1.msra.mxu0 0.0
    %2593 = vmatprep.subr.mxu0 0.0
    %2594 = vmatpush1.msra.mxu0 0.0
    %2595 = vmatprep.subr.mxu0 0.0
    %2596 = vmatpush1.msra.mxu0 0.0
    %2597 = vmatprep.subr.mxu0 0.0
    %2598 = vmatpush1.msra.mxu0 0.0
    %2599 = vmatprep.subr.mxu0 0.0
    %2600 = vmatpush1.msra.mxu0 0.0
    %2601 = vmatprep.subr.mxu0 0.0
    %2602 = vmatpush1.msra.mxu0 %v2173
    %2603 = vmatprep.subr.mxu0 0.0
    %2604 = vmatpush1.msra.mxu0 %v101
    %2605 = vmatprep.subr.mxu0 0.0
    %2606 = vmatpush1.msra.mxu0 %v100
    %2607 = vmatprep.subr.mxu0 0.0
    %2608 = vmatpush1.msra.mxu0 %v99
    %2609 = vmatprep.subr.mxu0 0.0
    %2610 = vmatpush1.msra.mxu0 %v98
    %2611 = vmatprep.subr.mxu0 0.0
    %2612 = vmatpush2.msra.mxu0 0.0
    %2613 = vmatprep.subr.mxu0 0.0
    %2614 = vmatpush2.msra.mxu0 0.0
    %2615 = vmatprep.subr.mxu0 0.0
    %2616 = vmatpush2.msra.mxu0 0.0
    %2617 = vmatprep.subr.mxu0 0.0
    %2618 = vmatpush2.msra.mxu0 0.0
    %2619 = vmatprep.subr.mxu0 0.0
    %2620 = vmatpush2.msra.mxu0 0.0
    %2621 = vmatprep.subr.mxu0 0.0
    %2622 = vmatpush2.msra.mxu0 0.0
    %2623 = vmatprep.subr.mxu0 0.0
    %2624 = vmatpush2.msra.mxu0 0.0
    %2625 = vmatprep.subr.mxu0 0.0
    %2626 = vmatpush2.msra.mxu0 0.0
    %2627 = vmatprep.subr.mxu0 0.0
    %2628 = vmatpush2.msra.mxu0 0.0
    %2629 = vmatprep.subr.mxu0 0.0
    %2630 = vmatpush2.msra.mxu0 0.0
    %2631 = vmatprep.subr.mxu0 0.0
    %2632 = vmatpush2.msra.mxu0 0.0
    %2633 = vmatprep.subr.mxu0 0.0
    %2634 = vmatpush2.msra.mxu0 0.0
    %2635 = vmatprep.subr.mxu0 0.0
    %2636 = vmatpush2.msra.mxu0 0.0
    %2637 = vmatprep.subr.mxu0 0.0
    %2638 = vmatpush2.msra.mxu0 0.0
    %2639 = vmatprep.subr.mxu0 0.0
    %2640 = vmatpush2.msra.mxu0 0.0
    %2641 = vmatprep.subr.mxu0 0.0
    %2642 = vmatpush2.msra.mxu0 0.0
    %2643 = vmatprep.mubr.f32.mxu0 0.0
    %2644 = vmatmul.mubr.f32.gmra.mxu0 %v2574
    %v2645 = vpop.f32.mrf.mxu0
    %v2646 = vadd.f32 0.0, %v2645
    %v2647 = vpop.f32.mrf.mxu0
    %2648 = vmatprep.mubr.f32.mxu0 0.0
    %2649 = vmatmul.mubr.f32.gmra.mxu0 %v2577
    %v2650 = vpop.f32.mrf.mxu0
    %v2651 = vadd.f32 0.0, %v2650
    %v2652 = vpop.f32.mrf.mxu0
    %2653 = vdwg.mxu0
    %v2654 = vsub.f32 %v2571, %v2646
    %v2655 = vsub.f32 %v2572, %v2651
    %v2656 = vmul.f32 %v2654, %v2654
    %v2657 = vmul.f32 %v2655, %v2655
    %v2659 = vsel %vm119, %v2656, 0
    %v2662 = vsel %vm119, %v2657, 0
    %2664 = vmatprep.subr.mxu0 0.0
    %2665 = vmatpush1.msra.mxu0 0.0
    %2666 = vmatprep.subr.mxu0 0.0
    %2667 = vmatpush1.msra.mxu0 0.0
    %2668 = vmatprep.subr.mxu0 0.0
    %2669 = vmatpush1.msra.mxu0 0.0
    %2670 = vmatprep.subr.mxu0 0.0
    %2671 = vmatpush1.msra.mxu0 0.0
    %2672 = vmatprep.subr.mxu0 0.0
    %2673 = vmatpush1.msra.mxu0 0.0
    %2674 = vmatprep.subr.mxu0 0.0
    %2675 = vmatpush1.msra.mxu0 0.0
    %2676 = vmatprep.subr.mxu0 0.0
    %2677 = vmatpush1.msra.mxu0 0.0
    %2678 = vmatprep.subr.mxu0 0.0
    %2679 = vmatpush1.msra.mxu0 0.0
    %2680 = vmatprep.subr.mxu0 0.0
    %2681 = vmatpush1.msra.mxu0 0.0
    %2682 = vmatprep.subr.mxu0 0.0
    %2683 = vmatpush1.msra.mxu0 0.0
    %2684 = vmatprep.subr.mxu0 0.0
    %2685 = vmatpush1.msra.mxu0 0.0
    %2686 = vmatprep.subr.mxu0 0.0
    %2687 = vmatpush1.msra.mxu0 %v2173
    %2688 = vmatprep.subr.mxu0 0.0
    %2689 = vmatpush1.msra.mxu0 %v101
    %2690 = vmatprep.subr.mxu0 0.0
    %2691 = vmatpush1.msra.mxu0 %v100
    %2692 = vmatprep.subr.mxu0 0.0
    %2693 = vmatpush1.msra.mxu0 %v99
    %2694 = vmatprep.subr.mxu0 0.0
    %2695 = vmatpush1.msra.mxu0 %v98
    %2696 = vmatprep.subr.mxu0 0.0
    %2697 = vmatpush2.msra.mxu0 0.0
    %2698 = vmatprep.subr.mxu0 0.0
    %2699 = vmatpush2.msra.mxu0 0.0
    %2700 = vmatprep.subr.mxu0 0.0
    %2701 = vmatpush2.msra.mxu0 0.0
    %2702 = vmatprep.subr.mxu0 0.0
    %2703 = vmatpush2.msra.mxu0 0.0
    %2704 = vmatprep.subr.mxu0 0.0
    %2705 = vmatpush2.msra.mxu0 0.0
    %2706 = vmatprep.subr.mxu0 0.0
    %2707 = vmatpush2.msra.mxu0 0.0
    %2708 = vmatprep.subr.mxu0 0.0
    %2709 = vmatpush2.msra.mxu0 0.0
    %2710 = vmatprep.subr.mxu0 0.0
    %2711 = vmatpush2.msra.mxu0 0.0
    %2712 = vmatprep.subr.mxu0 0.0
    %2713 = vmatpush2.msra.mxu0 0.0
    %2714 = vmatprep.subr.mxu0 0.0
    %2715 = vmatpush2.msra.mxu0 0.0
    %2716 = vmatprep.subr.mxu0 0.0
    %2717 = vmatpush2.msra.mxu0 0.0
    %2718 = vmatprep.subr.mxu0 0.0
    %2719 = vmatpush2.msra.mxu0 0.0
    %2720 = vmatprep.subr.mxu0 0.0
    %2721 = vmatpush2.msra.mxu0 0.0
    %2722 = vmatprep.subr.mxu0 0.0
    %2723 = vmatpush2.msra.mxu0 0.0
    %2724 = vmatprep.subr.mxu0 0.0
    %2725 = vmatpush2.msra.mxu0 0.0
    %2726 = vmatprep.subr.mxu0 0.0
    %2727 = vmatpush2.msra.mxu0 0.0
    %2728 = vmatprep.mubr.f32.mxu0 0.0
    %2729 = vmatmul.mubr.f32.gmra.mxu0 %v2659
    %v2730 = vpop.f32.mrf.mxu0
    %v2731 = vadd.f32 1e-05, %v2730
    %v2732 = vpop.f32.mrf.mxu0
    %2733 = vmatprep.mubr.f32.mxu0 0.0
    %2734 = vmatmul.mubr.f32.gmra.mxu0 %v2662
    %v2735 = vpop.f32.mrf.mxu0
    %v2736 = vadd.f32 1e-05, %v2735
    %v2737 = vpop.f32.mrf.mxu0
    %2738 = vdwg.mxu0
    %v2739 = vrsqrt.pop %v2731
    %v2740 = vrsqrt.pop %v2736
    %v2741 = vmul.f32 %v2654, %v2739
    %v2742 = vmul.f32 %v2655, %v2740
    %v2743 = vlaneseq
    %v2744 = vshrl.u32 %v2743, 7
    %v2745 = vsub.s32 0, %v2744
    %v2746 = vrot.slane %v107, %v2745
    %v2747 = vmul.f32 %v2741, %v2746
    %v2748 = vmul.f32 %v2742, %v2746
    %v2749 = vlaneseq
    %v2750 = vshrl.u32 %v2749, 7
    %v2751 = vsub.s32 0, %v2750
    %v2752 = vrot.slane %v108, %v2751
    %v2753 = vadd.f32 %v2747, %v2752
    %v2754 = vadd.f32 %v2748, %v2752
    %v2755 = vld [vmem:[%s11] sm:$0xff]
    %v2756 = vld [vmem:[%s11 + $0x8] sm:$0xff]
    %v2757 = vld [vmem:[%s11 + $0x10] sm:$0xff]
    %v2758 = vld [vmem:[%s11 + $0x18] sm:$0xff]
    %v2759 = vld [vmem:[%s11 + $0x20] sm:$0xff]
    %v2760 = vld [vmem:[%s11 + $0x28] sm:$0xff]
    %v2761 = vld [vmem:[%s11 + $0x30] sm:$0xff]
    %v2762 = vld [vmem:[%s11 + $0x38] sm:$0xff]
    %v2763 = vld [vmem:[%s11 + $0x40] sm:$0xff]
    %v2764 = vld [vmem:[%s11 + $0x48] sm:$0xff]
    %v2765 = vld [vmem:[%s11 + $0x50] sm:$0xff]
    %v2766 = vld [vmem:[%s11 + $0x58] sm:$0xff]
    %v2767 = vld [vmem:[%s11 + $0x60] sm:$0x1]
    %v2768 = vld [vmem:[%s11 + $0x68] sm:$0x1]
    %v2769 = vld [vmem:[%s11 + $0x70] sm:$0x1]
    %v2770 = vld [vmem:[%s12] sm:$0x7]
    %v2772 = vlaneseq
    %v2773 = vshrl.u32 %v2772, 7
    %v2774 = vsub.s32 0, %v2773
    %v2775 = vrot.slane %v2770, %v2774
    %v2776 = vlaneseq
    %v2777 = vshrl.u32 %v2776, 7
    %v2778 = vsub.s32 1, %v2777
    %v2779 = vrot.slane %v2770, %v2778
    %v2780 = vlaneseq
    %v2781 = vshrl.u32 %v2780, 7
    %v2782 = vsub.s32 2, %v2781
    %v2783 = vrot.slane %v2770, %v2782
    %v2788 = vsel %vm119, %v2753, 0
    %v2791 = vsel %vm119, %v2754, 0
    %v2794 = vsel %vm126, %v2767, 0
    %v2797 = vsel %vm126, %v2768, 0
    %v2800 = vsel %vm126, %v2769, 0
    %2802 = vmatprep.subr.mxu0 0.0
    %2803 = vmatpush1.msra.mxu0 0.0
    %2804 = vmatprep.subr.mxu0 0.0
    %2805 = vmatpush1.msra.mxu0 0.0
    %2806 = vmatprep.subr.mxu0 0.0
    %2807 = vmatpush1.msra.mxu0 0.0
    %2808 = vmatprep.subr.mxu0 0.0
    %2809 = vmatpush1.msra.mxu0 0.0
    %2810 = vmatprep.subr.mxu0 0.0
    %2811 = vmatpush1.msra.mxu0 0.0
    %2812 = vmatprep.subr.mxu0 0.0
    %2813 = vmatpush1.msra.mxu0 0.0
    %2814 = vmatprep.subr.mxu0 0.0
    %2815 = vmatpush1.msra.mxu0 0.0
    %2816 = vmatprep.subr.mxu0 0.0
    %2817 = vmatpush1.msra.mxu0 0.0
    %2818 = vmatprep.subr.mxu0 0.0
    %2819 = vmatpush1.msra.mxu0 0.0
    %2820 = vmatprep.subr.mxu0 0.0
    %2821 = vmatpush1.msra.mxu0 0.0
    %2822 = vmatprep.subr.mxu0 0.0
    %2823 = vmatpush1.msra.mxu0 0.0
    %2824 = vmatprep.subr.mxu0 %v2797
    %2825 = vmatpush1.msra.mxu0 %v2794
    %2826 = vmatprep.subr.mxu0 %v2765
    %2827 = vmatpush1.msra.mxu0 %v2764
    %2828 = vmatprep.subr.mxu0 %v2762
    %2829 = vmatpush1.msra.mxu0 %v2761
    %2830 = vmatprep.subr.mxu0 %v2759
    %2831 = vmatpush1.msra.mxu0 %v2758
    %2832 = vmatprep.subr.mxu0 %v2756
    %2833 = vmatpush1.msra.mxu0 %v2755
    %2834 = vmatprep.subr.mxu0 0.0
    %2835 = vmatpush2.msra.mxu0 0.0
    %2836 = vmatprep.subr.mxu0 0.0
    %2837 = vmatpush2.msra.mxu0 0.0
    %2838 = vmatprep.subr.mxu0 0.0
    %2839 = vmatpush2.msra.mxu0 0.0
    %2840 = vmatprep.subr.mxu0 0.0
    %2841 = vmatpush2.msra.mxu0 0.0
    %2842 = vmatprep.subr.mxu0 0.0
    %2843 = vmatpush2.msra.mxu0 0.0
    %2844 = vmatprep.subr.mxu0 0.0
    %2845 = vmatpush2.msra.mxu0 0.0
    %2846 = vmatprep.subr.mxu0 0.0
    %2847 = vmatpush2.msra.mxu0 0.0
    %2848 = vmatprep.subr.mxu0 0.0
    %2849 = vmatpush2.msra.mxu0 0.0
    %2850 = vmatprep.subr.mxu0 0.0
    %2851 = vmatpush2.msra.mxu0 0.0
    %2852 = vmatprep.subr.mxu0 0.0
    %2853 = vmatpush2.msra.mxu0 0.0
    %2854 = vmatprep.subr.mxu0 0.0
    %2855 = vmatpush2.msra.mxu0 0.0
    %2856 = vmatprep.subr.mxu0 0.0
    %2857 = vmatpush2.msra.mxu0 0.0
    %2858 = vmatprep.subr.mxu0 0.0
    %2859 = vmatpush2.msra.mxu0 0.0
    %2860 = vmatprep.subr.mxu0 0.0
    %2861 = vmatpush2.msra.mxu0 0.0
    %2862 = vmatprep.subr.mxu0 0.0
    %2863 = vmatpush2.msra.mxu0 0.0
    %2864 = vmatprep.subr.mxu0 0.0
    %2865 = vmatpush2.msra.mxu0 0.0
    %2866 = vmatprep.mubr.f32.mxu0 0.0
    %2867 = vmatmul.mubr.f32.gmra.mxu0 %v2788
    %v2868 = vpop.f32.mrf.mxu0
    %v2869 = vadd.f32 %v2775, %v2868
    %v2870 = vpop.f32.mrf.mxu0
    %v2871 = vadd.f32 %v2779, %v2870
    %2872 = vmatprep.mubr.f32.mxu0 0.0
    %2873 = vmatmul.mubr.f32.gmra.mxu0 %v2791
    %v2874 = vpop.f32.mrf.mxu0
    %v2875 = vadd.f32 %v2775, %v2874
    %v2876 = vpop.f32.mrf.mxu0
    %v2877 = vadd.f32 %v2779, %v2876
    %2878 = vdwg.mxu0
    %2879 = vmatprep.subr.mxu0 0.0
    %2880 = vmatpush1.msra.mxu0 0.0
    %2881 = vmatprep.subr.mxu0 0.0
    %2882 = vmatpush1.msra.mxu0 0.0
    %2883 = vmatprep.subr.mxu0 0.0
    %2884 = vmatpush1.msra.mxu0 0.0
    %2885 = vmatprep.subr.mxu0 0.0
    %2886 = vmatpush1.msra.mxu0 0.0
    %2887 = vmatprep.subr.mxu0 0.0
    %2888 = vmatpush1.msra.mxu0 0.0
    %2889 = vmatprep.subr.mxu0 0.0
    %2890 = vmatpush1.msra.mxu0 0.0
    %2891 = vmatprep.subr.mxu0 0.0
    %2892 = vmatpush1.msra.mxu0 0.0
    %2893 = vmatprep.subr.mxu0 0.0
    %2894 = vmatpush1.msra.mxu0 0.0
    %2895 = vmatprep.subr.mxu0 0.0
    %2896 = vmatpush1.msra.mxu0 0.0
    %2897 = vmatprep.subr.mxu0 0.0
    %2898 = vmatpush1.msra.mxu0 0.0
    %2899 = vmatprep.subr.mxu0 0.0
    %2900 = vmatpush1.msra.mxu0 0.0
    %2901 = vmatprep.subr.mxu0 0.0
    %2902 = vmatpush1.msra.mxu0 %v2800
    %2903 = vmatprep.subr.mxu0 0.0
    %2904 = vmatpush1.msra.mxu0 %v2766
    %2905 = vmatprep.subr.mxu0 0.0
    %2906 = vmatpush1.msra.mxu0 %v2763
    %2907 = vmatprep.subr.mxu0 0.0
    %2908 = vmatpush1.msra.mxu0 %v2760
    %2909 = vmatprep.subr.mxu0 0.0
    %2910 = vmatpush1.msra.mxu0 %v2757
    %2911 = vmatprep.subr.mxu0 0.0
    %2912 = vmatpush2.msra.mxu0 0.0
    %2913 = vmatprep.subr.mxu0 0.0
    %2914 = vmatpush2.msra.mxu0 0.0
    %2915 = vmatprep.subr.mxu0 0.0
    %2916 = vmatpush2.msra.mxu0 0.0
    %2917 = vmatprep.subr.mxu0 0.0
    %2918 = vmatpush2.msra.mxu0 0.0
    %2919 = vmatprep.subr.mxu0 0.0
    %2920 = vmatpush2.msra.mxu0 0.0
    %2921 = vmatprep.subr.mxu0 0.0
    %2922 = vmatpush2.msra.mxu0 0.0
    %2923 = vmatprep.subr.mxu0 0.0
    %2924 = vmatpush2.msra.mxu0 0.0
    %2925 = vmatprep.subr.mxu0 0.0
    %2926 = vmatpush2.msra.mxu0 0.0
    %2927 = vmatprep.subr.mxu0 0.0
    %2928 = vmatpush2.msra.mxu0 0.0
    %2929 = vmatprep.subr.mxu0 0.0
    %2930 = vmatpush2.msra.mxu0 0.0
    %2931 = vmatprep.subr.mxu0 0.0
    %2932 = vmatpush2.msra.mxu0 0.0
    %2933 = vmatprep.subr.mxu0 0.0
    %2934 = vmatpush2.msra.mxu0 0.0
    %2935 = vmatprep.subr.mxu0 0.0
    %2936 = vmatpush2.msra.mxu0 0.0
    %2937 = vmatprep.subr.mxu0 0.0
    %2938 = vmatpush2.msra.mxu0 0.0
    %2939 = vmatprep.subr.mxu0 0.0
    %2940 = vmatpush2.msra.mxu0 0.0
    %2941 = vmatprep.subr.mxu0 0.0
    %2942 = vmatpush2.msra.mxu0 0.0
    %2943 = vmatprep.mubr.f32.mxu0 0.0
    %2944 = vmatmul.mubr.f32.gmra.mxu0 %v2788
    %v2945 = vpop.f32.mrf.mxu0
    %v2946 = vadd.f32 %v2783, %v2945
    %v2947 = vpop.f32.mrf.mxu0
    %2948 = vmatprep.mubr.f32.mxu0 0.0
    %2949 = vmatmul.mubr.f32.gmra.mxu0 %v2791
    %v2950 = vpop.f32.mrf.mxu0
    %v2951 = vadd.f32 %v2783, %v2950
    %v2952 = vpop.f32.mrf.mxu0
    %2953 = vdwg.mxu0
    %2954 = vst [vmem:[#allocation10] sm:$0xff] %v2869
    %2955 = vst [vmem:[#allocation10 + $0x8] sm:$0xff] %v2871
    %2956 = vst.msk [vmem:[#allocation10 + $0x10] sm:$0xff] %vm2065, %v2946
    %2957 = vst [vmem:[#allocation10 + $0x18] sm:$0xff] %v2875
    %2958 = vst [vmem:[#allocation10 + $0x20] sm:$0xff] %v2877
    %2959 = vst.msk [vmem:[#allocation10 + $0x28] sm:$0xff] %vm2065, %v2951
    // Predicated region
    $region70: #{tpu_custom_call.1} parent=1 // pred_check
      _
    $region71: #{tpu_custom_call.1} parent=1 // pred_check_branch
      %2961 = sbr.rel (0) target = $region73
    $region72: #{tpu_custom_call.1} parent=1 // pred_region
      %s2963 = ssub.s32 768, 768
      %2964 = vsyncadd [#allocation4], %s2963
      %s2965 = sshll.u32 [#allocation10], 4
      %s2966 = int_to_ptr.vmem [resolvable:$true] %s2965
      %2971 = dma.vmem_to_hbm [thread:$0]  %s2966, 768, %s13, [#allocation4], 384, 384, 24
    $region73: #{tpu_custom_call.1} parent=1 // pred_fallthru
      _
    // Predicated region
    $region74: #{tpu_custom_call.1} parent=1 // pred_check
      _
    $region75: #{tpu_custom_call.1} parent=1 // pred_check_branch
      %2973 = sbr.rel (0) target = $region77
    $region76: #{tpu_custom_call.1} parent=1 // pred_region
      %2974 = dma.done [#allocation4], 768
    $region77: #{tpu_custom_call.1} parent=1 // pred_fallthru
      _
    %2975 = vsyncpa [#allocation3], 1
    %2976 = vsyncpa [#allocation6], 1
    %2977 = vsyncpa [#allocation9], 1
    %2978 = vsyncpa [#allocation4], 1

</llo_original>
